<compile_context>
chip_gen: v7x
topology: tpu7x:2x2x1
jax: 0.10.0
libtpu: 0.0.40
codegen_flags: <defaults>
</compile_context>

<pallas_src>
import math

import jax
import jax.numpy as jnp
from jax.experimental import pallas as pl
from jax.experimental.pallas import tpu as pltpu

# ---------------- small synthetic BERT config ----------------
VOCAB = 64
HIDDEN = 128
HEADS = 4
HEAD_DIM = HIDDEN // HEADS
LAYERS = 2
INTER = 256
MAX_POS = 32
TYPE_VOCAB = 2
LN_EPS = 1e-12  # BERT default
_INV_SQRT2 = 1.0 / math.sqrt(2.0)

_PARALLEL1 = pltpu.CompilerParams(dimension_semantics=("parallel",))


def _choose_tm(M):
    """Largest sublane-aligned row tile that still leaves >=2 grid steps."""
    for t in (256, 128, 64, 32, 16, 8):
        if M % t == 0 and M // t >= 2:
            return t
    return M


def _gelu(x):
    # exact (erf) GELU, as in BERT's "gelu"
    return 0.5 * x * (1.0 + jax.lax.erf(x * _INV_SQRT2))


def _layernorm(x, g, b):
    mean = jnp.mean(x, axis=-1, keepdims=True)
    c = x - mean
    var = jnp.mean(c * c, axis=-1, keepdims=True)
    return (c * jax.lax.rsqrt(var + LN_EPS)) * g + b


# ---------------- Pallas kernels ----------------
def _qkv_kernel(x_ref, w_ref, b_ref, o_ref):
    # x: (tm, H) f32, w: (H, 3H) bf16, b: (1, 3H) f32 -> o: (tm, 3H) f32
    y = jnp.dot(x_ref[...].astype(jnp.bfloat16), w_ref[...],
                preferred_element_type=jnp.float32)
    o_ref[...] = (y + b_ref[...]).astype(o_ref.dtype)


def qkv_proj(x, w, b):
    M, K = x.shape
    N = w.shape[1]
    tm = _choose_tm(M)
    return pl.pallas_call(
        _qkv_kernel,
        out_shape=jax.ShapeDtypeStruct((M, N), jnp.float32),
        grid=(M // tm,),
        in_specs=[
            pl.BlockSpec((tm, K), lambda i: (i, 0)),
            pl.BlockSpec((K, N), lambda i: (0, 0)),
            pl.BlockSpec((1, N), lambda i: (0, 0)),
        ],
        out_specs=pl.BlockSpec((tm, N), lambda i: (i, 0)),
        compiler_params=_PARALLEL1,
    )(x, w, b.reshape(1, N))


def _attn_block_kernel(qkv_ref, bias_ref, wo_ref, bo_ref, res_ref,
                       g_ref, beta_ref, o_ref):
    # Per batch element:
    #   qkv: (S, 3H) f32   bias: (1, S) f32 additive mask   wo: (H, H) bf16
    #   bo/gamma/beta: (1, H) f32   res: (S, H) f32   ->   o: (S, H) f32
    # Heads live on lane slices of width HEAD_DIM; the output projection is
    # accumulated per head (sum_h ctx_h @ Wo[h*D:(h+1)*D, :] == concat @ Wo),
    # fused with bias + residual + LayerNorm.
    qkv = qkv_ref[...]
    bias = bias_ref[...]
    q = qkv[:, :HIDDEN]
    k = qkv[:, HIDDEN:2 * HIDDEN]
    v = qkv[:, 2 * HIDDEN:]
    y = bo_ref[...] + res_ref[...]          # start from projection bias + residual
    for h in range(HEADS):
        sl = slice(h * HEAD_DIM, (h + 1) * HEAD_DIM)
        qh = q[:, sl].astype(jnp.bfloat16)  # 1/sqrt(D) already folded into Wq
        kh = k[:, sl].astype(jnp.bfloat16)
        vh = v[:, sl].astype(jnp.bfloat16)
        s = jnp.dot(qh, kh.T, preferred_element_type=jnp.float32)   # (S, S) f32
        s = s + bias                                                # HF additive mask
        s = s - jnp.max(s, axis=-1, keepdims=True)
        p = jnp.exp(s)
        p = p * pl.reciprocal(jnp.sum(p, axis=-1, keepdims=True), approx=True)
        ctx_h = jnp.dot(p.astype(jnp.bfloat16), vh,
                        preferred_element_type=jnp.float32)          # (S, D)
        y = y + jnp.dot(ctx_h.astype(jnp.bfloat16), wo_ref[sl, :],
                        preferred_element_type=jnp.float32)          # (S, H)
    o_ref[...] = _layernorm(y, g_ref[...], beta_ref[...]).astype(o_ref.dtype)


def attention_block(qkv, mask_bias, wo, bo, residual, gamma, beta, B, S):
    M, H = residual.shape
    return pl.pallas_call(
        _attn_block_kernel,
        out_shape=jax.ShapeDtypeStruct((M, H), jnp.float32),
        grid=(B,),
        in_specs=[
            pl.BlockSpec((S, 3 * H), lambda b: (b, 0)),
            pl.BlockSpec((None, 1, S), lambda b: (b, 0, 0)),
            pl.BlockSpec((H, H), lambda b: (0, 0)),
            pl.BlockSpec((1, H), lambda b: (0, 0)),
            pl.BlockSpec((S, H), lambda b: (b, 0)),
            pl.BlockSpec((1, H), lambda b: (0, 0)),
            pl.BlockSpec((1, H), lambda b: (0, 0)),
        ],
        out_specs=pl.BlockSpec((S, H), lambda b: (b, 0)),
        compiler_params=_PARALLEL1,
    )(qkv, mask_bias, wo, bo.reshape(1, H), residual,
      gamma.reshape(1, H), beta.reshape(1, H))


def _ffn_kernel(x_ref, w1_ref, b1_ref, w2_ref, b2_ref, g_ref, beta_ref, o_ref):
    # x: (tm, H) f32, w1: (H, I) bf16, w2: (I, H) bf16 -> o: (tm, H) f32
    x = x_ref[...]
    h = jnp.dot(x.astype(jnp.bfloat16), w1_ref[...],
                preferred_element_type=jnp.float32)
    h = _gelu(h + b1_ref[...])
    y = jnp.dot(h.astype(jnp.bfloat16), w2_ref[...],
                preferred_element_type=jnp.float32)
    y = y + b2_ref[...] + x
    o_ref[...] = _layernorm(y, g_ref[...], beta_ref[...]).astype(o_ref.dtype)


def ffn_block(x, w1, b1, w2, b2, gamma, beta):
    M, H = x.shape
    I = w1.shape[1]
    tm = _choose_tm(M)
    return pl.pallas_call(
        _ffn_kernel,
        out_shape=jax.ShapeDtypeStruct((M, H), jnp.float32),
        grid=(M // tm,),
        in_specs=[
            pl.BlockSpec((tm, H), lambda i: (i, 0)),
            pl.BlockSpec((H, I), lambda i: (0, 0)),
            pl.BlockSpec((1, I), lambda i: (0, 0)),
            pl.BlockSpec((I, H), lambda i: (0, 0)),
            pl.BlockSpec((1, H), lambda i: (0, 0)),
            pl.BlockSpec((1, H), lambda i: (0, 0)),
            pl.BlockSpec((1, H), lambda i: (0, 0)),
        ],
        out_specs=pl.BlockSpec((tm, H), lambda i: (i, 0)),
        compiler_params=_PARALLEL1,
    )(x, w1, b1.reshape(1, I), w2, b2.reshape(1, H),
      gamma.reshape(1, H), beta.reshape(1, H))


def _ln_kernel(x_ref, g_ref, b_ref, o_ref):
    o_ref[...] = _layernorm(x_ref[...], g_ref[...], b_ref[...]).astype(o_ref.dtype)


def layernorm(x, gamma, beta):
    M, H = x.shape
    tm = _choose_tm(M)
    return pl.pallas_call(
        _ln_kernel,
        out_shape=jax.ShapeDtypeStruct((M, H), jnp.float32),
        grid=(M // tm,),
        in_specs=[
            pl.BlockSpec((tm, H), lambda i: (i, 0)),
            pl.BlockSpec((1, H), lambda i: (0, 0)),
            pl.BlockSpec((1, H), lambda i: (0, 0)),
        ],
        out_specs=pl.BlockSpec((tm, H), lambda i: (i, 0)),
        compiler_params=_PARALLEL1,
    )(x, gamma.reshape(1, H), beta.reshape(1, H))


# ---------------- parameter init (deterministic, synthetic) ----------------
def init_params(key):
    def normal(key, shape):
        return 0.02 * jax.random.normal(key, shape, dtype=jnp.float32)

    keys = iter(jax.random.split(key, 3 + LAYERS * 6))
    params = {
        "word_emb": normal(next(keys), (VOCAB, HIDDEN)),
        "pos_emb": normal(next(keys), (MAX_POS, HIDDEN)),
        "type_emb": normal(next(keys), (TYPE_VOCAB, HIDDEN)),
        "emb_ln_g": jnp.ones((HIDDEN,), jnp.float32),
        "emb_ln_b": jnp.zeros((HIDDEN,), jnp.float32),
        "layers": [],
    }
    scale = 1.0 / math.sqrt(HEAD_DIM)
    for _ in range(LAYERS):
        # Fold the 1/sqrt(HEAD_DIM) attention scale into the Q projection
        # (bias is zero here; it would be scaled identically).
        q_w = normal(next(keys), (HIDDEN, HIDDEN)) * scale
        k_w = normal(next(keys), (HIDDEN, HIDDEN))
        v_w = normal(next(keys), (HIDDEN, HIDDEN))
        layer = {
            # fused QKV projection weight, bf16 for the MXU
            "qkv_w": jnp.concatenate([q_w, k_w, v_w], axis=1).astype(jnp.bfloat16),
            "qkv_b": jnp.zeros((3 * HIDDEN,), jnp.float32),
            "ao_w": normal(next(keys), (HIDDEN, HIDDEN)).astype(jnp.bfloat16),
            "ao_b": jnp.zeros((HIDDEN,), jnp.float32),
            "a_ln_g": jnp.ones((HIDDEN,), jnp.float32),
            "a_ln_b": jnp.zeros((HIDDEN,), jnp.float32),
            "i_w": normal(next(keys), (HIDDEN, INTER)).astype(jnp.bfloat16),
            "i_b": jnp.zeros((INTER,), jnp.float32),
            "o_w": normal(next(keys), (INTER, HIDDEN)).astype(jnp.bfloat16),
            "o_b": jnp.zeros((HIDDEN,), jnp.float32),
            "o_ln_g": jnp.ones((HIDDEN,), jnp.float32),
            "o_ln_b": jnp.zeros((HIDDEN,), jnp.float32),
        }
        params["layers"].append(layer)
    return params


# ---------------- model forward ----------------
def encoder_layer(x, mask_bias, p, B, S):
    # fused Q/K/V projection -> (B*S, 3*HIDDEN)
    qkv = qkv_proj(x, p["qkv_w"], p["qkv_b"])
    # attention + output projection + residual + LayerNorm, one kernel per batch
    x = attention_block(qkv, mask_bias, p["ao_w"], p["ao_b"], x,
                        p["a_ln_g"], p["a_ln_b"], B, S)
    # fused feed-forward: GELU matmul, matmul, residual + LayerNorm
    x = ffn_block(x, p["i_w"], p["i_b"], p["o_w"], p["o_b"],
                  p["o_ln_g"], p["o_ln_b"])
    return x


def bert_forward(params, tokens, segments, input_masks):
    """Equivalent of Bert.forward: returns last_hidden_state (B, S, HIDDEN)."""
    B, S = tokens.shape
    word = jnp.take(params["word_emb"], tokens, axis=0)            # (B, S, H)
    pos = params["pos_emb"][:S][None, :, :]                        # (1, S, H)
    typ = jnp.take(params["type_emb"], segments, axis=0)           # (B, S, H)
    x = (word + pos + typ).astype(jnp.float32).reshape(B * S, HIDDEN)
    x = layernorm(x, params["emb_ln_g"], params["emb_ln_b"])
    # TODO(synk): HF BERT also applies embedding/attention dropout (inactive in eval mode).

    # HF extended attention mask, precomputed once: (1 - mask) * -10000
    mask_bias = ((1.0 - input_masks.astype(jnp.float32)) * -10000.0).reshape(B, 1, S)
    for layer in params["layers"]:
        x = encoder_layer(x, mask_bias, layer, B, S)
    return x.reshape(B, S, HIDDEN)


if __name__ == "__main__":
    B, S = 2, 8
    key = jax.random.PRNGKey(0)
    k_param, k_tok, k_seg = jax.random.split(key, 3)

    params = init_params(k_param)

    tokens = jax.random.randint(k_tok, (B, S), 0, VOCAB, dtype=jnp.int32)
    segments = jnp.zeros((B, S), dtype=jnp.int32)
    # variable-length captions padded to S, like pre_process would produce
    lengths = jnp.array([6, 4], dtype=jnp.int32)
    input_masks = (jnp.arange(S, dtype=jnp.int32)[None, :] < lengths[:, None]).astype(jnp.int32)

    out = jax.jit(bert_forward)(params, tokens, segments, input_masks)
    out = jax.block_until_ready(out)

    assert out.shape == (B, S, HIDDEN), out.shape
    assert bool(jnp.all(jnp.isfinite(out)))
    print("KERNEL_OK")
</pallas_src>

<mosaic_0001>
module attributes {stable_mosaic.version = 11 : i64} {
  func.func @_ln_kernel(%arg0: i32, %arg1: memref<8x128xf32, #tpu.memory_space<vmem>>, %arg2: memref<1x128xf32, #tpu.memory_space<vmem>>, %arg3: memref<1x128xf32, #tpu.memory_space<vmem>>, %arg4: memref<8x128xf32, #tpu.memory_space<vmem>>) attributes {dimension_semantics = [#tpu.dimension_semantics<parallel>], iteration_bounds = array<i64: 2>, scalar_prefetch = 0 : i64, scratch_operands = 0 : i64, tpu.core_type = #tpu.core_type<tc>, window_params = [{transform_indices = @transform_0, window_bounds = array<i64: 8, 128>}, {pipeline_mode = #tpu.pipeline_mode<synchronous>, transform_indices = @transform_1, window_bounds = array<i64: 1, 128>}, {pipeline_mode = #tpu.pipeline_mode<synchronous>, transform_indices = @transform_2, window_bounds = array<i64: 1, 128>}, {transform_indices = @transform_3, window_bounds = array<i64: 8, 128>}]} {
    %c0 = arith.constant 0 : index
    %c0_0 = arith.constant 0 : index
    %0 = vector.load %arg1[%c0, %c0_0] : memref<8x128xf32, #tpu.memory_space<vmem>>, vector<8x128xf32>
    %c0_1 = arith.constant 0 : index
    %c0_2 = arith.constant 0 : index
    %1 = vector.load %arg2[%c0_1, %c0_2] : memref<1x128xf32, #tpu.memory_space<vmem>>, vector<1x128xf32>
    %c0_3 = arith.constant 0 : index
    %c0_4 = arith.constant 0 : index
    %2 = vector.load %arg3[%c0_3, %c0_4] : memref<1x128xf32, #tpu.memory_space<vmem>>, vector<1x128xf32>
    %cst = arith.constant dense<0.000000e+00> : vector<8xf32>
    %3 = vector.multi_reduction <add>, %0, %cst [1] : vector<8x128xf32> to vector<8xf32>
    %4 = vector.shape_cast %3 : vector<8xf32> to vector<8x1xf32>
    %cst_5 = arith.constant 1.280000e+02 : f32
    %5 = vector.broadcast %cst_5 : f32 to vector<8x1xf32>
    %6 = arith.divf %4, %5 : vector<8x1xf32>
    %7 = vector.broadcast %6 : vector<8x1xf32> to vector<8x128xf32>
    %8 = arith.subf %0, %7 : vector<8x128xf32>
    %9 = arith.mulf %8, %8 : vector<8x128xf32>
    %cst_6 = arith.constant dense<0.000000e+00> : vector<8xf32>
    %10 = vector.multi_reduction <add>, %9, %cst_6 [1] : vector<8x128xf32> to vector<8xf32>
    %11 = vector.shape_cast %10 : vector<8xf32> to vector<8x1xf32>
    %cst_7 = arith.constant 1.280000e+02 : f32
    %12 = vector.broadcast %cst_7 : f32 to vector<8x1xf32>
    %13 = arith.divf %11, %12 : vector<8x1xf32>
    %cst_8 = arith.constant 9.99999996E-13 : f32
    %14 = vector.broadcast %cst_8 : f32 to vector<8x1xf32>
    %15 = arith.addf %13, %14 : vector<8x1xf32>
    %16 = math.rsqrt %15 : vector<8x1xf32>
    %17 = vector.broadcast %16 : vector<8x1xf32> to vector<8x128xf32>
    %18 = arith.mulf %8, %17 : vector<8x128xf32>
    %19 = vector.broadcast %1 : vector<1x128xf32> to vector<8x128xf32>
    %20 = arith.mulf %18, %19 : vector<8x128xf32>
    %21 = vector.broadcast %2 : vector<1x128xf32> to vector<8x128xf32>
    %22 = arith.addf %20, %21 : vector<8x128xf32>
    %c0_9 = arith.constant 0 : index
    %c0_10 = arith.constant 0 : index
    %23 = vector.load %arg4[%c0_9, %c0_10] : memref<8x128xf32, #tpu.memory_space<vmem>>, vector<8x128xf32>
    tpu.vector_store %arg4[%c0_9, %c0_10], %22 {strides = array<i32>} : memref<8x128xf32, #tpu.memory_space<vmem>>, vector<8x128xf32>,
    return
  }
  func.func @transform_0(%arg0: i32) -> (i32, i32) {
    %c0_i32 = arith.constant 0 : i32
    %c0_i32_0 = arith.constant 0 : i32
    return %arg0, %c0_i32 : i32, i32
  }
  func.func @transform_1(%arg0: i32) -> (i32, i32) {
    %c0_i32 = arith.constant 0 : i32
    %c0_i32_0 = arith.constant 0 : i32
    %c0_i32_1 = arith.constant 0 : i32
    return %c0_i32, %c0_i32_0 : i32, i32
  }
  func.func @transform_2(%arg0: i32) -> (i32, i32) {
    %c0_i32 = arith.constant 0 : i32
    %c0_i32_0 = arith.constant 0 : i32
    %c0_i32_1 = arith.constant 0 : i32
    return %c0_i32, %c0_i32_0 : i32, i32
  }
  func.func @transform_3(%arg0: i32) -> (i32, i32) {
    %c0_i32 = arith.constant 0 : i32
    %c0_i32_0 = arith.constant 0 : i32
    return %arg0, %c0_i32 : i32, i32
  }
}

module attributes {stable_mosaic.version = 11 : i64} {
  func.func @_ffn_kernel(%arg0: i32, %arg1: memref<8x128xf32, #tpu.memory_space<vmem>>, %arg2: memref<128x256xbf16, #tpu.memory_space<vmem>>, %arg3: memref<1x256xf32, #tpu.memory_space<vmem>>, %arg4: memref<256x128xbf16, #tpu.memory_space<vmem>>, %arg5: memref<1x128xf32, #tpu.memory_space<vmem>>, %arg6: memref<1x128xf32, #tpu.memory_space<vmem>>, %arg7: memref<1x128xf32, #tpu.memory_space<vmem>>, %arg8: memref<8x128xf32, #tpu.memory_space<vmem>>) attributes {dimension_semantics = [#tpu.dimension_semantics<parallel>], iteration_bounds = array<i64: 2>, scalar_prefetch = 0 : i64, scratch_operands = 0 : i64, tpu.core_type = #tpu.core_type<tc>, window_params = [{transform_indices = @transform_0, window_bounds = array<i64: 8, 128>}, {pipeline_mode = #tpu.pipeline_mode<synchronous>, transform_indices = @transform_1, window_bounds = array<i64: 128, 256>}, {pipeline_mode = #tpu.pipeline_mode<synchronous>, transform_indices = @transform_2, window_bounds = array<i64: 1, 256>}, {pipeline_mode = #tpu.pipeline_mode<synchronous>, transform_indices = @transform_3, window_bounds = array<i64: 256, 128>}, {pipeline_mode = #tpu.pipeline_mode<synchronous>, transform_indices = @transform_4, window_bounds = array<i64: 1, 128>}, {pipeline_mode = #tpu.pipeline_mode<synchronous>, transform_indices = @transform_5, window_bounds = array<i64: 1, 128>}, {pipeline_mode = #tpu.pipeline_mode<synchronous>, transform_indices = @transform_6, window_bounds = array<i64: 1, 128>}, {transform_indices = @transform_7, window_bounds = array<i64: 8, 128>}]} {
    %c0 = arith.constant 0 : index
    %c0_0 = arith.constant 0 : index
    %0 = vector.load %arg1[%c0, %c0_0] : memref<8x128xf32, #tpu.memory_space<vmem>>, vector<8x128xf32>
    %1 = arith.truncf %0 : vector<8x128xf32> to vector<8x128xbf16>
    %c0_1 = arith.constant 0 : index
    %c0_2 = arith.constant 0 : index
    %2 = vector.load %arg2[%c0_1, %c0_2] : memref<128x256xbf16, #tpu.memory_space<vmem>>, vector<128x256xbf16>
    %cst = arith.constant dense<0.000000e+00> : vector<8x256xf32>
    %3 = tpu.matmul %1, %2, %cst {dimension_numbers = #tpu.dot_dimension_numbers<[1], [0], [0], [1], [0, 0, 1, 1], [], []>} : vector<8x128xbf16>, vector<128x256xbf16>, vector<8x256xf32> -> vector<8x256xf32>
    %c0_3 = arith.constant 0 : index
    %c0_4 = arith.constant 0 : index
    %4 = vector.load %arg3[%c0_3, %c0_4] : memref<1x256xf32, #tpu.memory_space<vmem>>, vector<1x256xf32>
    %5 = vector.broadcast %4 : vector<1x256xf32> to vector<8x256xf32>
    %6 = arith.addf %3, %5 : vector<8x256xf32>
    %cst_5 = arith.constant 5.000000e-01 : f32
    %7 = vector.broadcast %cst_5 : f32 to vector<8x256xf32>
    %8 = arith.mulf %7, %6 : vector<8x256xf32>
    %cst_6 = arith.constant 0.707106769 : f32
    %9 = vector.broadcast %cst_6 : f32 to vector<8x256xf32>
    %10 = arith.mulf %6, %9 : vector<8x256xf32>
    %11 = math.erf %10 : vector<8x256xf32>
    %cst_7 = arith.constant 1.000000e+00 : f32
    %12 = vector.broadcast %cst_7 : f32 to vector<8x256xf32>
    %13 = arith.addf %12, %11 : vector<8x256xf32>
    %14 = arith.mulf %8, %13 : vector<8x256xf32>
    %15 = arith.truncf %14 : vector<8x256xf32> to vector<8x256xbf16>
    %c0_8 = arith.constant 0 : index
    %c0_9 = arith.constant 0 : index
    %16 = vector.load %arg4[%c0_8, %c0_9] : memref<256x128xbf16, #tpu.memory_space<vmem>>, vector<256x128xbf16>
    %cst_10 = arith.constant dense<0.000000e+00> : vector<8x128xf32>
    %17 = tpu.matmul %15, %16, %cst_10 {dimension_numbers = #tpu.dot_dimension_numbers<[1], [0], [0], [1], [0, 0, 1, 1], [], []>} : vector<8x256xbf16>, vector<256x128xbf16>, vector<8x128xf32> -> vector<8x128xf32>
    %c0_11 = arith.constant 0 : index
    %c0_12 = arith.constant 0 : index
    %18 = vector.load %arg5[%c0_11, %c0_12] : memref<1x128xf32, #tpu.memory_space<vmem>>, vector<1x128xf32>
    %19 = vector.broadcast %18 : vector<1x128xf32> to vector<8x128xf32>
    %20 = arith.addf %17, %19 : vector<8x128xf32>
    %21 = arith.addf %20, %0 : vector<8x128xf32>
    %c0_13 = arith.constant 0 : index
    %c0_14 = arith.constant 0 : index
    %22 = vector.load %arg6[%c0_13, %c0_14] : memref<1x128xf32, #tpu.memory_space<vmem>>, vector<1x128xf32>
    %c0_15 = arith.constant 0 : index
    %c0_16 = arith.constant 0 : index
    %23 = vector.load %arg7[%c0_15, %c0_16] : memref<1x128xf32, #tpu.memory_space<vmem>>, vector<1x128xf32>
    %cst_17 = arith.constant dense<0.000000e+00> : vector<8xf32>
    %24 = vector.multi_reduction <add>, %21, %cst_17 [1] : vector<8x128xf32> to vector<8xf32>
    %25 = vector.shape_cast %24 : vector<8xf32> to vector<8x1xf32>
    %cst_18 = arith.constant 1.280000e+02 : f32
    %26 = vector.broadcast %cst_18 : f32 to vector<8x1xf32>
    %27 = arith.divf %25, %26 : vector<8x1xf32>
    %28 = vector.broadcast %27 : vector<8x1xf32> to vector<8x128xf32>
    %29 = arith.subf %21, %28 : vector<8x128xf32>
    %30 = arith.mulf %29, %29 : vector<8x128xf32>
    %cst_19 = arith.constant dense<0.000000e+00> : vector<8xf32>
    %31 = vector.multi_reduction <add>, %30, %cst_19 [1] : vector<8x128xf32> to vector<8xf32>
    %32 = vector.shape_cast %31 : vector<8xf32> to vector<8x1xf32>
    %cst_20 = arith.constant 1.280000e+02 : f32
    %33 = vector.broadcast %cst_20 : f32 to vector<8x1xf32>
    %34 = arith.divf %32, %33 : vector<8x1xf32>
    %cst_21 = arith.constant 9.99999996E-13 : f32
    %35 = vector.broadcast %cst_21 : f32 to vector<8x1xf32>
    %36 = arith.addf %34, %35 : vector<8x1xf32>
    %37 = math.rsqrt %36 : vector<8x1xf32>
    %38 = vector.broadcast %37 : vector<8x1xf32> to vector<8x128xf32>
    %39 = arith.mulf %29, %38 : vector<8x128xf32>
    %40 = vector.broadcast %22 : vector<1x128xf32> to vector<8x128xf32>
    %41 = arith.mulf %39, %40 : vector<8x128xf32>
    %42 = vector.broadcast %23 : vector<1x128xf32> to vector<8x128xf32>
    %43 = arith.addf %41, %42 : vector<8x128xf32>
    %c0_22 = arith.constant 0 : index
    %c0_23 = arith.constant 0 : index
    %44 = vector.load %arg8[%c0_22, %c0_23] : memref<8x128xf32, #tpu.memory_space<vmem>>, vector<8x128xf32>
    tpu.vector_store %arg8[%c0_22, %c0_23], %43 {strides = array<i32>} : memref<8x128xf32, #tpu.memory_space<vmem>>, vector<8x128xf32>,
    return
  }
  func.func @transform_0(%arg0: i32) -> (i32, i32) {
    %c0_i32 = arith.constant 0 : i32
    %c0_i32_0 = arith.constant 0 : i32
    return %arg0, %c0_i32 : i32, i32
  }
  func.func @transform_1(%arg0: i32) -> (i32, i32) {
    %c0_i32 = arith.constant 0 : i32
    %c0_i32_0 = arith.constant 0 : i32
    %c0_i32_1 = arith.constant 0 : i32
    return %c0_i32, %c0_i32_0 : i32, i32
  }
  func.func @transform_2(%arg0: i32) -> (i32, i32) {
    %c0_i32 = arith.constant 0 : i32
    %c0_i32_0 = arith.constant 0 : i32
    %c0_i32_1 = arith.constant 0 : i32
    return %c0_i32, %c0_i32_0 : i32, i32
  }
  func.func @transform_3(%arg0: i32) -> (i32, i32) {
    %c0_i32 = arith.constant 0 : i32
    %c0_i32_0 = arith.constant 0 : i32
    %c0_i32_1 = arith.constant 0 : i32
    return %c0_i32, %c0_i32_0 : i32, i32
  }
  func.func @transform_4(%arg0: i32) -> (i32, i32) {
    %c0_i32 = arith.constant 0 : i32
    %c0_i32_0 = arith.constant 0 : i32
    %c0_i32_1 = arith.constant 0 : i32
    return %c0_i32, %c0_i32_0 : i32, i32
  }
  func.func @transform_5(%arg0: i32) -> (i32, i32) {
    %c0_i32 = arith.constant 0 : i32
    %c0_i32_0 = arith.constant 0 : i32
    %c0_i32_1 = arith.constant 0 : i32
    return %c0_i32, %c0_i32_0 : i32, i32
  }
  func.func @transform_6(%arg0: i32) -> (i32, i32) {
    %c0_i32 = arith.constant 0 : i32
    %c0_i32_0 = arith.constant 0 : i32
    %c0_i32_1 = arith.constant 0 : i32
    return %c0_i32, %c0_i32_0 : i32, i32
  }
  func.func @transform_7(%arg0: i32) -> (i32, i32) {
    %c0_i32 = arith.constant 0 : i32
    %c0_i32_0 = arith.constant 0 : i32
    return %arg0, %c0_i32 : i32, i32
  }
}

module attributes {stable_mosaic.version = 11 : i64} {
  func.func @_attn_block_kernel(%arg0: i32, %arg1: memref<8x384xf32, #tpu.memory_space<vmem>>, %arg2: memref<1x1x8xf32, #tpu.memory_space<vmem>>, %arg3: memref<128x128xbf16, #tpu.memory_space<vmem>>, %arg4: memref<1x128xf32, #tpu.memory_space<vmem>>, %arg5: memref<8x128xf32, #tpu.memory_space<vmem>>, %arg6: memref<1x128xf32, #tpu.memory_space<vmem>>, %arg7: memref<1x128xf32, #tpu.memory_space<vmem>>, %arg8: memref<8x128xf32, #tpu.memory_space<vmem>>) attributes {dimension_semantics = [#tpu.dimension_semantics<parallel>], iteration_bounds = array<i64: 2>, scalar_prefetch = 0 : i64, scratch_operands = 0 : i64, tpu.core_type = #tpu.core_type<tc>, window_params = [{transform_indices = @transform_0, window_bounds = array<i64: 8, 384>}, {transform_indices = @transform_1, window_bounds = array<i64: 1, 1, 8>}, {pipeline_mode = #tpu.pipeline_mode<synchronous>, transform_indices = @transform_2, window_bounds = array<i64: 128, 128>}, {pipeline_mode = #tpu.pipeline_mode<synchronous>, transform_indices = @transform_3, window_bounds = array<i64: 1, 128>}, {transform_indices = @transform_4, window_bounds = array<i64: 8, 128>}, {pipeline_mode = #tpu.pipeline_mode<synchronous>, transform_indices = @transform_5, window_bounds = array<i64: 1, 128>}, {pipeline_mode = #tpu.pipeline_mode<synchronous>, transform_indices = @transform_6, window_bounds = array<i64: 1, 128>}, {transform_indices = @transform_7, window_bounds = array<i64: 8, 128>}]} {
    %c0 = arith.constant 0 : index
    %c0_0 = arith.constant 0 : index
    %0 = vector.load %arg1[%c0, %c0_0] : memref<8x384xf32, #tpu.memory_space<vmem>>, vector<8x384xf32>
    %c0_1 = arith.constant 0 : index
    %c0_2 = arith.constant 0 : index
    %c0_3 = arith.constant 0 : index
    %1 = vector.load %arg2[%c0_1, %c0_2, %c0_3] : memref<1x1x8xf32, #tpu.memory_space<vmem>>, vector<1x1x8xf32>
    %2 = vector.shape_cast %1 : vector<1x1x8xf32> to vector<1x8xf32>
    %3 = vector.extract_strided_slice %0 {offsets = [0, 0], sizes = [8, 128], strides = [1, 1]} : vector<8x384xf32> to vector<8x128xf32>
    %4 = vector.extract_strided_slice %0 {offsets = [0, 128], sizes = [8, 128], strides = [1, 1]} : vector<8x384xf32> to vector<8x128xf32>
    %5 = vector.extract_strided_slice %0 {offsets = [0, 256], sizes = [8, 128], strides = [1, 1]} : vector<8x384xf32> to vector<8x128xf32>
    %c0_4 = arith.constant 0 : index
    %c0_5 = arith.constant 0 : index
    %6 = vector.load %arg4[%c0_4, %c0_5] : memref<1x128xf32, #tpu.memory_space<vmem>>, vector<1x128xf32>
    %c0_6 = arith.constant 0 : index
    %c0_7 = arith.constant 0 : index
    %7 = vector.load %arg5[%c0_6, %c0_7] : memref<8x128xf32, #tpu.memory_space<vmem>>, vector<8x128xf32>
    %8 = vector.broadcast %6 : vector<1x128xf32> to vector<8x128xf32>
    %9 = arith.addf %8, %7 : vector<8x128xf32>
    %10 = vector.extract_strided_slice %3 {offsets = [0, 0], sizes = [8, 32], strides = [1, 1]} : vector<8x128xf32> to vector<8x32xf32>
    %11 = arith.truncf %10 : vector<8x32xf32> to vector<8x32xbf16>
    %12 = vector.extract_strided_slice %4 {offsets = [0, 0], sizes = [8, 32], strides = [1, 1]} : vector<8x128xf32> to vector<8x32xf32>
    %13 = arith.truncf %12 : vector<8x32xf32> to vector<8x32xbf16>
    %14 = vector.extract_strided_slice %5 {offsets = [0, 0], sizes = [8, 32], strides = [1, 1]} : vector<8x128xf32> to vector<8x32xf32>
    %15 = arith.truncf %14 : vector<8x32xf32> to vector<8x32xbf16>
    %16 = tpu.transpose %13, [1, 0] : vector<8x32xbf16> -> vector<32x8xbf16>
    %cst = arith.constant dense<0.000000e+00> : vector<8x8xf32>
    %17 = tpu.matmul %11, %16, %cst {dimension_numbers = #tpu.dot_dimension_numbers<[1], [0], [0], [1], [0, 0, 1, 1], [], []>} : vector<8x32xbf16>, vector<32x8xbf16>, vector<8x8xf32> -> vector<8x8xf32>
    %18 = vector.broadcast %2 : vector<1x8xf32> to vector<8x8xf32>
    %19 = arith.addf %17, %18 : vector<8x8xf32>
    %cst_8 = arith.constant dense<0xFF800000> : vector<8xf32>
    %20 = vector.multi_reduction <maximumf>, %19, %cst_8 [1] : vector<8x8xf32> to vector<8xf32>
    %21 = vector.shape_cast %20 : vector<8xf32> to vector<8x1xf32>
    %22 = vector.broadcast %21 : vector<8x1xf32> to vector<8x8xf32>
    %23 = arith.subf %19, %22 : vector<8x8xf32>
    %24 = math.exp %23 : vector<8x8xf32>
    %cst_9 = arith.constant dense<0.000000e+00> : vector<8xf32>
    %25 = vector.multi_reduction <add>, %24, %cst_9 [1] : vector<8x8xf32> to vector<8xf32>
    %26 = vector.shape_cast %25 : vector<8xf32> to vector<8x1xf32>
    %27 = tpu.reciprocal %26 {approx = true} : vector<8x1xf32> -> vector<8x1xf32>
    %28 = vector.broadcast %27 : vector<8x1xf32> to vector<8x8xf32>
    %29 = arith.mulf %24, %28 : vector<8x8xf32>
    %30 = arith.truncf %29 : vector<8x8xf32> to vector<8x8xbf16>
    %cst_10 = arith.constant dense<0.000000e+00> : vector<8x32xf32>
    %31 = tpu.matmul %30, %15, %cst_10 {dimension_numbers = #tpu.dot_dimension_numbers<[1], [0], [0], [1], [0, 0, 1, 1], [], []>} : vector<8x8xbf16>, vector<8x32xbf16>, vector<8x32xf32> -> vector<8x32xf32>
    %32 = arith.truncf %31 : vector<8x32xf32> to vector<8x32xbf16>
    %c0_11 = arith.constant 0 : index
    %c0_12 = arith.constant 0 : index
    %33 = vector.load %arg3[%c0_11, %c0_12] : memref<128x128xbf16, #tpu.memory_space<vmem>>, vector<32x128xbf16>
    %cst_13 = arith.constant dense<0.000000e+00> : vector<8x128xf32>
    %34 = tpu.matmul %32, %33, %cst_13 {dimension_numbers = #tpu.dot_dimension_numbers<[1], [0], [0], [1], [0, 0, 1, 1], [], []>} : vector<8x32xbf16>, vector<32x128xbf16>, vector<8x128xf32> -> vector<8x128xf32>
    %35 = arith.addf %9, %34 : vector<8x128xf32>
    %36 = vector.extract_strided_slice %3 {offsets = [0, 32], sizes = [8, 32], strides = [1, 1]} : vector<8x128xf32> to vector<8x32xf32>
    %37 = arith.truncf %36 : vector<8x32xf32> to vector<8x32xbf16>
    %38 = vector.extract_strided_slice %4 {offsets = [0, 32], sizes = [8, 32], strides = [1, 1]} : vector<8x128xf32> to vector<8x32xf32>
    %39 = arith.truncf %38 : vector<8x32xf32> to vector<8x32xbf16>
    %40 = vector.extract_strided_slice %5 {offsets = [0, 32], sizes = [8, 32], strides = [1, 1]} : vector<8x128xf32> to vector<8x32xf32>
    %41 = arith.truncf %40 : vector<8x32xf32> to vector<8x32xbf16>
    %42 = tpu.transpose %39, [1, 0] : vector<8x32xbf16> -> vector<32x8xbf16>
    %cst_14 = arith.constant dense<0.000000e+00> : vector<8x8xf32>
    %43 = tpu.matmul %37, %42, %cst_14 {dimension_numbers = #tpu.dot_dimension_numbers<[1], [0], [0], [1], [0, 0, 1, 1], [], []>} : vector<8x32xbf16>, vector<32x8xbf16>, vector<8x8xf32> -> vector<8x8xf32>
    %44 = vector.broadcast %2 : vector<1x8xf32> to vector<8x8xf32>
    %45 = arith.addf %43, %44 : vector<8x8xf32>
    %cst_15 = arith.constant dense<0xFF800000> : vector<8xf32>
    %46 = vector.multi_reduction <maximumf>, %45, %cst_15 [1] : vector<8x8xf32> to vector<8xf32>
    %47 = vector.shape_cast %46 : vector<8xf32> to vector<8x1xf32>
    %48 = vector.broadcast %47 : vector<8x1xf32> to vector<8x8xf32>
    %49 = arith.subf %45, %48 : vector<8x8xf32>
    %50 = math.exp %49 : vector<8x8xf32>
    %cst_16 = arith.constant dense<0.000000e+00> : vector<8xf32>
    %51 = vector.multi_reduction <add>, %50, %cst_16 [1] : vector<8x8xf32> to vector<8xf32>
    %52 = vector.shape_cast %51 : vector<8xf32> to vector<8x1xf32>
    %53 = tpu.reciprocal %52 {approx = true} : vector<8x1xf32> -> vector<8x1xf32>
    %54 = vector.broadcast %53 : vector<8x1xf32> to vector<8x8xf32>
    %55 = arith.mulf %50, %54 : vector<8x8xf32>
    %56 = arith.truncf %55 : vector<8x8xf32> to vector<8x8xbf16>
    %cst_17 = arith.constant dense<0.000000e+00> : vector<8x32xf32>
    %57 = tpu.matmul %56, %41, %cst_17 {dimension_numbers = #tpu.dot_dimension_numbers<[1], [0], [0], [1], [0, 0, 1, 1], [], []>} : vector<8x8xbf16>, vector<8x32xbf16>, vector<8x32xf32> -> vector<8x32xf32>
    %58 = arith.truncf %57 : vector<8x32xf32> to vector<8x32xbf16>
    %c32 = arith.constant 32 : index
    %c0_18 = arith.constant 0 : index
    %59 = vector.load %arg3[%c32, %c0_18] : memref<128x128xbf16, #tpu.memory_space<vmem>>, vector<32x128xbf16>
    %cst_19 = arith.constant dense<0.000000e+00> : vector<8x128xf32>
    %60 = tpu.matmul %58, %59, %cst_19 {dimension_numbers = #tpu.dot_dimension_numbers<[1], [0], [0], [1], [0, 0, 1, 1], [], []>} : vector<8x32xbf16>, vector<32x128xbf16>, vector<8x128xf32> -> vector<8x128xf32>
    %61 = arith.addf %35, %60 : vector<8x128xf32>
    %62 = vector.extract_strided_slice %3 {offsets = [0, 64], sizes = [8, 32], strides = [1, 1]} : vector<8x128xf32> to vector<8x32xf32>
    %63 = arith.truncf %62 : vector<8x32xf32> to vector<8x32xbf16>
    %64 = vector.extract_strided_slice %4 {offsets = [0, 64], sizes = [8, 32], strides = [1, 1]} : vector<8x128xf32> to vector<8x32xf32>
    %65 = arith.truncf %64 : vector<8x32xf32> to vector<8x32xbf16>
    %66 = vector.extract_strided_slice %5 {offsets = [0, 64], sizes = [8, 32], strides = [1, 1]} : vector<8x128xf32> to vector<8x32xf32>
    %67 = arith.truncf %66 : vector<8x32xf32> to vector<8x32xbf16>
    %68 = tpu.transpose %65, [1, 0] : vector<8x32xbf16> -> vector<32x8xbf16>
    %cst_20 = arith.constant dense<0.000000e+00> : vector<8x8xf32>
    %69 = tpu.matmul %63, %68, %cst_20 {dimension_numbers = #tpu.dot_dimension_numbers<[1], [0], [0], [1], [0, 0, 1, 1], [], []>} : vector<8x32xbf16>, vector<32x8xbf16>, vector<8x8xf32> -> vector<8x8xf32>
    %70 = vector.broadcast %2 : vector<1x8xf32> to vector<8x8xf32>
    %71 = arith.addf %69, %70 : vector<8x8xf32>
    %cst_21 = arith.constant dense<0xFF800000> : vector<8xf32>
    %72 = vector.multi_reduction <maximumf>, %71, %cst_21 [1] : vector<8x8xf32> to vector<8xf32>
    %73 = vector.shape_cast %72 : vector<8xf32> to vector<8x1xf32>
    %74 = vector.broadcast %73 : vector<8x1xf32> to vector<8x8xf32>
    %75 = arith.subf %71, %74 : vector<8x8xf32>
    %76 = math.exp %75 : vector<8x8xf32>
    %cst_22 = arith.constant dense<0.000000e+00> : vector<8xf32>
    %77 = vector.multi_reduction <add>, %76, %cst_22 [1] : vector<8x8xf32> to vector<8xf32>
    %78 = vector.shape_cast %77 : vector<8xf32> to vector<8x1xf32>
    %79 = tpu.reciprocal %78 {approx = true} : vector<8x1xf32> -> vector<8x1xf32>
    %80 = vector.broadcast %79 : vector<8x1xf32> to vector<8x8xf32>
    %81 = arith.mulf %76, %80 : vector<8x8xf32>
    %82 = arith.truncf %81 : vector<8x8xf32> to vector<8x8xbf16>
    %cst_23 = arith.constant dense<0.000000e+00> : vector<8x32xf32>
    %83 = tpu.matmul %82, %67, %cst_23 {dimension_numbers = #tpu.dot_dimension_numbers<[1], [0], [0], [1], [0, 0, 1, 1], [], []>} : vector<8x8xbf16>, vector<8x32xbf16>, vector<8x32xf32> -> vector<8x32xf32>
    %84 = arith.truncf %83 : vector<8x32xf32> to vector<8x32xbf16>
    %c64 = arith.constant 64 : index
    %c0_24 = arith.constant 0 : index
    %85 = vector.load %arg3[%c64, %c0_24] : memref<128x128xbf16, #tpu.memory_space<vmem>>, vector<32x128xbf16>
    %cst_25 = arith.constant dense<0.000000e+00> : vector<8x128xf32>
    %86 = tpu.matmul %84, %85, %cst_25 {dimension_numbers = #tpu.dot_dimension_numbers<[1], [0], [0], [1], [0, 0, 1, 1], [], []>} : vector<8x32xbf16>, vector<32x128xbf16>, vector<8x128xf32> -> vector<8x128xf32>
    %87 = arith.addf %61, %86 : vector<8x128xf32>
    %88 = vector.extract_strided_slice %3 {offsets = [0, 96], sizes = [8, 32], strides = [1, 1]} : vector<8x128xf32> to vector<8x32xf32>
    %89 = arith.truncf %88 : vector<8x32xf32> to vector<8x32xbf16>
    %90 = vector.extract_strided_slice %4 {offsets = [0, 96], sizes = [8, 32], strides = [1, 1]} : vector<8x128xf32> to vector<8x32xf32>
    %91 = arith.truncf %90 : vector<8x32xf32> to vector<8x32xbf16>
    %92 = vector.extract_strided_slice %5 {offsets = [0, 96], sizes = [8, 32], strides = [1, 1]} : vector<8x128xf32> to vector<8x32xf32>
    %93 = arith.truncf %92 : vector<8x32xf32> to vector<8x32xbf16>
    %94 = tpu.transpose %91, [1, 0] : vector<8x32xbf16> -> vector<32x8xbf16>
    %cst_26 = arith.constant dense<0.000000e+00> : vector<8x8xf32>
    %95 = tpu.matmul %89, %94, %cst_26 {dimension_numbers = #tpu.dot_dimension_numbers<[1], [0], [0], [1], [0, 0, 1, 1], [], []>} : vector<8x32xbf16>, vector<32x8xbf16>, vector<8x8xf32> -> vector<8x8xf32>
    %96 = vector.broadcast %2 : vector<1x8xf32> to vector<8x8xf32>
    %97 = arith.addf %95, %96 : vector<8x8xf32>
    %cst_27 = arith.constant dense<0xFF800000> : vector<8xf32>
    %98 = vector.multi_reduction <maximumf>, %97, %cst_27 [1] : vector<8x8xf32> to vector<8xf32>
    %99 = vector.shape_cast %98 : vector<8xf32> to vector<8x1xf32>
    %100 = vector.broadcast %99 : vector<8x1xf32> to vector<8x8xf32>
    %101 = arith.subf %97, %100 : vector<8x8xf32>
    %102 = math.exp %101 : vector<8x8xf32>
    %cst_28 = arith.constant dense<0.000000e+00> : vector<8xf32>
    %103 = vector.multi_reduction <add>, %102, %cst_28 [1] : vector<8x8xf32> to vector<8xf32>
    %104 = vector.shape_cast %103 : vector<8xf32> to vector<8x1xf32>
    %105 = tpu.reciprocal %104 {approx = true} : vector<8x1xf32> -> vector<8x1xf32>
    %106 = vector.broadcast %105 : vector<8x1xf32> to vector<8x8xf32>
    %107 = arith.mulf %102, %106 : vector<8x8xf32>
    %108 = arith.truncf %107 : vector<8x8xf32> to vector<8x8xbf16>
    %cst_29 = arith.constant dense<0.000000e+00> : vector<8x32xf32>
    %109 = tpu.matmul %108, %93, %cst_29 {dimension_numbers = #tpu.dot_dimension_numbers<[1], [0], [0], [1], [0, 0, 1, 1], [], []>} : vector<8x8xbf16>, vector<8x32xbf16>, vector<8x32xf32> -> vector<8x32xf32>
    %110 = arith.truncf %109 : vector<8x32xf32> to vector<8x32xbf16>
    %c96 = arith.constant 96 : index
    %c0_30 = arith.constant 0 : index
    %111 = vector.load %arg3[%c96, %c0_30] : memref<128x128xbf16, #tpu.memory_space<vmem>>, vector<32x128xbf16>
    %cst_31 = arith.constant dense<0.000000e+00> : vector<8x128xf32>
    %112 = tpu.matmul %110, %111, %cst_31 {dimension_numbers = #tpu.dot_dimension_numbers<[1], [0], [0], [1], [0, 0, 1, 1], [], []>} : vector<8x32xbf16>, vector<32x128xbf16>, vector<8x128xf32> -> vector<8x128xf32>
    %113 = arith.addf %87, %112 : vector<8x128xf32>
    %c0_32 = arith.constant 0 : index
    %c0_33 = arith.constant 0 : index
    %114 = vector.load %arg6[%c0_32, %c0_33] : memref<1x128xf32, #tpu.memory_space<vmem>>, vector<1x128xf32>
    %c0_34 = arith.constant 0 : index
    %c0_35 = arith.constant 0 : index
    %115 = vector.load %arg7[%c0_34, %c0_35] : memref<1x128xf32, #tpu.memory_space<vmem>>, vector<1x128xf32>
    %cst_36 = arith.constant dense<0.000000e+00> : vector<8xf32>
    %116 = vector.multi_reduction <add>, %113, %cst_36 [1] : vector<8x128xf32> to vector<8xf32>
    %117 = vector.shape_cast %116 : vector<8xf32> to vector<8x1xf32>
    %cst_37 = arith.constant 1.280000e+02 : f32
    %118 = vector.broadcast %cst_37 : f32 to vector<8x1xf32>
    %119 = arith.divf %117, %118 : vector<8x1xf32>
    %120 = vector.broadcast %119 : vector<8x1xf32> to vector<8x128xf32>
    %121 = arith.subf %113, %120 : vector<8x128xf32>
    %122 = arith.mulf %121, %121 : vector<8x128xf32>
    %cst_38 = arith.constant dense<0.000000e+00> : vector<8xf32>
    %123 = vector.multi_reduction <add>, %122, %cst_38 [1] : vector<8x128xf32> to vector<8xf32>
    %124 = vector.shape_cast %123 : vector<8xf32> to vector<8x1xf32>
    %cst_39 = arith.constant 1.280000e+02 : f32
    %125 = vector.broadcast %cst_39 : f32 to vector<8x1xf32>
    %126 = arith.divf %124, %125 : vector<8x1xf32>
    %cst_40 = arith.constant 9.99999996E-13 : f32
    %127 = vector.broadcast %cst_40 : f32 to vector<8x1xf32>
    %128 = arith.addf %126, %127 : vector<8x1xf32>
    %129 = math.rsqrt %128 : vector<8x1xf32>
    %130 = vector.broadcast %129 : vector<8x1xf32> to vector<8x128xf32>
    %131 = arith.mulf %121, %130 : vector<8x128xf32>
    %132 = vector.broadcast %114 : vector<1x128xf32> to vector<8x128xf32>
    %133 = arith.mulf %131, %132 : vector<8x128xf32>
    %134 = vector.broadcast %115 : vector<1x128xf32> to vector<8x128xf32>
    %135 = arith.addf %133, %134 : vector<8x128xf32>
    %c0_41 = arith.constant 0 : index
    %c0_42 = arith.constant 0 : index
    %136 = vector.load %arg8[%c0_41, %c0_42] : memref<8x128xf32, #tpu.memory_space<vmem>>, vector<8x128xf32>
    tpu.vector_store %arg8[%c0_41, %c0_42], %135 {strides = array<i32>} : memref<8x128xf32, #tpu.memory_space<vmem>>, vector<8x128xf32>,
    return
  }
  func.func @transform_0(%arg0: i32) -> (i32, i32) {
    %c0_i32 = arith.constant 0 : i32
    %c0_i32_0 = arith.constant 0 : i32
    return %arg0, %c0_i32 : i32, i32
  }
  func.func @transform_1(%arg0: i32) -> (i32, i32, i32) {
    %c0_i32 = arith.constant 0 : i32
    %c0_i32_0 = arith.constant 0 : i32
    %c0_i32_1 = arith.constant 0 : i32
    return %arg0, %c0_i32, %c0_i32_0 : i32, i32, i32
  }
  func.func @transform_2(%arg0: i32) -> (i32, i32) {
    %c0_i32 = arith.constant 0 : i32
    %c0_i32_0 = arith.constant 0 : i32
    %c0_i32_1 = arith.constant 0 : i32
    return %c0_i32, %c0_i32_0 : i32, i32
  }
  func.func @transform_3(%arg0: i32) -> (i32, i32) {
    %c0_i32 = arith.constant 0 : i32
    %c0_i32_0 = arith.constant 0 : i32
    %c0_i32_1 = arith.constant 0 : i32
    return %c0_i32, %c0_i32_0 : i32, i32
  }
  func.func @transform_4(%arg0: i32) -> (i32, i32) {
    %c0_i32 = arith.constant 0 : i32
    %c0_i32_0 = arith.constant 0 : i32
    return %arg0, %c0_i32 : i32, i32
  }
  func.func @transform_5(%arg0: i32) -> (i32, i32) {
    %c0_i32 = arith.constant 0 : i32
    %c0_i32_0 = arith.constant 0 : i32
    %c0_i32_1 = arith.constant 0 : i32
    return %c0_i32, %c0_i32_0 : i32, i32
  }
  func.func @transform_6(%arg0: i32) -> (i32, i32) {
    %c0_i32 = arith.constant 0 : i32
    %c0_i32_0 = arith.constant 0 : i32
    %c0_i32_1 = arith.constant 0 : i32
    return %c0_i32, %c0_i32_0 : i32, i32
  }
  func.func @transform_7(%arg0: i32) -> (i32, i32) {
    %c0_i32 = arith.constant 0 : i32
    %c0_i32_0 = arith.constant 0 : i32
    return %arg0, %c0_i32 : i32, i32
  }
}

module attributes {stable_mosaic.version = 11 : i64} {
  func.func @_qkv_kernel(%arg0: i32, %arg1: memref<8x128xf32, #tpu.memory_space<vmem>>, %arg2: memref<128x384xbf16, #tpu.memory_space<vmem>>, %arg3: memref<1x384xf32, #tpu.memory_space<vmem>>, %arg4: memref<8x384xf32, #tpu.memory_space<vmem>>) attributes {dimension_semantics = [#tpu.dimension_semantics<parallel>], iteration_bounds = array<i64: 2>, scalar_prefetch = 0 : i64, scratch_operands = 0 : i64, tpu.core_type = #tpu.core_type<tc>, window_params = [{transform_indices = @transform_0, window_bounds = array<i64: 8, 128>}, {pipeline_mode = #tpu.pipeline_mode<synchronous>, transform_indices = @transform_1, window_bounds = array<i64: 128, 384>}, {pipeline_mode = #tpu.pipeline_mode<synchronous>, transform_indices = @transform_2, window_bounds = array<i64: 1, 384>}, {transform_indices = @transform_3, window_bounds = array<i64: 8, 384>}]} {
    %c0 = arith.constant 0 : index
    %c0_0 = arith.constant 0 : index
    %0 = vector.load %arg1[%c0, %c0_0] : memref<8x128xf32, #tpu.memory_space<vmem>>, vector<8x128xf32>
    %1 = arith.truncf %0 : vector<8x128xf32> to vector<8x128xbf16>
    %c0_1 = arith.constant 0 : index
    %c0_2 = arith.constant 0 : index
    %2 = vector.load %arg2[%c0_1, %c0_2] : memref<128x384xbf16, #tpu.memory_space<vmem>>, vector<128x384xbf16>
    %cst = arith.constant dense<0.000000e+00> : vector<8x384xf32>
    %3 = tpu.matmul %1, %2, %cst {dimension_numbers = #tpu.dot_dimension_numbers<[1], [0], [0], [1], [0, 0, 1, 1], [], []>} : vector<8x128xbf16>, vector<128x384xbf16>, vector<8x384xf32> -> vector<8x384xf32>
    %c0_3 = arith.constant 0 : index
    %c0_4 = arith.constant 0 : index
    %4 = vector.load %arg3[%c0_3, %c0_4] : memref<1x384xf32, #tpu.memory_space<vmem>>, vector<1x384xf32>
    %5 = vector.broadcast %4 : vector<1x384xf32> to vector<8x384xf32>
    %6 = arith.addf %3, %5 : vector<8x384xf32>
    %c0_5 = arith.constant 0 : index
    %c0_6 = arith.constant 0 : index
    %7 = vector.load %arg4[%c0_5, %c0_6] : memref<8x384xf32, #tpu.memory_space<vmem>>, vector<8x384xf32>
    tpu.vector_store %arg4[%c0_5, %c0_6], %6 {strides = array<i32>} : memref<8x384xf32, #tpu.memory_space<vmem>>, vector<8x384xf32>,
    return
  }
  func.func @transform_0(%arg0: i32) -> (i32, i32) {
    %c0_i32 = arith.constant 0 : i32
    %c0_i32_0 = arith.constant 0 : i32
    return %arg0, %c0_i32 : i32, i32
  }
  func.func @transform_1(%arg0: i32) -> (i32, i32) {
    %c0_i32 = arith.constant 0 : i32
    %c0_i32_0 = arith.constant 0 : i32
    %c0_i32_1 = arith.constant 0 : i32
    return %c0_i32, %c0_i32_0 : i32, i32
  }
  func.func @transform_2(%arg0: i32) -> (i32, i32) {
    %c0_i32 = arith.constant 0 : i32
    %c0_i32_0 = arith.constant 0 : i32
    %c0_i32_1 = arith.constant 0 : i32
    return %c0_i32, %c0_i32_0 : i32, i32
  }
  func.func @transform_3(%arg0: i32) -> (i32, i32) {
    %c0_i32 = arith.constant 0 : i32
    %c0_i32_0 = arith.constant 0 : i32
    return %arg0, %c0_i32 : i32, i32
  }
}

module attributes {stable_mosaic.version = 11 : i64} {
  func.func @_ffn_kernel(%arg0: i32, %arg1: memref<8x128xf32, #tpu.memory_space<vmem>>, %arg2: memref<128x256xbf16, #tpu.memory_space<vmem>>, %arg3: memref<1x256xf32, #tpu.memory_space<vmem>>, %arg4: memref<256x128xbf16, #tpu.memory_space<vmem>>, %arg5: memref<1x128xf32, #tpu.memory_space<vmem>>, %arg6: memref<1x128xf32, #tpu.memory_space<vmem>>, %arg7: memref<1x128xf32, #tpu.memory_space<vmem>>, %arg8: memref<8x128xf32, #tpu.memory_space<vmem>>) attributes {dimension_semantics = [#tpu.dimension_semantics<parallel>], iteration_bounds = array<i64: 2>, scalar_prefetch = 0 : i64, scratch_operands = 0 : i64, tpu.core_type = #tpu.core_type<tc>, window_params = [{transform_indices = @transform_0, window_bounds = array<i64: 8, 128>}, {pipeline_mode = #tpu.pipeline_mode<synchronous>, transform_indices = @transform_1, window_bounds = array<i64: 128, 256>}, {pipeline_mode = #tpu.pipeline_mode<synchronous>, transform_indices = @transform_2, window_bounds = array<i64: 1, 256>}, {pipeline_mode = #tpu.pipeline_mode<synchronous>, transform_indices = @transform_3, window_bounds = array<i64: 256, 128>}, {pipeline_mode = #tpu.pipeline_mode<synchronous>, transform_indices = @transform_4, window_bounds = array<i64: 1, 128>}, {pipeline_mode = #tpu.pipeline_mode<synchronous>, transform_indices = @transform_5, window_bounds = array<i64: 1, 128>}, {pipeline_mode = #tpu.pipeline_mode<synchronous>, transform_indices = @transform_6, window_bounds = array<i64: 1, 128>}, {transform_indices = @transform_7, window_bounds = array<i64: 8, 128>}]} {
    %c0 = arith.constant 0 : index
    %c0_0 = arith.constant 0 : index
    %0 = vector.load %arg1[%c0, %c0_0] : memref<8x128xf32, #tpu.memory_space<vmem>>, vector<8x128xf32>
    %1 = arith.truncf %0 : vector<8x128xf32> to vector<8x128xbf16>
    %c0_1 = arith.constant 0 : index
    %c0_2 = arith.constant 0 : index
    %2 = vector.load %arg2[%c0_1, %c0_2] : memref<128x256xbf16, #tpu.memory_space<vmem>>, vector<128x256xbf16>
    %cst = arith.constant dense<0.000000e+00> : vector<8x256xf32>
    %3 = tpu.matmul %1, %2, %cst {dimension_numbers = #tpu.dot_dimension_numbers<[1], [0], [0], [1], [0, 0, 1, 1], [], []>} : vector<8x128xbf16>, vector<128x256xbf16>, vector<8x256xf32> -> vector<8x256xf32>
    %c0_3 = arith.constant 0 : index
    %c0_4 = arith.constant 0 : index
    %4 = vector.load %arg3[%c0_3, %c0_4] : memref<1x256xf32, #tpu.memory_space<vmem>>, vector<1x256xf32>
    %5 = vector.broadcast %4 : vector<1x256xf32> to vector<8x256xf32>
    %6 = arith.addf %3, %5 : vector<8x256xf32>
    %cst_5 = arith.constant 5.000000e-01 : f32
    %7 = vector.broadcast %cst_5 : f32 to vector<8x256xf32>
    %8 = arith.mulf %7, %6 : vector<8x256xf32>
    %cst_6 = arith.constant 0.707106769 : f32
    %9 = vector.broadcast %cst_6 : f32 to vector<8x256xf32>
    %10 = arith.mulf %6, %9 : vector<8x256xf32>
    %11 = math.erf %10 : vector<8x256xf32>
    %cst_7 = arith.constant 1.000000e+00 : f32
    %12 = vector.broadcast %cst_7 : f32 to vector<8x256xf32>
    %13 = arith.addf %12, %11 : vector<8x256xf32>
    %14 = arith.mulf %8, %13 : vector<8x256xf32>
    %15 = arith.truncf %14 : vector<8x256xf32> to vector<8x256xbf16>
    %c0_8 = arith.constant 0 : index
    %c0_9 = arith.constant 0 : index
    %16 = vector.load %arg4[%c0_8, %c0_9] : memref<256x128xbf16, #tpu.memory_space<vmem>>, vector<256x128xbf16>
    %cst_10 = arith.constant dense<0.000000e+00> : vector<8x128xf32>
    %17 = tpu.matmul %15, %16, %cst_10 {dimension_numbers = #tpu.dot_dimension_numbers<[1], [0], [0], [1], [0, 0, 1, 1], [], []>} : vector<8x256xbf16>, vector<256x128xbf16>, vector<8x128xf32> -> vector<8x128xf32>
    %c0_11 = arith.constant 0 : index
    %c0_12 = arith.constant 0 : index
    %18 = vector.load %arg5[%c0_11, %c0_12] : memref<1x128xf32, #tpu.memory_space<vmem>>, vector<1x128xf32>
    %19 = vector.broadcast %18 : vector<1x128xf32> to vector<8x128xf32>
    %20 = arith.addf %17, %19 : vector<8x128xf32>
    %21 = arith.addf %20, %0 : vector<8x128xf32>
    %c0_13 = arith.constant 0 : index
    %c0_14 = arith.constant 0 : index
    %22 = vector.load %arg6[%c0_13, %c0_14] : memref<1x128xf32, #tpu.memory_space<vmem>>, vector<1x128xf32>
    %c0_15 = arith.constant 0 : index
    %c0_16 = arith.constant 0 : index
    %23 = vector.load %arg7[%c0_15, %c0_16] : memref<1x128xf32, #tpu.memory_space<vmem>>, vector<1x128xf32>
    %cst_17 = arith.constant dense<0.000000e+00> : vector<8xf32>
    %24 = vector.multi_reduction <add>, %21, %cst_17 [1] : vector<8x128xf32> to vector<8xf32>
    %25 = vector.shape_cast %24 : vector<8xf32> to vector<8x1xf32>
    %cst_18 = arith.constant 1.280000e+02 : f32
    %26 = vector.broadcast %cst_18 : f32 to vector<8x1xf32>
    %27 = arith.divf %25, %26 : vector<8x1xf32>
    %28 = vector.broadcast %27 : vector<8x1xf32> to vector<8x128xf32>
    %29 = arith.subf %21, %28 : vector<8x128xf32>
    %30 = arith.mulf %29, %29 : vector<8x128xf32>
    %cst_19 = arith.constant dense<0.000000e+00> : vector<8xf32>
    %31 = vector.multi_reduction <add>, %30, %cst_19 [1] : vector<8x128xf32> to vector<8xf32>
    %32 = vector.shape_cast %31 : vector<8xf32> to vector<8x1xf32>
    %cst_20 = arith.constant 1.280000e+02 : f32
    %33 = vector.broadcast %cst_20 : f32 to vector<8x1xf32>
    %34 = arith.divf %32, %33 : vector<8x1xf32>
    %cst_21 = arith.constant 9.99999996E-13 : f32
    %35 = vector.broadcast %cst_21 : f32 to vector<8x1xf32>
    %36 = arith.addf %34, %35 : vector<8x1xf32>
    %37 = math.rsqrt %36 : vector<8x1xf32>
    %38 = vector.broadcast %37 : vector<8x1xf32> to vector<8x128xf32>
    %39 = arith.mulf %29, %38 : vector<8x128xf32>
    %40 = vector.broadcast %22 : vector<1x128xf32> to vector<8x128xf32>
    %41 = arith.mulf %39, %40 : vector<8x128xf32>
    %42 = vector.broadcast %23 : vector<1x128xf32> to vector<8x128xf32>
    %43 = arith.addf %41, %42 : vector<8x128xf32>
    %c0_22 = arith.constant 0 : index
    %c0_23 = arith.constant 0 : index
    %44 = vector.load %arg8[%c0_22, %c0_23] : memref<8x128xf32, #tpu.memory_space<vmem>>, vector<8x128xf32>
    tpu.vector_store %arg8[%c0_22, %c0_23], %43 {strides = array<i32>} : memref<8x128xf32, #tpu.memory_space<vmem>>, vector<8x128xf32>,
    return
  }
  func.func @transform_0(%arg0: i32) -> (i32, i32) {
    %c0_i32 = arith.constant 0 : i32
    %c0_i32_0 = arith.constant 0 : i32
    return %arg0, %c0_i32 : i32, i32
  }
  func.func @transform_1(%arg0: i32) -> (i32, i32) {
    %c0_i32 = arith.constant 0 : i32
    %c0_i32_0 = arith.constant 0 : i32
    %c0_i32_1 = arith.constant 0 : i32
    return %c0_i32, %c0_i32_0 : i32, i32
  }
  func.func @transform_2(%arg0: i32) -> (i32, i32) {
    %c0_i32 = arith.constant 0 : i32
    %c0_i32_0 = arith.constant 0 : i32
    %c0_i32_1 = arith.constant 0 : i32
    return %c0_i32, %c0_i32_0 : i32, i32
  }
  func.func @transform_3(%arg0: i32) -> (i32, i32) {
    %c0_i32 = arith.constant 0 : i32
    %c0_i32_0 = arith.constant 0 : i32
    %c0_i32_1 = arith.constant 0 : i32
    return %c0_i32, %c0_i32_0 : i32, i32
  }
  func.func @transform_4(%arg0: i32) -> (i32, i32) {
    %c0_i32 = arith.constant 0 : i32
    %c0_i32_0 = arith.constant 0 : i32
    %c0_i32_1 = arith.constant 0 : i32
    return %c0_i32, %c0_i32_0 : i32, i32
  }
  func.func @transform_5(%arg0: i32) -> (i32, i32) {
    %c0_i32 = arith.constant 0 : i32
    %c0_i32_0 = arith.constant 0 : i32
    %c0_i32_1 = arith.constant 0 : i32
    return %c0_i32, %c0_i32_0 : i32, i32
  }
  func.func @transform_6(%arg0: i32) -> (i32, i32) {
    %c0_i32 = arith.constant 0 : i32
    %c0_i32_0 = arith.constant 0 : i32
    %c0_i32_1 = arith.constant 0 : i32
    return %c0_i32, %c0_i32_0 : i32, i32
  }
  func.func @transform_7(%arg0: i32) -> (i32, i32) {
    %c0_i32 = arith.constant 0 : i32
    %c0_i32_0 = arith.constant 0 : i32
    return %arg0, %c0_i32 : i32, i32
  }
}

</mosaic_0001>

<llo_original>
// kernel: bert_forward.7
$region0: #{bert_forward.7}
  #allocation0 [shape = 'u32[]', space=smem, size = 0x4, offset = 0x4, fixed_abs, tag = 'smem constant byte address 0x4 - core index']
  #allocation1 [shape = 'u32[144,128]{1,0:T(1,128)}', space=vmem, size = 0x12000, scoped, tag = 'internal scratch']
  %s0 = inlined_call_operand.vmem [shape: f32[16,128], index: 0, kind: input, shape index: {}]
  %s1 = inlined_call_operand.vmem [shape: f32[1,128], index: 1, kind: input, shape index: {}]
  %s2 = inlined_call_operand.vmem [shape: f32[1,128], index: 2, kind: input, shape index: {}]
  %s3 = inlined_call_operand.vmem [shape: f32[16,128], index: 3, kind: output, shape index: {}]
  %s4 = sld [smem:[#allocation0]]
  $region45: #{bert_forward.7} parent=0
    _
  %s6 = ssub.s32 1, %s4
  %s7 = scalar_select 0, %s6, %s4
  loop: start=0, step=1, limit=4
  $region2: #{bert_forward.7} parent=0 // loop_pre_header
    _
  $region3: #{bert_forward.7} parent=0 // loop_header
    %s9 = sphi 0, %s13
    %p10 = scmp.ge.s32.totalorder %s9, 4
    %s19 = sphi 0, %s21
    %s22 = sphi 0, %s19
    %s23 = sphi 0, %s22
    %s39 = sphi 0, %s23
    %s43 = sphi 0, %s43
    %s45 = sphi 0, %s43
    %s46 = sphi 0, %s45
    %s60 = sphi 0, %s46
    %s64 = sphi 0, %s64
    %s66 = sphi 0, %s64
    %s67 = sphi 0, %s66
    %s81 = sphi 0, %s67
    %s87 = sphi 0, %s89
    %s90 = sphi 0, %s87
    %s91 = sphi 0, %s90
    %s107 = sphi 0, %s91
  $region4: #{bert_forward.7} parent=0 // loop_header_branch
    %12 = sbr.rel (%p10) target = $region8
  $region5: #{bert_forward.7} parent=0 // loop_body
    %s14 = ssub.s32 %s9, 1
    %s15 = ssub.s32 %s9, 2
    %s16 = sadd.s32 %s9, 1
    %s17 = ssub.s32 %s9, %s16
    %p18 = scmp.eq.s32.totalorder %s17, 0
    %s20 = sadd.s32 %s19, 1
    %s21 = scalar_select %p18, %s19, %s20
    %p24 = pneg %p18
    %p25 = scmp.eq.s32.totalorder %s9, 1
    %p26 = por %p24, %p25
    %p27 = scmp.ne.s32.totalorder %s19, %s22
    %p28 = scmp.eq.s32.totalorder %s9, 0
    %p29 = por %p27, %p28
    %p30 = scmp.ne.s32.totalorder %s19, %s22
    %p31 = scmp.eq.s32.totalorder %s14, 1
    %p32 = por %p30, %p31
    %p33 = scmp.ne.s32.totalorder %s22, %s23
    %p34 = scmp.eq.s32.totalorder %s14, 0
    %p35 = por %p33, %p34
    %p36 = scmp.ne.s32.totalorder %s22, %s23
    %p37 = scmp.eq.s32.totalorder %s15, 1
    %p38 = por %p36, %p37
    %p40 = scmp.ne.s32.totalorder %s23, %s39
    %p41 = scmp.eq.s32.totalorder %s15, 0
    %p42 = por %p40, %p41
    %s44 = sadd.s32 %s43, 1
    %p47 = scmp.eq.s32.totalorder %s9, 1
    %p48 = scmp.ne.s32.totalorder %s43, %s45
    %p49 = scmp.eq.s32.totalorder %s9, 0
    %p50 = por %p48, %p49
    %p51 = scmp.ne.s32.totalorder %s43, %s45
    %p52 = scmp.eq.s32.totalorder %s14, 1
    %p53 = por %p51, %p52
    %p54 = scmp.ne.s32.totalorder %s45, %s46
    %p55 = scmp.eq.s32.totalorder %s14, 0
    %p56 = por %p54, %p55
    %p57 = scmp.ne.s32.totalorder %s45, %s46
    %p58 = scmp.eq.s32.totalorder %s15, 1
    %p59 = por %p57, %p58
    %p61 = scmp.ne.s32.totalorder %s46, %s60
    %p62 = scmp.eq.s32.totalorder %s15, 0
    %p63 = por %p61, %p62
    %s65 = sadd.s32 %s64, 1
    %p68 = scmp.eq.s32.totalorder %s9, 1
    %p69 = scmp.ne.s32.totalorder %s64, %s66
    %p70 = scmp.eq.s32.totalorder %s9, 0
    %p71 = por %p69, %p70
    %p72 = scmp.ne.s32.totalorder %s64, %s66
    %p73 = scmp.eq.s32.totalorder %s14, 1
    %p74 = por %p72, %p73
    %p75 = scmp.ne.s32.totalorder %s66, %s67
    %p76 = scmp.eq.s32.totalorder %s14, 0
    %p77 = por %p75, %p76
    %p78 = scmp.ne.s32.totalorder %s66, %s67
    %p79 = scmp.eq.s32.totalorder %s15, 1
    %p80 = por %p78, %p79
    %p82 = scmp.ne.s32.totalorder %s67, %s81
    %p83 = scmp.eq.s32.totalorder %s15, 0
    %p84 = por %p82, %p83
    %s85 = ssub.s32 %s9, %s16
    %p86 = scmp.eq.s32.totalorder %s85, 0
    %s88 = sadd.s32 %s87, 1
    %s89 = scalar_select %p86, %s87, %s88
    %p92 = pneg %p86
    %p93 = scmp.eq.s32.totalorder %s9, 1
    %p94 = por %p92, %p93
    %p95 = scmp.ne.s32.totalorder %s87, %s90
    %p96 = scmp.eq.s32.totalorder %s9, 0
    %p97 = por %p95, %p96
    %p98 = scmp.ne.s32.totalorder %s87, %s90
    %p99 = scmp.eq.s32.totalorder %s14, 1
    %p100 = por %p98, %p99
    %p101 = scmp.ne.s32.totalorder %s90, %s91
    %p102 = scmp.eq.s32.totalorder %s14, 0
    %p103 = por %p101, %p102
    %p104 = scmp.ne.s32.totalorder %s90, %s91
    %p105 = scmp.eq.s32.totalorder %s15, 1
    %p106 = por %p104, %p105
    %p108 = scmp.ne.s32.totalorder %s91, %s107
    %p109 = scmp.eq.s32.totalorder %s15, 0
    %p110 = por %p108, %p109
    %p111 = scmp.le.s32.totalorder 1, %s9
    %p112 = scmp.lt.s32.totalorder %s9, 3
    %p113 = pnand %p111, %p112
    %p114 = pneg %p113
    // Predicated region
    $region9: #{bert_forward.7} parent=5 // pred_check
      _
    $region10: #{bert_forward.7} parent=5 // pred_check_branch
      %116 = sbr.rel (%p113) target = $region12
    $region11: #{bert_forward.7} parent=5 // pred_region
      %s117 = ssub.s32 %s9, 1
      // Predicated region
      $region13: #{bert_forward.7} parent=11 // pred_check
        %p118 = pneg %p56
      $region14: #{bert_forward.7} parent=11 // pred_check_branch
        %120 = sbr.rel (%p118) target = $region16
      $region15: #{bert_forward.7} parent=11 // pred_region
        _
      $region16: #{bert_forward.7} parent=11 // pred_fallthru
        _
      // Predicated region
      $region17: #{bert_forward.7} parent=11 // pred_check
        %p121 = pneg %p77
      $region18: #{bert_forward.7} parent=11 // pred_check_branch
        %123 = sbr.rel (%p121) target = $region20
      $region19: #{bert_forward.7} parent=11 // pred_region
        _
      $region20: #{bert_forward.7} parent=11 // pred_fallthru
        _
    $region12: #{bert_forward.7} parent=5 // pred_fallthru
      _
    %p124 = scmp.lt.s32.totalorder %s9, 2
    // Predicated region
    $region21: #{bert_forward.7} parent=5 // pred_check
      %p125 = pneg %p124
    $region22: #{bert_forward.7} parent=5 // pred_check_branch
      %127 = sbr.rel (%p125) target = $region24
    $region23: #{bert_forward.7} parent=5 // pred_region
      // Predicated region
      $region25: #{bert_forward.7} parent=23 // pred_check
        %p128 = pneg %p29
      $region26: #{bert_forward.7} parent=23 // pred_check_branch
        %130 = sbr.rel (%p128) target = $region28
      $region27: #{bert_forward.7} parent=23 // pred_region
        %p131 = scmp.lt.s32.totalorder %s9, 1
        %s132 = scalar_select %p131, %s9, 1
        %s133 = smul.addr %s132, 8
        %s134 = scalar_lea.vmem %s0, %s133
      $region28: #{bert_forward.7} parent=23 // pred_fallthru
        _
    $region24: #{bert_forward.7} parent=5 // pred_fallthru
      _
    %p135 = scmp.le.s32.totalorder 1, %s9
    %p136 = scmp.lt.s32.totalorder %s9, 3
    %p137 = pnand %p135, %p136
    %p138 = pneg %p137
    // Predicated region
    $region29: #{bert_forward.7} parent=5 // pred_check
      _
    $region30: #{bert_forward.7} parent=5 // pred_check_branch
      %140 = sbr.rel (%p137) target = $region32
    $region31: #{bert_forward.7} parent=5 // pred_region
      %s141 = ssub.s32 %s9, 1
      %p142 = scmp.lt.s32.totalorder %s14, 1
      %s143 = scalar_select %p142, %s14, 1
      %s144 = smul.addr %s143, 8
      %s145 = scalar_lea.vmem %s0, %s144
      %p146 = pneg %p35
      %p147 = pneg %p32
      %p148 = pneg %p56
      %p149 = pneg %p53
      %p150 = pneg %p77
      %p151 = pneg %p74
      %p152 = pneg %p103
      %p153 = pneg %p100
      %p154 = scmp.lt.s32.totalorder %s14, 1
      %s155 = scalar_select %p154, %s14, 1
      %s156 = smul.addr %s155, 8
      %s157 = scalar_lea.vmem %s3, %s156
      %p158 = scmp.lt.s32.totalorder %s14, 1
      %s159 = scalar_select %p158, %s14, 1
      %s160 = smul.addr %s159, 8
      %s161 = scalar_lea.vmem %s0, %s160
      %p162 = scmp.lt.s32.totalorder %s14, 1
      %s163 = scalar_select %p162, %s14, 1
      %s164 = smul.addr %s163, 8
      %s165 = scalar_lea.vmem %s3, %s164
      %v166 = vld [vmem:[%s161] sm:$0xff]
      %v167 = vld [vmem:[%s1] sm:$0x1]
      %v168 = vld [vmem:[%s2] sm:$0x1]
      %169 = vadd.xlane.f32.xlu0 %v166
      %v170 = vpop.xlane.xlu0 %169
      %v171 = vrcp.pop 128.0
      %v172 = vmul.f32 %v170, %v171
      %v173 = vsub.f32 %v166, %v172
      %v174 = vmul.f32 %v173, %v173
      %175 = vadd.xlane.f32.xlu0 %v174
      %v176 = vpop.xlane.xlu0 %175
      %v177 = vmul.f32 %v176, %v171
      %v178 = vadd.f32 %v177, 1e-12
      %v179 = vrsqrt.pop %v178
      %v180 = vmul.f32 %v173, %v179
      %v182 = vlaneseq
      %v183 = vshrl.u32 %v182, 7
      %v184 = vsub.s32 0, %v183
      %v185 = vrot.slane %v167, %v184
      %v187 = vmul.f32 %v180, %v185
      %v189 = vlaneseq
      %v190 = vshrl.u32 %v189, 7
      %v191 = vsub.s32 0, %v190
      %v192 = vrot.slane %v168, %v191
      %v194 = vadd.f32 %v187, %v192
      %195 = vst [vmem:[%s165] sm:$0xff] %v194
      %p196 = scmp.lt.s32.totalorder %s14, 1
      %s197 = scalar_select %p196, %s14, 1
      %s198 = smul.addr %s197, 8
      %s199 = scalar_lea.vmem %s3, %s198
      // Predicated region
      $region33: #{bert_forward.7} parent=31 // pred_check
        %p200 = pneg %p100
      $region34: #{bert_forward.7} parent=31 // pred_check_branch
        %202 = sbr.rel (%p200) target = $region36
      $region35: #{bert_forward.7} parent=31 // pred_region
        _
      $region36: #{bert_forward.7} parent=31 // pred_fallthru
        _
    $region32: #{bert_forward.7} parent=5 // pred_fallthru
      _
    %p203 = scmp.le.s32.totalorder 2, %s9
    // Predicated region
    $region37: #{bert_forward.7} parent=5 // pred_check
      %p204 = pneg %p203
    $region38: #{bert_forward.7} parent=5 // pred_check_branch
      %206 = sbr.rel (%p204) target = $region40
    $region39: #{bert_forward.7} parent=5 // pred_region
      %s207 = ssub.s32 %s9, 2
      // Predicated region
      $region41: #{bert_forward.7} parent=39 // pred_check
        %p208 = pneg %p106
      $region42: #{bert_forward.7} parent=39 // pred_check_branch
        %210 = sbr.rel (%p208) target = $region44
      $region43: #{bert_forward.7} parent=39 // pred_region
        %p211 = scmp.lt.s32.totalorder %s15, 1
        %s212 = scalar_select %p211, %s15, 1
        %s213 = smul.addr %s212, 8
        %s214 = scalar_lea.vmem %s3, %s213
      $region44: #{bert_forward.7} parent=39 // pred_fallthru
        _
    $region40: #{bert_forward.7} parent=5 // pred_fallthru
      _
  $region6: #{bert_forward.7} parent=0 // loop_footer
    %s13 = sadd.s32 1, %s9
  $region7: #{bert_forward.7} parent=0 // loop_footer_branch
    %8 = sbr.rel target = $region3
  $region8: #{bert_forward.7} parent=0 // loop_exit
    _

// kernel: bert_forward.8
$region0: #{bert_forward.8}
  #allocation0 [shape = 'u32[]', space=smem, size = 0x4, offset = 0x4, fixed_abs, tag = 'smem constant byte address 0x4 - core index']
  #allocation1 [shape = 'u32[144,128]{1,0:T(1,128)}', space=vmem, size = 0x12000, scoped, tag = 'internal scratch']
  %s0 = inlined_call_operand.vmem [shape: f32[16,128], index: 0, kind: input, shape index: {}]
  %s1 = inlined_call_operand.vmem [shape: bf16[128,384], index: 1, kind: input, shape index: {}]
  %s2 = inlined_call_operand.vmem [shape: f32[1,384], index: 2, kind: input, shape index: {}]
  %s3 = inlined_call_operand.vmem [shape: f32[16,384], index: 3, kind: output, shape index: {}]
  %s4 = sld [smem:[#allocation0]]
  $region45: #{bert_forward.8} parent=0
    _
  %s6 = ssub.s32 1, %s4
  %s7 = scalar_select 0, %s6, %s4
  loop: start=0, step=1, limit=4
  $region2: #{bert_forward.8} parent=0 // loop_pre_header
    _
  $region3: #{bert_forward.8} parent=0 // loop_header
    %s9 = sphi 0, %s13
    %p10 = scmp.ge.s32.totalorder %s9, 4
    %s19 = sphi 0, %s21
    %s22 = sphi 0, %s19
    %s23 = sphi 0, %s22
    %s39 = sphi 0, %s23
    %s43 = sphi 0, %s43
    %s45 = sphi 0, %s43
    %s46 = sphi 0, %s45
    %s60 = sphi 0, %s46
    %s64 = sphi 0, %s64
    %s66 = sphi 0, %s64
    %s67 = sphi 0, %s66
    %s81 = sphi 0, %s67
    %s87 = sphi 0, %s89
    %s90 = sphi 0, %s87
    %s91 = sphi 0, %s90
    %s107 = sphi 0, %s91
  $region4: #{bert_forward.8} parent=0 // loop_header_branch
    %12 = sbr.rel (%p10) target = $region8
  $region5: #{bert_forward.8} parent=0 // loop_body
    %s14 = ssub.s32 %s9, 1
    %s15 = ssub.s32 %s9, 2
    %s16 = sadd.s32 %s9, 1
    %s17 = ssub.s32 %s9, %s16
    %p18 = scmp.eq.s32.totalorder %s17, 0
    %s20 = sadd.s32 %s19, 1
    %s21 = scalar_select %p18, %s19, %s20
    %p24 = pneg %p18
    %p25 = scmp.eq.s32.totalorder %s9, 1
    %p26 = por %p24, %p25
    %p27 = scmp.ne.s32.totalorder %s19, %s22
    %p28 = scmp.eq.s32.totalorder %s9, 0
    %p29 = por %p27, %p28
    %p30 = scmp.ne.s32.totalorder %s19, %s22
    %p31 = scmp.eq.s32.totalorder %s14, 1
    %p32 = por %p30, %p31
    %p33 = scmp.ne.s32.totalorder %s22, %s23
    %p34 = scmp.eq.s32.totalorder %s14, 0
    %p35 = por %p33, %p34
    %p36 = scmp.ne.s32.totalorder %s22, %s23
    %p37 = scmp.eq.s32.totalorder %s15, 1
    %p38 = por %p36, %p37
    %p40 = scmp.ne.s32.totalorder %s23, %s39
    %p41 = scmp.eq.s32.totalorder %s15, 0
    %p42 = por %p40, %p41
    %s44 = sadd.s32 %s43, 1
    %p47 = scmp.eq.s32.totalorder %s9, 1
    %p48 = scmp.ne.s32.totalorder %s43, %s45
    %p49 = scmp.eq.s32.totalorder %s9, 0
    %p50 = por %p48, %p49
    %p51 = scmp.ne.s32.totalorder %s43, %s45
    %p52 = scmp.eq.s32.totalorder %s14, 1
    %p53 = por %p51, %p52
    %p54 = scmp.ne.s32.totalorder %s45, %s46
    %p55 = scmp.eq.s32.totalorder %s14, 0
    %p56 = por %p54, %p55
    %p57 = scmp.ne.s32.totalorder %s45, %s46
    %p58 = scmp.eq.s32.totalorder %s15, 1
    %p59 = por %p57, %p58
    %p61 = scmp.ne.s32.totalorder %s46, %s60
    %p62 = scmp.eq.s32.totalorder %s15, 0
    %p63 = por %p61, %p62
    %s65 = sadd.s32 %s64, 1
    %p68 = scmp.eq.s32.totalorder %s9, 1
    %p69 = scmp.ne.s32.totalorder %s64, %s66
    %p70 = scmp.eq.s32.totalorder %s9, 0
    %p71 = por %p69, %p70
    %p72 = scmp.ne.s32.totalorder %s64, %s66
    %p73 = scmp.eq.s32.totalorder %s14, 1
    %p74 = por %p72, %p73
    %p75 = scmp.ne.s32.totalorder %s66, %s67
    %p76 = scmp.eq.s32.totalorder %s14, 0
    %p77 = por %p75, %p76
    %p78 = scmp.ne.s32.totalorder %s66, %s67
    %p79 = scmp.eq.s32.totalorder %s15, 1
    %p80 = por %p78, %p79
    %p82 = scmp.ne.s32.totalorder %s67, %s81
    %p83 = scmp.eq.s32.totalorder %s15, 0
    %p84 = por %p82, %p83
    %s85 = ssub.s32 %s9, %s16
    %p86 = scmp.eq.s32.totalorder %s85, 0
    %s88 = sadd.s32 %s87, 1
    %s89 = scalar_select %p86, %s87, %s88
    %p92 = pneg %p86
    %p93 = scmp.eq.s32.totalorder %s9, 1
    %p94 = por %p92, %p93
    %p95 = scmp.ne.s32.totalorder %s87, %s90
    %p96 = scmp.eq.s32.totalorder %s9, 0
    %p97 = por %p95, %p96
    %p98 = scmp.ne.s32.totalorder %s87, %s90
    %p99 = scmp.eq.s32.totalorder %s14, 1
    %p100 = por %p98, %p99
    %p101 = scmp.ne.s32.totalorder %s90, %s91
    %p102 = scmp.eq.s32.totalorder %s14, 0
    %p103 = por %p101, %p102
    %p104 = scmp.ne.s32.totalorder %s90, %s91
    %p105 = scmp.eq.s32.totalorder %s15, 1
    %p106 = por %p104, %p105
    %p108 = scmp.ne.s32.totalorder %s91, %s107
    %p109 = scmp.eq.s32.totalorder %s15, 0
    %p110 = por %p108, %p109
    %p111 = scmp.le.s32.totalorder 1, %s9
    %p112 = scmp.lt.s32.totalorder %s9, 3
    %p113 = pnand %p111, %p112
    %p114 = pneg %p113
    // Predicated region
    $region9: #{bert_forward.8} parent=5 // pred_check
      _
    $region10: #{bert_forward.8} parent=5 // pred_check_branch
      %116 = sbr.rel (%p113) target = $region12
    $region11: #{bert_forward.8} parent=5 // pred_region
      %s117 = ssub.s32 %s9, 1
      // Predicated region
      $region13: #{bert_forward.8} parent=11 // pred_check
        %p118 = pneg %p56
      $region14: #{bert_forward.8} parent=11 // pred_check_branch
        %120 = sbr.rel (%p118) target = $region16
      $region15: #{bert_forward.8} parent=11 // pred_region
        _
      $region16: #{bert_forward.8} parent=11 // pred_fallthru
        _
      // Predicated region
      $region17: #{bert_forward.8} parent=11 // pred_check
        %p121 = pneg %p77
      $region18: #{bert_forward.8} parent=11 // pred_check_branch
        %123 = sbr.rel (%p121) target = $region20
      $region19: #{bert_forward.8} parent=11 // pred_region
        _
      $region20: #{bert_forward.8} parent=11 // pred_fallthru
        _
    $region12: #{bert_forward.8} parent=5 // pred_fallthru
      _
    %p124 = scmp.lt.s32.totalorder %s9, 2
    // Predicated region
    $region21: #{bert_forward.8} parent=5 // pred_check
      %p125 = pneg %p124
    $region22: #{bert_forward.8} parent=5 // pred_check_branch
      %127 = sbr.rel (%p125) target = $region24
    $region23: #{bert_forward.8} parent=5 // pred_region
      // Predicated region
      $region25: #{bert_forward.8} parent=23 // pred_check
        %p128 = pneg %p29
      $region26: #{bert_forward.8} parent=23 // pred_check_branch
        %130 = sbr.rel (%p128) target = $region28
      $region27: #{bert_forward.8} parent=23 // pred_region
        %p131 = scmp.lt.s32.totalorder %s9, 1
        %s132 = scalar_select %p131, %s9, 1
        %s133 = smul.addr %s132, 8
        %s134 = scalar_lea.vmem %s0, %s133
      $region28: #{bert_forward.8} parent=23 // pred_fallthru
        _
    $region24: #{bert_forward.8} parent=5 // pred_fallthru
      _
    %p135 = scmp.le.s32.totalorder 1, %s9
    %p136 = scmp.lt.s32.totalorder %s9, 3
    %p137 = pnand %p135, %p136
    %p138 = pneg %p137
    // Predicated region
    $region29: #{bert_forward.8} parent=5 // pred_check
      _
    $region30: #{bert_forward.8} parent=5 // pred_check_branch
      %140 = sbr.rel (%p137) target = $region32
    $region31: #{bert_forward.8} parent=5 // pred_region
      %s141 = ssub.s32 %s9, 1
      %p142 = scmp.lt.s32.totalorder %s14, 1
      %s143 = scalar_select %p142, %s14, 1
      %s144 = smul.addr %s143, 8
      %s145 = scalar_lea.vmem %s0, %s144
      %p146 = pneg %p35
      %p147 = pneg %p32
      %p148 = pneg %p56
      %p149 = pneg %p53
      %p150 = pneg %p77
      %p151 = pneg %p74
      %p152 = pneg %p103
      %p153 = pneg %p100
      %p154 = scmp.lt.s32.totalorder %s14, 1
      %s155 = scalar_select %p154, %s14, 1
      %s156 = smul.addr %s155, 3
      %s157 = smul.addr %s156, 8
      %s158 = scalar_lea.vmem %s3, %s157
      %p159 = scmp.lt.s32.totalorder %s14, 1
      %s160 = scalar_select %p159, %s14, 1
      %s161 = smul.addr %s160, 8
      %s162 = scalar_lea.vmem %s0, %s161
      %p163 = scmp.lt.s32.totalorder %s14, 1
      %s164 = scalar_select %p163, %s14, 1
      %s165 = smul.addr %s164, 3
      %s166 = smul.addr %s165, 8
      %s167 = scalar_lea.vmem %s3, %s166
      %v169 = vld [vmem:[%s162] sm:$0xff]
      %v170 = vpack.c.bf16 %v169, %v169
      %v171 = vld [vmem:[%s1] sm:$0xff]
      %v172 = vld [vmem:[%s1 + $0x8] sm:$0xf]
      %v173 = vld [vmem:[%s1 + $0xc] sm:$0xff]
      %v174 = vld [vmem:[%s1 + $0x14] sm:$0xf]
      %v175 = vld [vmem:[%s1 + $0x18] sm:$0xff]
      %v176 = vld [vmem:[%s1 + $0x20] sm:$0xf]
      %v177 = vld [vmem:[%s1 + $0x24] sm:$0xff]
      %v178 = vld [vmem:[%s1 + $0x2c] sm:$0xf]
      %v179 = vld [vmem:[%s1 + $0x30] sm:$0xff]
      %v180 = vld [vmem:[%s1 + $0x38] sm:$0xf]
      %v181 = vld [vmem:[%s1 + $0x3c] sm:$0xff]
      %v182 = vld [vmem:[%s1 + $0x44] sm:$0xf]
      %v183 = vld [vmem:[%s1 + $0x48] sm:$0xff]
      %v184 = vld [vmem:[%s1 + $0x50] sm:$0xf]
      %v185 = vld [vmem:[%s1 + $0x54] sm:$0xff]
      %v186 = vld [vmem:[%s1 + $0x5c] sm:$0xf]
      %v187 = vld [vmem:[%s1 + $0x60] sm:$0xff]
      %v188 = vld [vmem:[%s1 + $0x68] sm:$0xf]
      %v189 = vld [vmem:[%s1 + $0x6c] sm:$0xff]
      %v190 = vld [vmem:[%s1 + $0x74] sm:$0xf]
      %v191 = vld [vmem:[%s1 + $0x78] sm:$0xff]
      %v192 = vld [vmem:[%s1 + $0x80] sm:$0xf]
      %v193 = vld [vmem:[%s1 + $0x84] sm:$0xff]
      %v194 = vld [vmem:[%s1 + $0x8c] sm:$0xf]
      %v195 = vld [vmem:[%s1 + $0x90] sm:$0xff]
      %v196 = vld [vmem:[%s1 + $0x98] sm:$0xf]
      %v197 = vld [vmem:[%s1 + $0x9c] sm:$0xff]
      %v198 = vld [vmem:[%s1 + $0xa4] sm:$0xf]
      %v199 = vld [vmem:[%s1 + $0xa8] sm:$0xff]
      %v200 = vld [vmem:[%s1 + $0xb0] sm:$0xf]
      %v201 = vld [vmem:[%s1 + $0xb4] sm:$0xff]
      %v202 = vld [vmem:[%s1 + $0xbc] sm:$0xf]
      %v203 = vld [vmem:[%s2] sm:$0x7]
      %v205 = vlaneseq
      %v206 = vshrl.u32 %v205, 7
      %v207 = vsub.s32 0, %v206
      %v208 = vrot.slane %v203, %v207
      %v209 = vlaneseq
      %v210 = vshrl.u32 %v209, 7
      %v211 = vsub.s32 1, %v210
      %v212 = vrot.slane %v203, %v211
      %v213 = vlaneseq
      %v214 = vshrl.u32 %v213, 7
      %v215 = vsub.s32 2, %v214
      %v216 = vrot.slane %v203, %v215
      %v252 = vunpack.c.l.b16 %v171
      %v253 = vunpack.c.h.b16 %v171
      %v254 = vunpack.c.l.b16 %v172
      %v255 = vunpack.c.l.b16 %v173
      %v256 = vunpack.c.h.b16 %v173
      %v257 = vunpack.c.l.b16 %v174
      %v258 = vunpack.c.l.b16 %v175
      %v259 = vunpack.c.h.b16 %v175
      %v260 = vunpack.c.l.b16 %v176
      %v261 = vunpack.c.l.b16 %v177
      %v262 = vunpack.c.h.b16 %v177
      %v263 = vunpack.c.l.b16 %v178
      %v264 = vunpack.c.l.b16 %v179
      %v265 = vunpack.c.h.b16 %v179
      %v266 = vunpack.c.l.b16 %v180
      %v267 = vunpack.c.l.b16 %v181
      %v268 = vunpack.c.h.b16 %v181
      %v269 = vunpack.c.l.b16 %v182
      %v270 = vunpack.c.l.b16 %v183
      %v271 = vunpack.c.h.b16 %v183
      %v272 = vunpack.c.l.b16 %v184
      %v273 = vunpack.c.l.b16 %v185
      %v274 = vunpack.c.h.b16 %v185
      %v275 = vunpack.c.l.b16 %v186
      %v276 = vunpack.c.l.b16 %v187
      %v277 = vunpack.c.h.b16 %v187
      %v278 = vunpack.c.l.b16 %v188
      %v279 = vunpack.c.l.b16 %v189
      %v280 = vunpack.c.h.b16 %v189
      %v281 = vunpack.c.l.b16 %v190
      %v282 = vunpack.c.l.b16 %v191
      %v283 = vunpack.c.h.b16 %v191
      %v284 = vunpack.c.l.b16 %v192
      %v285 = vunpack.c.l.b16 %v193
      %v286 = vunpack.c.h.b16 %v193
      %v287 = vunpack.c.l.b16 %v194
      %v288 = vunpack.c.l.b16 %v195
      %v289 = vunpack.c.h.b16 %v195
      %v290 = vunpack.c.l.b16 %v196
      %v291 = vunpack.c.l.b16 %v197
      %v292 = vunpack.c.h.b16 %v197
      %v293 = vunpack.c.l.b16 %v198
      %v294 = vunpack.c.l.b16 %v199
      %v295 = vunpack.c.h.b16 %v199
      %v296 = vunpack.c.l.b16 %v200
      %v297 = vunpack.c.l.b16 %v201
      %v298 = vunpack.c.h.b16 %v201
      %v299 = vunpack.c.l.b16 %v202
      %v300 = vpack.c.b16 %v255, %v252
      %v301 = vpack.c.b16 %v256, %v253
      %v302 = vpack.c.b16 %v257, %v254
      %v303 = vpack.c.b16 %v261, %v258
      %v304 = vpack.c.b16 %v262, %v259
      %v305 = vpack.c.b16 %v263, %v260
      %v306 = vpack.c.b16 %v267, %v264
      %v307 = vpack.c.b16 %v268, %v265
      %v308 = vpack.c.b16 %v269, %v266
      %v309 = vpack.c.b16 %v273, %v270
      %v310 = vpack.c.b16 %v274, %v271
      %v311 = vpack.c.b16 %v275, %v272
      %v312 = vpack.c.b16 %v279, %v276
      %v313 = vpack.c.b16 %v280, %v277
      %v314 = vpack.c.b16 %v281, %v278
      %v315 = vpack.c.b16 %v285, %v282
      %v316 = vpack.c.b16 %v286, %v283
      %v317 = vpack.c.b16 %v287, %v284
      %v318 = vpack.c.b16 %v291, %v288
      %v319 = vpack.c.b16 %v292, %v289
      %v320 = vpack.c.b16 %v293, %v290
      %v321 = vpack.c.b16 %v297, %v294
      %v322 = vpack.c.b16 %v298, %v295
      %v323 = vpack.c.b16 %v299, %v296
      %348 = vmatprep.subr.bf16.mxu0 %v301
      %349 = vmatpush1.bf16.msra.mxu0 %v300
      %350 = vmatprep.subr.bf16.mxu0 %v304
      %351 = vmatpush1.bf16.msra.mxu0 %v303
      %352 = vmatprep.subr.bf16.mxu0 %v307
      %353 = vmatpush1.bf16.msra.mxu0 %v306
      %354 = vmatprep.subr.bf16.mxu0 %v310
      %355 = vmatpush1.bf16.msra.mxu0 %v309
      %356 = vmatprep.subr.bf16.mxu0 %v313
      %357 = vmatpush1.bf16.msra.mxu0 %v312
      %358 = vmatprep.subr.bf16.mxu0 %v316
      %359 = vmatpush1.bf16.msra.mxu0 %v315
      %360 = vmatprep.subr.bf16.mxu0 %v319
      %361 = vmatpush1.bf16.msra.mxu0 %v318
      %362 = vmatprep.subr.bf16.mxu0 %v322
      %363 = vmatpush1.bf16.msra.mxu0 %v321
      %364 = vmatprep.subr.bf16.mxu0 0
      %365 = vmatpush1.bf16.msra.mxu0 0
      %366 = vmatprep.subr.bf16.mxu0 0
      %367 = vmatpush1.bf16.msra.mxu0 0
      %368 = vmatprep.subr.bf16.mxu0 0
      %369 = vmatpush1.bf16.msra.mxu0 0
      %370 = vmatprep.subr.bf16.mxu0 0
      %371 = vmatpush1.bf16.msra.mxu0 0
      %372 = vmatprep.subr.bf16.mxu0 0
      %373 = vmatpush1.bf16.msra.mxu0 0
      %374 = vmatprep.subr.bf16.mxu0 0
      %375 = vmatpush1.bf16.msra.mxu0 0
      %376 = vmatprep.subr.bf16.mxu0 0
      %377 = vmatpush1.bf16.msra.mxu0 0
      %378 = vmatprep.subr.bf16.mxu0 0
      %379 = vmatpush1.bf16.msra.mxu0 0
      %380 = vmatprep.mubr.bf16.mxu0 0
      %381 = vmatmul.mubr.bf16.gmra.mrb[0].mxu0 %v170
      %v382 = vpop.f32.mrb[0].mxu0
      %v383 = vadd.f32 %v208, %v382
      %v384 = vpop.f32.mrb[0].mxu0
      %v385 = vadd.f32 %v212, %v384
      %v386 = vpop.f32.mrb[0].mxu0
      %v387 = vpop.f32.mrb[0].mxu0
      %388 = vdwg.mxu0
      %389 = vmatprep.subr.bf16.mxu0 0
      %390 = vmatpush1.bf16.msra.mxu0 %v302
      %391 = vmatprep.subr.bf16.mxu0 0
      %392 = vmatpush1.bf16.msra.mxu0 %v305
      %393 = vmatprep.subr.bf16.mxu0 0
      %394 = vmatpush1.bf16.msra.mxu0 %v308
      %395 = vmatprep.subr.bf16.mxu0 0
      %396 = vmatpush1.bf16.msra.mxu0 %v311
      %397 = vmatprep.subr.bf16.mxu0 0
      %398 = vmatpush1.bf16.msra.mxu0 %v314
      %399 = vmatprep.subr.bf16.mxu0 0
      %400 = vmatpush1.bf16.msra.mxu0 %v317
      %401 = vmatprep.subr.bf16.mxu0 0
      %402 = vmatpush1.bf16.msra.mxu0 %v320
      %403 = vmatprep.subr.bf16.mxu0 0
      %404 = vmatpush1.bf16.msra.mxu0 %v323
      %405 = vmatprep.subr.bf16.mxu0 0
      %406 = vmatpush1.bf16.msra.mxu0 0
      %407 = vmatprep.subr.bf16.mxu0 0
      %408 = vmatpush1.bf16.msra.mxu0 0
      %409 = vmatprep.subr.bf16.mxu0 0
      %410 = vmatpush1.bf16.msra.mxu0 0
      %411 = vmatprep.subr.bf16.mxu0 0
      %412 = vmatpush1.bf16.msra.mxu0 0
      %413 = vmatprep.subr.bf16.mxu0 0
      %414 = vmatpush1.bf16.msra.mxu0 0
      %415 = vmatprep.subr.bf16.mxu0 0
      %416 = vmatpush1.bf16.msra.mxu0 0
      %417 = vmatprep.subr.bf16.mxu0 0
      %418 = vmatpush1.bf16.msra.mxu0 0
      %419 = vmatprep.subr.bf16.mxu0 0
      %420 = vmatpush1.bf16.msra.mxu0 0
      %421 = vmatprep.mubr.bf16.mxu0 0
      %422 = vmatmul.mubr.bf16.gmra.mrb[0].mxu0 %v170
      %v423 = vpop.f32.mrb[0].mxu0
      %v424 = vadd.f32 %v216, %v423
      %v425 = vpop.f32.mrb[0].mxu0
      %v426 = vpop.f32.mrb[0].mxu0
      %v427 = vpop.f32.mrb[0].mxu0
      %428 = vdwg.mxu0
      %429 = vst [vmem:[%s167] sm:$0xff] %v383
      %430 = vst [vmem:[%s167 + $0x8] sm:$0xff] %v385
      %431 = vst [vmem:[%s167 + $0x10] sm:$0xff] %v424
      %p432 = scmp.lt.s32.totalorder %s14, 1
      %s433 = scalar_select %p432, %s14, 1
      %s434 = smul.addr %s433, 3
      %s435 = smul.addr %s434, 8
      %s436 = scalar_lea.vmem %s3, %s435
      // Predicated region
      $region33: #{bert_forward.8} parent=31 // pred_check
        %p437 = pneg %p100
      $region34: #{bert_forward.8} parent=31 // pred_check_branch
        %439 = sbr.rel (%p437) target = $region36
      $region35: #{bert_forward.8} parent=31 // pred_region
        _
      $region36: #{bert_forward.8} parent=31 // pred_fallthru
        _
    $region32: #{bert_forward.8} parent=5 // pred_fallthru
      _
    %p440 = scmp.le.s32.totalorder 2, %s9
    // Predicated region
    $region37: #{bert_forward.8} parent=5 // pred_check
      %p441 = pneg %p440
    $region38: #{bert_forward.8} parent=5 // pred_check_branch
      %443 = sbr.rel (%p441) target = $region40
    $region39: #{bert_forward.8} parent=5 // pred_region
      %s444 = ssub.s32 %s9, 2
      // Predicated region
      $region41: #{bert_forward.8} parent=39 // pred_check
        %p445 = pneg %p106
      $region42: #{bert_forward.8} parent=39 // pred_check_branch
        %447 = sbr.rel (%p445) target = $region44
      $region43: #{bert_forward.8} parent=39 // pred_region
        %p448 = scmp.lt.s32.totalorder %s15, 1
        %s449 = scalar_select %p448, %s15, 1
        %s450 = smul.addr %s449, 3
        %s451 = smul.addr %s450, 8
        %s452 = scalar_lea.vmem %s3, %s451
      $region44: #{bert_forward.8} parent=39 // pred_fallthru
        _
    $region40: #{bert_forward.8} parent=5 // pred_fallthru
      _
  $region6: #{bert_forward.8} parent=0 // loop_footer
    %s13 = sadd.s32 1, %s9
  $region7: #{bert_forward.8} parent=0 // loop_footer_branch
    %8 = sbr.rel target = $region3
  $region8: #{bert_forward.8} parent=0 // loop_exit
    _

// kernel: bert_forward.10
$region0: #{bert_forward.10}
  #allocation0 [shape = 'u32[]', space=smem, size = 0x4, offset = 0x4, fixed_abs, tag = 'smem constant byte address 0x4 - core index']
  #allocation1 [shape = 'u32[144,128]{1,0:T(1,128)}', space=vmem, size = 0x12000, scoped, tag = 'internal scratch']
  %s0 = inlined_call_operand.vmem [shape: f32[16,128], index: 0, kind: input, shape index: {}]
  %s1 = inlined_call_operand.vmem [shape: bf16[128,256], index: 1, kind: input, shape index: {}]
  %s2 = inlined_call_operand.vmem [shape: f32[1,256], index: 2, kind: input, shape index: {}]
  %s3 = inlined_call_operand.vmem [shape: bf16[256,128], index: 3, kind: input, shape index: {}]
  %s4 = inlined_call_operand.vmem [shape: f32[1,128], index: 4, kind: input, shape index: {}]
  %s5 = inlined_call_operand.vmem [shape: f32[1,128], index: 5, kind: input, shape index: {}]
  %s6 = inlined_call_operand.vmem [shape: f32[1,128], index: 6, kind: input, shape index: {}]
  %s7 = inlined_call_operand.vmem [shape: f32[16,128], index: 7, kind: output, shape index: {}]
  %s8 = sld [smem:[#allocation0]]
  $region61: #{bert_forward.10} parent=0
    _
  %s10 = ssub.s32 1, %s8
  %s11 = scalar_select 0, %s10, %s8
  loop: start=0, step=1, limit=4
  $region2: #{bert_forward.10} parent=0 // loop_pre_header
    _
  $region3: #{bert_forward.10} parent=0 // loop_header
    %s13 = sphi 0, %s17
    %p14 = scmp.ge.s32.totalorder %s13, 4
    %s23 = sphi 0, %s25
    %s26 = sphi 0, %s23
    %s27 = sphi 0, %s26
    %s43 = sphi 0, %s27
    %s47 = sphi 0, %s47
    %s49 = sphi 0, %s47
    %s50 = sphi 0, %s49
    %s64 = sphi 0, %s50
    %s68 = sphi 0, %s68
    %s70 = sphi 0, %s68
    %s71 = sphi 0, %s70
    %s85 = sphi 0, %s71
    %s89 = sphi 0, %s89
    %s91 = sphi 0, %s89
    %s92 = sphi 0, %s91
    %s106 = sphi 0, %s92
    %s110 = sphi 0, %s110
    %s112 = sphi 0, %s110
    %s113 = sphi 0, %s112
    %s127 = sphi 0, %s113
    %s131 = sphi 0, %s131
    %s133 = sphi 0, %s131
    %s134 = sphi 0, %s133
    %s148 = sphi 0, %s134
    %s152 = sphi 0, %s152
    %s154 = sphi 0, %s152
    %s155 = sphi 0, %s154
    %s169 = sphi 0, %s155
    %s175 = sphi 0, %s177
    %s178 = sphi 0, %s175
    %s179 = sphi 0, %s178
    %s195 = sphi 0, %s179
  $region4: #{bert_forward.10} parent=0 // loop_header_branch
    %16 = sbr.rel (%p14) target = $region8
  $region5: #{bert_forward.10} parent=0 // loop_body
    %s18 = ssub.s32 %s13, 1
    %s19 = ssub.s32 %s13, 2
    %s20 = sadd.s32 %s13, 1
    %s21 = ssub.s32 %s13, %s20
    %p22 = scmp.eq.s32.totalorder %s21, 0
    %s24 = sadd.s32 %s23, 1
    %s25 = scalar_select %p22, %s23, %s24
    %p28 = pneg %p22
    %p29 = scmp.eq.s32.totalorder %s13, 1
    %p30 = por %p28, %p29
    %p31 = scmp.ne.s32.totalorder %s23, %s26
    %p32 = scmp.eq.s32.totalorder %s13, 0
    %p33 = por %p31, %p32
    %p34 = scmp.ne.s32.totalorder %s23, %s26
    %p35 = scmp.eq.s32.totalorder %s18, 1
    %p36 = por %p34, %p35
    %p37 = scmp.ne.s32.totalorder %s26, %s27
    %p38 = scmp.eq.s32.totalorder %s18, 0
    %p39 = por %p37, %p38
    %p40 = scmp.ne.s32.totalorder %s26, %s27
    %p41 = scmp.eq.s32.totalorder %s19, 1
    %p42 = por %p40, %p41
    %p44 = scmp.ne.s32.totalorder %s27, %s43
    %p45 = scmp.eq.s32.totalorder %s19, 0
    %p46 = por %p44, %p45
    %s48 = sadd.s32 %s47, 1
    %p51 = scmp.eq.s32.totalorder %s13, 1
    %p52 = scmp.ne.s32.totalorder %s47, %s49
    %p53 = scmp.eq.s32.totalorder %s13, 0
    %p54 = por %p52, %p53
    %p55 = scmp.ne.s32.totalorder %s47, %s49
    %p56 = scmp.eq.s32.totalorder %s18, 1
    %p57 = por %p55, %p56
    %p58 = scmp.ne.s32.totalorder %s49, %s50
    %p59 = scmp.eq.s32.totalorder %s18, 0
    %p60 = por %p58, %p59
    %p61 = scmp.ne.s32.totalorder %s49, %s50
    %p62 = scmp.eq.s32.totalorder %s19, 1
    %p63 = por %p61, %p62
    %p65 = scmp.ne.s32.totalorder %s50, %s64
    %p66 = scmp.eq.s32.totalorder %s19, 0
    %p67 = por %p65, %p66
    %s69 = sadd.s32 %s68, 1
    %p72 = scmp.eq.s32.totalorder %s13, 1
    %p73 = scmp.ne.s32.totalorder %s68, %s70
    %p74 = scmp.eq.s32.totalorder %s13, 0
    %p75 = por %p73, %p74
    %p76 = scmp.ne.s32.totalorder %s68, %s70
    %p77 = scmp.eq.s32.totalorder %s18, 1
    %p78 = por %p76, %p77
    %p79 = scmp.ne.s32.totalorder %s70, %s71
    %p80 = scmp.eq.s32.totalorder %s18, 0
    %p81 = por %p79, %p80
    %p82 = scmp.ne.s32.totalorder %s70, %s71
    %p83 = scmp.eq.s32.totalorder %s19, 1
    %p84 = por %p82, %p83
    %p86 = scmp.ne.s32.totalorder %s71, %s85
    %p87 = scmp.eq.s32.totalorder %s19, 0
    %p88 = por %p86, %p87
    %s90 = sadd.s32 %s89, 1
    %p93 = scmp.eq.s32.totalorder %s13, 1
    %p94 = scmp.ne.s32.totalorder %s89, %s91
    %p95 = scmp.eq.s32.totalorder %s13, 0
    %p96 = por %p94, %p95
    %p97 = scmp.ne.s32.totalorder %s89, %s91
    %p98 = scmp.eq.s32.totalorder %s18, 1
    %p99 = por %p97, %p98
    %p100 = scmp.ne.s32.totalorder %s91, %s92
    %p101 = scmp.eq.s32.totalorder %s18, 0
    %p102 = por %p100, %p101
    %p103 = scmp.ne.s32.totalorder %s91, %s92
    %p104 = scmp.eq.s32.totalorder %s19, 1
    %p105 = por %p103, %p104
    %p107 = scmp.ne.s32.totalorder %s92, %s106
    %p108 = scmp.eq.s32.totalorder %s19, 0
    %p109 = por %p107, %p108
    %s111 = sadd.s32 %s110, 1
    %p114 = scmp.eq.s32.totalorder %s13, 1
    %p115 = scmp.ne.s32.totalorder %s110, %s112
    %p116 = scmp.eq.s32.totalorder %s13, 0
    %p117 = por %p115, %p116
    %p118 = scmp.ne.s32.totalorder %s110, %s112
    %p119 = scmp.eq.s32.totalorder %s18, 1
    %p120 = por %p118, %p119
    %p121 = scmp.ne.s32.totalorder %s112, %s113
    %p122 = scmp.eq.s32.totalorder %s18, 0
    %p123 = por %p121, %p122
    %p124 = scmp.ne.s32.totalorder %s112, %s113
    %p125 = scmp.eq.s32.totalorder %s19, 1
    %p126 = por %p124, %p125
    %p128 = scmp.ne.s32.totalorder %s113, %s127
    %p129 = scmp.eq.s32.totalorder %s19, 0
    %p130 = por %p128, %p129
    %s132 = sadd.s32 %s131, 1
    %p135 = scmp.eq.s32.totalorder %s13, 1
    %p136 = scmp.ne.s32.totalorder %s131, %s133
    %p137 = scmp.eq.s32.totalorder %s13, 0
    %p138 = por %p136, %p137
    %p139 = scmp.ne.s32.totalorder %s131, %s133
    %p140 = scmp.eq.s32.totalorder %s18, 1
    %p141 = por %p139, %p140
    %p142 = scmp.ne.s32.totalorder %s133, %s134
    %p143 = scmp.eq.s32.totalorder %s18, 0
    %p144 = por %p142, %p143
    %p145 = scmp.ne.s32.totalorder %s133, %s134
    %p146 = scmp.eq.s32.totalorder %s19, 1
    %p147 = por %p145, %p146
    %p149 = scmp.ne.s32.totalorder %s134, %s148
    %p150 = scmp.eq.s32.totalorder %s19, 0
    %p151 = por %p149, %p150
    %s153 = sadd.s32 %s152, 1
    %p156 = scmp.eq.s32.totalorder %s13, 1
    %p157 = scmp.ne.s32.totalorder %s152, %s154
    %p158 = scmp.eq.s32.totalorder %s13, 0
    %p159 = por %p157, %p158
    %p160 = scmp.ne.s32.totalorder %s152, %s154
    %p161 = scmp.eq.s32.totalorder %s18, 1
    %p162 = por %p160, %p161
    %p163 = scmp.ne.s32.totalorder %s154, %s155
    %p164 = scmp.eq.s32.totalorder %s18, 0
    %p165 = por %p163, %p164
    %p166 = scmp.ne.s32.totalorder %s154, %s155
    %p167 = scmp.eq.s32.totalorder %s19, 1
    %p168 = por %p166, %p167
    %p170 = scmp.ne.s32.totalorder %s155, %s169
    %p171 = scmp.eq.s32.totalorder %s19, 0
    %p172 = por %p170, %p171
    %s173 = ssub.s32 %s13, %s20
    %p174 = scmp.eq.s32.totalorder %s173, 0
    %s176 = sadd.s32 %s175, 1
    %s177 = scalar_select %p174, %s175, %s176
    %p180 = pneg %p174
    %p181 = scmp.eq.s32.totalorder %s13, 1
    %p182 = por %p180, %p181
    %p183 = scmp.ne.s32.totalorder %s175, %s178
    %p184 = scmp.eq.s32.totalorder %s13, 0
    %p185 = por %p183, %p184
    %p186 = scmp.ne.s32.totalorder %s175, %s178
    %p187 = scmp.eq.s32.totalorder %s18, 1
    %p188 = por %p186, %p187
    %p189 = scmp.ne.s32.totalorder %s178, %s179
    %p190 = scmp.eq.s32.totalorder %s18, 0
    %p191 = por %p189, %p190
    %p192 = scmp.ne.s32.totalorder %s178, %s179
    %p193 = scmp.eq.s32.totalorder %s19, 1
    %p194 = por %p192, %p193
    %p196 = scmp.ne.s32.totalorder %s179, %s195
    %p197 = scmp.eq.s32.totalorder %s19, 0
    %p198 = por %p196, %p197
    %p199 = scmp.le.s32.totalorder 1, %s13
    %p200 = scmp.lt.s32.totalorder %s13, 3
    %p201 = pnand %p199, %p200
    %p202 = pneg %p201
    // Predicated region
    $region9: #{bert_forward.10} parent=5 // pred_check
      _
    $region10: #{bert_forward.10} parent=5 // pred_check_branch
      %204 = sbr.rel (%p201) target = $region12
    $region11: #{bert_forward.10} parent=5 // pred_region
      %s205 = ssub.s32 %s13, 1
      // Predicated region
      $region13: #{bert_forward.10} parent=11 // pred_check
        %p206 = pneg %p60
      $region14: #{bert_forward.10} parent=11 // pred_check_branch
        %208 = sbr.rel (%p206) target = $region16
      $region15: #{bert_forward.10} parent=11 // pred_region
        _
      $region16: #{bert_forward.10} parent=11 // pred_fallthru
        _
      // Predicated region
      $region17: #{bert_forward.10} parent=11 // pred_check
        %p209 = pneg %p81
      $region18: #{bert_forward.10} parent=11 // pred_check_branch
        %211 = sbr.rel (%p209) target = $region20
      $region19: #{bert_forward.10} parent=11 // pred_region
        _
      $region20: #{bert_forward.10} parent=11 // pred_fallthru
        _
      // Predicated region
      $region21: #{bert_forward.10} parent=11 // pred_check
        %p212 = pneg %p102
      $region22: #{bert_forward.10} parent=11 // pred_check_branch
        %214 = sbr.rel (%p212) target = $region24
      $region23: #{bert_forward.10} parent=11 // pred_region
        _
      $region24: #{bert_forward.10} parent=11 // pred_fallthru
        _
      // Predicated region
      $region25: #{bert_forward.10} parent=11 // pred_check
        %p215 = pneg %p123
      $region26: #{bert_forward.10} parent=11 // pred_check_branch
        %217 = sbr.rel (%p215) target = $region28
      $region27: #{bert_forward.10} parent=11 // pred_region
        _
      $region28: #{bert_forward.10} parent=11 // pred_fallthru
        _
      // Predicated region
      $region29: #{bert_forward.10} parent=11 // pred_check
        %p218 = pneg %p144
      $region30: #{bert_forward.10} parent=11 // pred_check_branch
        %220 = sbr.rel (%p218) target = $region32
      $region31: #{bert_forward.10} parent=11 // pred_region
        _
      $region32: #{bert_forward.10} parent=11 // pred_fallthru
        _
      // Predicated region
      $region33: #{bert_forward.10} parent=11 // pred_check
        %p221 = pneg %p165
      $region34: #{bert_forward.10} parent=11 // pred_check_branch
        %223 = sbr.rel (%p221) target = $region36
      $region35: #{bert_forward.10} parent=11 // pred_region
        _
      $region36: #{bert_forward.10} parent=11 // pred_fallthru
        _
    $region12: #{bert_forward.10} parent=5 // pred_fallthru
      _
    %p224 = scmp.lt.s32.totalorder %s13, 2
    // Predicated region
    $region37: #{bert_forward.10} parent=5 // pred_check
      %p225 = pneg %p224
    $region38: #{bert_forward.10} parent=5 // pred_check_branch
      %227 = sbr.rel (%p225) target = $region40
    $region39: #{bert_forward.10} parent=5 // pred_region
      // Predicated region
      $region41: #{bert_forward.10} parent=39 // pred_check
        %p228 = pneg %p33
      $region42: #{bert_forward.10} parent=39 // pred_check_branch
        %230 = sbr.rel (%p228) target = $region44
      $region43: #{bert_forward.10} parent=39 // pred_region
        %p231 = scmp.lt.s32.totalorder %s13, 1
        %s232 = scalar_select %p231, %s13, 1
        %s233 = smul.addr %s232, 8
        %s234 = scalar_lea.vmem %s0, %s233
      $region44: #{bert_forward.10} parent=39 // pred_fallthru
        _
    $region40: #{bert_forward.10} parent=5 // pred_fallthru
      _
    %p235 = scmp.le.s32.totalorder 1, %s13
    %p236 = scmp.lt.s32.totalorder %s13, 3
    %p237 = pnand %p235, %p236
    %p238 = pneg %p237
    // Predicated region
    $region45: #{bert_forward.10} parent=5 // pred_check
      _
    $region46: #{bert_forward.10} parent=5 // pred_check_branch
      %240 = sbr.rel (%p237) target = $region48
    $region47: #{bert_forward.10} parent=5 // pred_region
      %s241 = ssub.s32 %s13, 1
      %p242 = scmp.lt.s32.totalorder %s18, 1
      %s243 = scalar_select %p242, %s18, 1
      %s244 = smul.addr %s243, 8
      %s245 = scalar_lea.vmem %s0, %s244
      %p246 = pneg %p39
      %p247 = pneg %p36
      %p248 = pneg %p60
      %p249 = pneg %p57
      %p250 = pneg %p81
      %p251 = pneg %p78
      %p252 = pneg %p102
      %p253 = pneg %p99
      %p254 = pneg %p123
      %p255 = pneg %p120
      %p256 = pneg %p144
      %p257 = pneg %p141
      %p258 = pneg %p165
      %p259 = pneg %p162
      %p260 = pneg %p191
      %p261 = pneg %p188
      %p262 = scmp.lt.s32.totalorder %s18, 1
      %s263 = scalar_select %p262, %s18, 1
      %s264 = smul.addr %s263, 8
      %s265 = scalar_lea.vmem %s7, %s264
      %p266 = scmp.lt.s32.totalorder %s18, 1
      %s267 = scalar_select %p266, %s18, 1
      %s268 = smul.addr %s267, 8
      %s269 = scalar_lea.vmem %s0, %s268
      %p270 = scmp.lt.s32.totalorder %s18, 1
      %s271 = scalar_select %p270, %s18, 1
      %s272 = smul.addr %s271, 8
      %s273 = scalar_lea.vmem %s7, %s272
      %v275 = vld [vmem:[%s269] sm:$0xff]
      %v276 = vpack.c.bf16 %v275, %v275
      %v277 = vld [vmem:[%s1] sm:$0xff]
      %v278 = vld [vmem:[%s1 + $0x8] sm:$0xff]
      %v279 = vld [vmem:[%s1 + $0x10] sm:$0xff]
      %v280 = vld [vmem:[%s1 + $0x18] sm:$0xff]
      %v281 = vld [vmem:[%s1 + $0x20] sm:$0xff]
      %v282 = vld [vmem:[%s1 + $0x28] sm:$0xff]
      %v283 = vld [vmem:[%s1 + $0x30] sm:$0xff]
      %v284 = vld [vmem:[%s1 + $0x38] sm:$0xff]
      %v285 = vld [vmem:[%s1 + $0x40] sm:$0xff]
      %v286 = vld [vmem:[%s1 + $0x48] sm:$0xff]
      %v287 = vld [vmem:[%s1 + $0x50] sm:$0xff]
      %v288 = vld [vmem:[%s1 + $0x58] sm:$0xff]
      %v289 = vld [vmem:[%s1 + $0x60] sm:$0xff]
      %v290 = vld [vmem:[%s1 + $0x68] sm:$0xff]
      %v291 = vld [vmem:[%s1 + $0x70] sm:$0xff]
      %v292 = vld [vmem:[%s1 + $0x78] sm:$0xff]
      %v293 = vld [vmem:[%s2] sm:$0x3]
      %v295 = vlaneseq
      %v296 = vshrl.u32 %v295, 7
      %v297 = vsub.s32 0, %v296
      %v298 = vrot.slane %v293, %v297
      %v299 = vlaneseq
      %v300 = vshrl.u32 %v299, 7
      %v301 = vsub.s32 1, %v300
      %v302 = vrot.slane %v293, %v301
      %v321 = vunpack.c.l.b16 %v277
      %v322 = vunpack.c.h.b16 %v277
      %v323 = vunpack.c.l.b16 %v278
      %v324 = vunpack.c.h.b16 %v278
      %v325 = vunpack.c.l.b16 %v279
      %v326 = vunpack.c.h.b16 %v279
      %v327 = vunpack.c.l.b16 %v280
      %v328 = vunpack.c.h.b16 %v280
      %v329 = vunpack.c.l.b16 %v281
      %v330 = vunpack.c.h.b16 %v281
      %v331 = vunpack.c.l.b16 %v282
      %v332 = vunpack.c.h.b16 %v282
      %v333 = vunpack.c.l.b16 %v283
      %v334 = vunpack.c.h.b16 %v283
      %v335 = vunpack.c.l.b16 %v284
      %v336 = vunpack.c.h.b16 %v284
      %v337 = vunpack.c.l.b16 %v285
      %v338 = vunpack.c.h.b16 %v285
      %v339 = vunpack.c.l.b16 %v286
      %v340 = vunpack.c.h.b16 %v286
      %v341 = vunpack.c.l.b16 %v287
      %v342 = vunpack.c.h.b16 %v287
      %v343 = vunpack.c.l.b16 %v288
      %v344 = vunpack.c.h.b16 %v288
      %v345 = vunpack.c.l.b16 %v289
      %v346 = vunpack.c.h.b16 %v289
      %v347 = vunpack.c.l.b16 %v290
      %v348 = vunpack.c.h.b16 %v290
      %v349 = vunpack.c.l.b16 %v291
      %v350 = vunpack.c.h.b16 %v291
      %v351 = vunpack.c.l.b16 %v292
      %v352 = vunpack.c.h.b16 %v292
      %v353 = vpack.c.b16 %v323, %v321
      %v354 = vpack.c.b16 %v324, %v322
      %v355 = vpack.c.b16 %v327, %v325
      %v356 = vpack.c.b16 %v328, %v326
      %v357 = vpack.c.b16 %v331, %v329
      %v358 = vpack.c.b16 %v332, %v330
      %v359 = vpack.c.b16 %v335, %v333
      %v360 = vpack.c.b16 %v336, %v334
      %v361 = vpack.c.b16 %v339, %v337
      %v362 = vpack.c.b16 %v340, %v338
      %v363 = vpack.c.b16 %v343, %v341
      %v364 = vpack.c.b16 %v344, %v342
      %v365 = vpack.c.b16 %v347, %v345
      %v366 = vpack.c.b16 %v348, %v346
      %v367 = vpack.c.b16 %v351, %v349
      %v368 = vpack.c.b16 %v352, %v350
      %385 = vmatprep.subr.bf16.mxu0 %v354
      %386 = vmatpush1.bf16.msra.mxu0 %v353
      %387 = vmatprep.subr.bf16.mxu0 %v356
      %388 = vmatpush1.bf16.msra.mxu0 %v355
      %389 = vmatprep.subr.bf16.mxu0 %v358
      %390 = vmatpush1.bf16.msra.mxu0 %v357
      %391 = vmatprep.subr.bf16.mxu0 %v360
      %392 = vmatpush1.bf16.msra.mxu0 %v359
      %393 = vmatprep.subr.bf16.mxu0 %v362
      %394 = vmatpush1.bf16.msra.mxu0 %v361
      %395 = vmatprep.subr.bf16.mxu0 %v364
      %396 = vmatpush1.bf16.msra.mxu0 %v363
      %397 = vmatprep.subr.bf16.mxu0 %v366
      %398 = vmatpush1.bf16.msra.mxu0 %v365
      %399 = vmatprep.subr.bf16.mxu0 %v368
      %400 = vmatpush1.bf16.msra.mxu0 %v367
      %401 = vmatprep.subr.bf16.mxu0 0
      %402 = vmatpush1.bf16.msra.mxu0 0
      %403 = vmatprep.subr.bf16.mxu0 0
      %404 = vmatpush1.bf16.msra.mxu0 0
      %405 = vmatprep.subr.bf16.mxu0 0
      %406 = vmatpush1.bf16.msra.mxu0 0
      %407 = vmatprep.subr.bf16.mxu0 0
      %408 = vmatpush1.bf16.msra.mxu0 0
      %409 = vmatprep.subr.bf16.mxu0 0
      %410 = vmatpush1.bf16.msra.mxu0 0
      %411 = vmatprep.subr.bf16.mxu0 0
      %412 = vmatpush1.bf16.msra.mxu0 0
      %413 = vmatprep.subr.bf16.mxu0 0
      %414 = vmatpush1.bf16.msra.mxu0 0
      %415 = vmatprep.subr.bf16.mxu0 0
      %416 = vmatpush1.bf16.msra.mxu0 0
      %417 = vmatprep.mubr.bf16.mxu0 0
      %418 = vmatmul.mubr.bf16.gmra.mrb[0].mxu0 %v276
      %v419 = vpop.f32.mrb[0].mxu0
      %v420 = vadd.f32 %v298, %v419
      %v421 = vpop.f32.mrb[0].mxu0
      %v422 = vadd.f32 %v302, %v421
      %v423 = vpop.f32.mrb[0].mxu0
      %v424 = vpop.f32.mrb[0].mxu0
      %425 = vdwg.mxu0
      %v426 = vmul.f32 %v420, 0.5
      %v427 = vmul.f32 %v422, 0.5
      %v428 = vmul.f32 %v420, 0.70710677
      %v429 = vmul.f32 %v422, 0.70710677
      %v430 = verf.f32.pop %v428
      %v431 = verf.f32.pop %v429
      %v432 = vadd.f32 %v430, 1.0
      %v433 = vadd.f32 %v431, 1.0
      %v434 = vmul.f32 %v426, %v432
      %v435 = vmul.f32 %v427, %v433
      %v436 = vpack.c.bf16 %v434, %v434
      %v437 = vpack.c.bf16 %v435, %v435
      %v438 = vld [vmem:[%s3] sm:$0xf]
      %v439 = vld [vmem:[%s3 + $0x4] sm:$0xf]
      %v440 = vld [vmem:[%s3 + $0x8] sm:$0xf]
      %v441 = vld [vmem:[%s3 + $0xc] sm:$0xf]
      %v442 = vld [vmem:[%s3 + $0x10] sm:$0xf]
      %v443 = vld [vmem:[%s3 + $0x14] sm:$0xf]
      %v444 = vld [vmem:[%s3 + $0x18] sm:$0xf]
      %v445 = vld [vmem:[%s3 + $0x1c] sm:$0xf]
      %v446 = vld [vmem:[%s3 + $0x20] sm:$0xf]
      %v447 = vld [vmem:[%s3 + $0x24] sm:$0xf]
      %v448 = vld [vmem:[%s3 + $0x28] sm:$0xf]
      %v449 = vld [vmem:[%s3 + $0x2c] sm:$0xf]
      %v450 = vld [vmem:[%s3 + $0x30] sm:$0xf]
      %v451 = vld [vmem:[%s3 + $0x34] sm:$0xf]
      %v452 = vld [vmem:[%s3 + $0x38] sm:$0xf]
      %v453 = vld [vmem:[%s3 + $0x3c] sm:$0xf]
      %v454 = vld [vmem:[%s3 + $0x40] sm:$0xf]
      %v455 = vld [vmem:[%s3 + $0x44] sm:$0xf]
      %v456 = vld [vmem:[%s3 + $0x48] sm:$0xf]
      %v457 = vld [vmem:[%s3 + $0x4c] sm:$0xf]
      %v458 = vld [vmem:[%s3 + $0x50] sm:$0xf]
      %v459 = vld [vmem:[%s3 + $0x54] sm:$0xf]
      %v460 = vld [vmem:[%s3 + $0x58] sm:$0xf]
      %v461 = vld [vmem:[%s3 + $0x5c] sm:$0xf]
      %v462 = vld [vmem:[%s3 + $0x60] sm:$0xf]
      %v463 = vld [vmem:[%s3 + $0x64] sm:$0xf]
      %v464 = vld [vmem:[%s3 + $0x68] sm:$0xf]
      %v465 = vld [vmem:[%s3 + $0x6c] sm:$0xf]
      %v466 = vld [vmem:[%s3 + $0x70] sm:$0xf]
      %v467 = vld [vmem:[%s3 + $0x74] sm:$0xf]
      %v468 = vld [vmem:[%s3 + $0x78] sm:$0xf]
      %v469 = vld [vmem:[%s3 + $0x7c] sm:$0xf]
      %v470 = vld [vmem:[%s4] sm:$0x1]
      %v472 = vlaneseq
      %v473 = vshrl.u32 %v472, 7
      %v474 = vsub.s32 0, %v473
      %v475 = vrot.slane %v470, %v474
      %v509 = vunpack.c.l.b16 %v438
      %v510 = vunpack.c.l.b16 %v439
      %v511 = vunpack.c.l.b16 %v440
      %v512 = vunpack.c.l.b16 %v441
      %v513 = vunpack.c.l.b16 %v442
      %v514 = vunpack.c.l.b16 %v443
      %v515 = vunpack.c.l.b16 %v444
      %v516 = vunpack.c.l.b16 %v445
      %v517 = vunpack.c.l.b16 %v446
      %v518 = vunpack.c.l.b16 %v447
      %v519 = vunpack.c.l.b16 %v448
      %v520 = vunpack.c.l.b16 %v449
      %v521 = vunpack.c.l.b16 %v450
      %v522 = vunpack.c.l.b16 %v451
      %v523 = vunpack.c.l.b16 %v452
      %v524 = vunpack.c.l.b16 %v453
      %v525 = vunpack.c.l.b16 %v454
      %v526 = vunpack.c.l.b16 %v455
      %v527 = vunpack.c.l.b16 %v456
      %v528 = vunpack.c.l.b16 %v457
      %v529 = vunpack.c.l.b16 %v458
      %v530 = vunpack.c.l.b16 %v459
      %v531 = vunpack.c.l.b16 %v460
      %v532 = vunpack.c.l.b16 %v461
      %v533 = vunpack.c.l.b16 %v462
      %v534 = vunpack.c.l.b16 %v463
      %v535 = vunpack.c.l.b16 %v464
      %v536 = vunpack.c.l.b16 %v465
      %v537 = vunpack.c.l.b16 %v466
      %v538 = vunpack.c.l.b16 %v467
      %v539 = vunpack.c.l.b16 %v468
      %v540 = vunpack.c.l.b16 %v469
      %v541 = vpack.c.b16 %v510, %v509
      %v542 = vpack.c.b16 %v512, %v511
      %v543 = vpack.c.b16 %v514, %v513
      %v544 = vpack.c.b16 %v516, %v515
      %v545 = vpack.c.b16 %v518, %v517
      %v546 = vpack.c.b16 %v520, %v519
      %v547 = vpack.c.b16 %v522, %v521
      %v548 = vpack.c.b16 %v524, %v523
      %v549 = vpack.c.b16 %v526, %v525
      %v550 = vpack.c.b16 %v528, %v527
      %v551 = vpack.c.b16 %v530, %v529
      %v552 = vpack.c.b16 %v532, %v531
      %v553 = vpack.c.b16 %v534, %v533
      %v554 = vpack.c.b16 %v536, %v535
      %v555 = vpack.c.b16 %v538, %v537
      %v556 = vpack.c.b16 %v540, %v539
      %573 = vmatprep.subr.bf16.mxu0 0
      %574 = vmatpush1.bf16.msra.mxu0 %v541
      %575 = vmatprep.subr.bf16.mxu0 0
      %576 = vmatpush1.bf16.msra.mxu0 %v542
      %577 = vmatprep.subr.bf16.mxu0 0
      %578 = vmatpush1.bf16.msra.mxu0 %v543
      %579 = vmatprep.subr.bf16.mxu0 0
      %580 = vmatpush1.bf16.msra.mxu0 %v544
      %581 = vmatprep.subr.bf16.mxu0 0
      %582 = vmatpush1.bf16.msra.mxu0 %v545
      %583 = vmatprep.subr.bf16.mxu0 0
      %584 = vmatpush1.bf16.msra.mxu0 %v546
      %585 = vmatprep.subr.bf16.mxu0 0
      %586 = vmatpush1.bf16.msra.mxu0 %v547
      %587 = vmatprep.subr.bf16.mxu0 0
      %588 = vmatpush1.bf16.msra.mxu0 %v548
      %589 = vmatprep.subr.bf16.mxu0 0
      %590 = vmatpush1.bf16.msra.mxu0 %v549
      %591 = vmatprep.subr.bf16.mxu0 0
      %592 = vmatpush1.bf16.msra.mxu0 %v550
      %593 = vmatprep.subr.bf16.mxu0 0
      %594 = vmatpush1.bf16.msra.mxu0 %v551
      %595 = vmatprep.subr.bf16.mxu0 0
      %596 = vmatpush1.bf16.msra.mxu0 %v552
      %597 = vmatprep.subr.bf16.mxu0 0
      %598 = vmatpush1.bf16.msra.mxu0 %v553
      %599 = vmatprep.subr.bf16.mxu0 0
      %600 = vmatpush1.bf16.msra.mxu0 %v554
      %601 = vmatprep.subr.bf16.mxu0 0
      %602 = vmatpush1.bf16.msra.mxu0 %v555
      %603 = vmatprep.subr.bf16.mxu0 0
      %604 = vmatpush1.bf16.msra.mxu0 %v556
      %605 = vmatprep.mubr.bf16.mxu0 %v437
      %606 = vmatmul.mubr.bf16.gmra.mrb[0].mxu0 %v436
      %v607 = vpop.f32.mrb[0].mxu0
      %v608 = vadd.f32 %v475, %v607
      %v609 = vpop.f32.mrb[0].mxu0
      %v610 = vpop.f32.mrb[0].mxu0
      %v611 = vpop.f32.mrb[0].mxu0
      %612 = vdwg.mxu0
      %v613 = vadd.f32 %v608, %v275
      %v614 = vld [vmem:[%s5] sm:$0x1]
      %v615 = vld [vmem:[%s6] sm:$0x1]
      %616 = vadd.xlane.f32.xlu0 %v613
      %v617 = vpop.xlane.xlu0 %616
      %v618 = vrcp.pop 128.0
      %v619 = vmul.f32 %v617, %v618
      %v620 = vsub.f32 %v613, %v619
      %v621 = vmul.f32 %v620, %v620
      %622 = vadd.xlane.f32.xlu0 %v621
      %v623 = vpop.xlane.xlu0 %622
      %v624 = vmul.f32 %v623, %v618
      %v625 = vadd.f32 %v624, 1e-12
      %v626 = vrsqrt.pop %v625
      %v627 = vmul.f32 %v620, %v626
      %v629 = vlaneseq
      %v630 = vshrl.u32 %v629, 7
      %v631 = vsub.s32 0, %v630
      %v632 = vrot.slane %v614, %v631
      %v634 = vmul.f32 %v627, %v632
      %v636 = vlaneseq
      %v637 = vshrl.u32 %v636, 7
      %v638 = vsub.s32 0, %v637
      %v639 = vrot.slane %v615, %v638
      %v641 = vadd.f32 %v634, %v639
      %642 = vst [vmem:[%s273] sm:$0xff] %v641
      %p643 = scmp.lt.s32.totalorder %s18, 1
      %s644 = scalar_select %p643, %s18, 1
      %s645 = smul.addr %s644, 8
      %s646 = scalar_lea.vmem %s7, %s645
      // Predicated region
      $region49: #{bert_forward.10} parent=47 // pred_check
        %p647 = pneg %p188
      $region50: #{bert_forward.10} parent=47 // pred_check_branch
        %649 = sbr.rel (%p647) target = $region52
      $region51: #{bert_forward.10} parent=47 // pred_region
        _
      $region52: #{bert_forward.10} parent=47 // pred_fallthru
        _
    $region48: #{bert_forward.10} parent=5 // pred_fallthru
      _
    %p650 = scmp.le.s32.totalorder 2, %s13
    // Predicated region
    $region53: #{bert_forward.10} parent=5 // pred_check
      %p651 = pneg %p650
    $region54: #{bert_forward.10} parent=5 // pred_check_branch
      %653 = sbr.rel (%p651) target = $region56
    $region55: #{bert_forward.10} parent=5 // pred_region
      %s654 = ssub.s32 %s13, 2
      // Predicated region
      $region57: #{bert_forward.10} parent=55 // pred_check
        %p655 = pneg %p194
      $region58: #{bert_forward.10} parent=55 // pred_check_branch
        %657 = sbr.rel (%p655) target = $region60
      $region59: #{bert_forward.10} parent=55 // pred_region
        %p658 = scmp.lt.s32.totalorder %s19, 1
        %s659 = scalar_select %p658, %s19, 1
        %s660 = smul.addr %s659, 8
        %s661 = scalar_lea.vmem %s7, %s660
      $region60: #{bert_forward.10} parent=55 // pred_fallthru
        _
    $region56: #{bert_forward.10} parent=5 // pred_fallthru
      _
  $region6: #{bert_forward.10} parent=0 // loop_footer
    %s17 = sadd.s32 1, %s13
  $region7: #{bert_forward.10} parent=0 // loop_footer_branch
    %12 = sbr.rel target = $region3
  $region8: #{bert_forward.10} parent=0 // loop_exit
    _

// kernel: bert_forward.9
$region0: #{bert_forward.9}
  #allocation0 [shape = 'u32[]', space=smem, size = 0x4, offset = 0x4, fixed_abs, tag = 'smem constant byte address 0x4 - core index']
  #allocation1 [shape = 'u32[144,128]{1,0:T(1,128)}', space=vmem, size = 0x12000, scoped, tag = 'internal scratch']
  %s0 = inlined_call_operand.vmem [shape: f32[16,384], index: 0, kind: input, shape index: {}]
  %s1 = inlined_call_operand.vmem [shape: f32[2,1,8], index: 1, kind: input, shape index: {}]
  %s2 = inlined_call_operand.vmem [shape: bf16[128,128], index: 2, kind: input, shape index: {}]
  %s3 = inlined_call_operand.vmem [shape: f32[1,128], index: 3, kind: input, shape index: {}]
  %s4 = inlined_call_operand.vmem [shape: f32[16,128], index: 4, kind: input, shape index: {}]
  %s5 = inlined_call_operand.vmem [shape: f32[1,128], index: 5, kind: input, shape index: {}]
  %s6 = inlined_call_operand.vmem [shape: f32[1,128], index: 6, kind: input, shape index: {}]
  %s7 = inlined_call_operand.vmem [shape: f32[16,128], index: 7, kind: output, shape index: {}]
  %s8 = sld [smem:[#allocation0]]
  $region61: #{bert_forward.9} parent=0
    _
  %s10 = ssub.s32 1, %s8
  %s11 = scalar_select 0, %s10, %s8
  loop: start=0, step=1, limit=4
  $region2: #{bert_forward.9} parent=0 // loop_pre_header
    _
  $region3: #{bert_forward.9} parent=0 // loop_header
    %s13 = sphi 0, %s17
    %p14 = scmp.ge.s32.totalorder %s13, 4
    %s23 = sphi 0, %s25
    %s26 = sphi 0, %s23
    %s27 = sphi 0, %s26
    %s43 = sphi 0, %s27
    %s49 = sphi 0, %s51
    %s52 = sphi 0, %s49
    %s53 = sphi 0, %s52
    %s69 = sphi 0, %s53
    %s73 = sphi 0, %s73
    %s75 = sphi 0, %s73
    %s76 = sphi 0, %s75
    %s90 = sphi 0, %s76
    %s94 = sphi 0, %s94
    %s96 = sphi 0, %s94
    %s97 = sphi 0, %s96
    %s111 = sphi 0, %s97
    %s117 = sphi 0, %s119
    %s120 = sphi 0, %s117
    %s121 = sphi 0, %s120
    %s137 = sphi 0, %s121
    %s141 = sphi 0, %s141
    %s143 = sphi 0, %s141
    %s144 = sphi 0, %s143
    %s158 = sphi 0, %s144
    %s162 = sphi 0, %s162
    %s164 = sphi 0, %s162
    %s165 = sphi 0, %s164
    %s179 = sphi 0, %s165
    %s185 = sphi 0, %s187
    %s188 = sphi 0, %s185
    %s189 = sphi 0, %s188
    %s205 = sphi 0, %s189
  $region4: #{bert_forward.9} parent=0 // loop_header_branch
    %16 = sbr.rel (%p14) target = $region8
  $region5: #{bert_forward.9} parent=0 // loop_body
    %s18 = ssub.s32 %s13, 1
    %s19 = ssub.s32 %s13, 2
    %s20 = sadd.s32 %s13, 1
    %s21 = ssub.s32 %s13, %s20
    %p22 = scmp.eq.s32.totalorder %s21, 0
    %s24 = sadd.s32 %s23, 1
    %s25 = scalar_select %p22, %s23, %s24
    %p28 = pneg %p22
    %p29 = scmp.eq.s32.totalorder %s13, 1
    %p30 = por %p28, %p29
    %p31 = scmp.ne.s32.totalorder %s23, %s26
    %p32 = scmp.eq.s32.totalorder %s13, 0
    %p33 = por %p31, %p32
    %p34 = scmp.ne.s32.totalorder %s23, %s26
    %p35 = scmp.eq.s32.totalorder %s18, 1
    %p36 = por %p34, %p35
    %p37 = scmp.ne.s32.totalorder %s26, %s27
    %p38 = scmp.eq.s32.totalorder %s18, 0
    %p39 = por %p37, %p38
    %p40 = scmp.ne.s32.totalorder %s26, %s27
    %p41 = scmp.eq.s32.totalorder %s19, 1
    %p42 = por %p40, %p41
    %p44 = scmp.ne.s32.totalorder %s27, %s43
    %p45 = scmp.eq.s32.totalorder %s19, 0
    %p46 = por %p44, %p45
    %s47 = ssub.s32 %s13, %s20
    %p48 = scmp.eq.s32.totalorder %s47, 0
    %s50 = sadd.s32 %s49, 1
    %s51 = scalar_select %p48, %s49, %s50
    %p54 = pneg %p48
    %p55 = scmp.eq.s32.totalorder %s13, 1
    %p56 = por %p54, %p55
    %p57 = scmp.ne.s32.totalorder %s49, %s52
    %p58 = scmp.eq.s32.totalorder %s13, 0
    %p59 = por %p57, %p58
    %p60 = scmp.ne.s32.totalorder %s49, %s52
    %p61 = scmp.eq.s32.totalorder %s18, 1
    %p62 = por %p60, %p61
    %p63 = scmp.ne.s32.totalorder %s52, %s53
    %p64 = scmp.eq.s32.totalorder %s18, 0
    %p65 = por %p63, %p64
    %p66 = scmp.ne.s32.totalorder %s52, %s53
    %p67 = scmp.eq.s32.totalorder %s19, 1
    %p68 = por %p66, %p67
    %p70 = scmp.ne.s32.totalorder %s53, %s69
    %p71 = scmp.eq.s32.totalorder %s19, 0
    %p72 = por %p70, %p71
    %s74 = sadd.s32 %s73, 1
    %p77 = scmp.eq.s32.totalorder %s13, 1
    %p78 = scmp.ne.s32.totalorder %s73, %s75
    %p79 = scmp.eq.s32.totalorder %s13, 0
    %p80 = por %p78, %p79
    %p81 = scmp.ne.s32.totalorder %s73, %s75
    %p82 = scmp.eq.s32.totalorder %s18, 1
    %p83 = por %p81, %p82
    %p84 = scmp.ne.s32.totalorder %s75, %s76
    %p85 = scmp.eq.s32.totalorder %s18, 0
    %p86 = por %p84, %p85
    %p87 = scmp.ne.s32.totalorder %s75, %s76
    %p88 = scmp.eq.s32.totalorder %s19, 1
    %p89 = por %p87, %p88
    %p91 = scmp.ne.s32.totalorder %s76, %s90
    %p92 = scmp.eq.s32.totalorder %s19, 0
    %p93 = por %p91, %p92
    %s95 = sadd.s32 %s94, 1
    %p98 = scmp.eq.s32.totalorder %s13, 1
    %p99 = scmp.ne.s32.totalorder %s94, %s96
    %p100 = scmp.eq.s32.totalorder %s13, 0
    %p101 = por %p99, %p100
    %p102 = scmp.ne.s32.totalorder %s94, %s96
    %p103 = scmp.eq.s32.totalorder %s18, 1
    %p104 = por %p102, %p103
    %p105 = scmp.ne.s32.totalorder %s96, %s97
    %p106 = scmp.eq.s32.totalorder %s18, 0
    %p107 = por %p105, %p106
    %p108 = scmp.ne.s32.totalorder %s96, %s97
    %p109 = scmp.eq.s32.totalorder %s19, 1
    %p110 = por %p108, %p109
    %p112 = scmp.ne.s32.totalorder %s97, %s111
    %p113 = scmp.eq.s32.totalorder %s19, 0
    %p114 = por %p112, %p113
    %s115 = ssub.s32 %s13, %s20
    %p116 = scmp.eq.s32.totalorder %s115, 0
    %s118 = sadd.s32 %s117, 1
    %s119 = scalar_select %p116, %s117, %s118
    %p122 = pneg %p116
    %p123 = scmp.eq.s32.totalorder %s13, 1
    %p124 = por %p122, %p123
    %p125 = scmp.ne.s32.totalorder %s117, %s120
    %p126 = scmp.eq.s32.totalorder %s13, 0
    %p127 = por %p125, %p126
    %p128 = scmp.ne.s32.totalorder %s117, %s120
    %p129 = scmp.eq.s32.totalorder %s18, 1
    %p130 = por %p128, %p129
    %p131 = scmp.ne.s32.totalorder %s120, %s121
    %p132 = scmp.eq.s32.totalorder %s18, 0
    %p133 = por %p131, %p132
    %p134 = scmp.ne.s32.totalorder %s120, %s121
    %p135 = scmp.eq.s32.totalorder %s19, 1
    %p136 = por %p134, %p135
    %p138 = scmp.ne.s32.totalorder %s121, %s137
    %p139 = scmp.eq.s32.totalorder %s19, 0
    %p140 = por %p138, %p139
    %s142 = sadd.s32 %s141, 1
    %p145 = scmp.eq.s32.totalorder %s13, 1
    %p146 = scmp.ne.s32.totalorder %s141, %s143
    %p147 = scmp.eq.s32.totalorder %s13, 0
    %p148 = por %p146, %p147
    %p149 = scmp.ne.s32.totalorder %s141, %s143
    %p150 = scmp.eq.s32.totalorder %s18, 1
    %p151 = por %p149, %p150
    %p152 = scmp.ne.s32.totalorder %s143, %s144
    %p153 = scmp.eq.s32.totalorder %s18, 0
    %p154 = por %p152, %p153
    %p155 = scmp.ne.s32.totalorder %s143, %s144
    %p156 = scmp.eq.s32.totalorder %s19, 1
    %p157 = por %p155, %p156
    %p159 = scmp.ne.s32.totalorder %s144, %s158
    %p160 = scmp.eq.s32.totalorder %s19, 0
    %p161 = por %p159, %p160
    %s163 = sadd.s32 %s162, 1
    %p166 = scmp.eq.s32.totalorder %s13, 1
    %p167 = scmp.ne.s32.totalorder %s162, %s164
    %p168 = scmp.eq.s32.totalorder %s13, 0
    %p169 = por %p167, %p168
    %p170 = scmp.ne.s32.totalorder %s162, %s164
    %p171 = scmp.eq.s32.totalorder %s18, 1
    %p172 = por %p170, %p171
    %p173 = scmp.ne.s32.totalorder %s164, %s165
    %p174 = scmp.eq.s32.totalorder %s18, 0
    %p175 = por %p173, %p174
    %p176 = scmp.ne.s32.totalorder %s164, %s165
    %p177 = scmp.eq.s32.totalorder %s19, 1
    %p178 = por %p176, %p177
    %p180 = scmp.ne.s32.totalorder %s165, %s179
    %p181 = scmp.eq.s32.totalorder %s19, 0
    %p182 = por %p180, %p181
    %s183 = ssub.s32 %s13, %s20
    %p184 = scmp.eq.s32.totalorder %s183, 0
    %s186 = sadd.s32 %s185, 1
    %s187 = scalar_select %p184, %s185, %s186
    %p190 = pneg %p184
    %p191 = scmp.eq.s32.totalorder %s13, 1
    %p192 = por %p190, %p191
    %p193 = scmp.ne.s32.totalorder %s185, %s188
    %p194 = scmp.eq.s32.totalorder %s13, 0
    %p195 = por %p193, %p194
    %p196 = scmp.ne.s32.totalorder %s185, %s188
    %p197 = scmp.eq.s32.totalorder %s18, 1
    %p198 = por %p196, %p197
    %p199 = scmp.ne.s32.totalorder %s188, %s189
    %p200 = scmp.eq.s32.totalorder %s18, 0
    %p201 = por %p199, %p200
    %p202 = scmp.ne.s32.totalorder %s188, %s189
    %p203 = scmp.eq.s32.totalorder %s19, 1
    %p204 = por %p202, %p203
    %p206 = scmp.ne.s32.totalorder %s189, %s205
    %p207 = scmp.eq.s32.totalorder %s19, 0
    %p208 = por %p206, %p207
    %p209 = scmp.le.s32.totalorder 1, %s13
    %p210 = scmp.lt.s32.totalorder %s13, 3
    %p211 = pnand %p209, %p210
    %p212 = pneg %p211
    // Predicated region
    $region9: #{bert_forward.9} parent=5 // pred_check
      _
    $region10: #{bert_forward.9} parent=5 // pred_check_branch
      %214 = sbr.rel (%p211) target = $region12
    $region11: #{bert_forward.9} parent=5 // pred_region
      %s215 = ssub.s32 %s13, 1
      // Predicated region
      $region13: #{bert_forward.9} parent=11 // pred_check
        %p216 = pneg %p86
      $region14: #{bert_forward.9} parent=11 // pred_check_branch
        %218 = sbr.rel (%p216) target = $region16
      $region15: #{bert_forward.9} parent=11 // pred_region
        _
      $region16: #{bert_forward.9} parent=11 // pred_fallthru
        _
      // Predicated region
      $region17: #{bert_forward.9} parent=11 // pred_check
        %p219 = pneg %p107
      $region18: #{bert_forward.9} parent=11 // pred_check_branch
        %221 = sbr.rel (%p219) target = $region20
      $region19: #{bert_forward.9} parent=11 // pred_region
        _
      $region20: #{bert_forward.9} parent=11 // pred_fallthru
        _
      // Predicated region
      $region21: #{bert_forward.9} parent=11 // pred_check
        %p222 = pneg %p154
      $region22: #{bert_forward.9} parent=11 // pred_check_branch
        %224 = sbr.rel (%p222) target = $region24
      $region23: #{bert_forward.9} parent=11 // pred_region
        _
      $region24: #{bert_forward.9} parent=11 // pred_fallthru
        _
      // Predicated region
      $region25: #{bert_forward.9} parent=11 // pred_check
        %p225 = pneg %p175
      $region26: #{bert_forward.9} parent=11 // pred_check_branch
        %227 = sbr.rel (%p225) target = $region28
      $region27: #{bert_forward.9} parent=11 // pred_region
        _
      $region28: #{bert_forward.9} parent=11 // pred_fallthru
        _
    $region12: #{bert_forward.9} parent=5 // pred_fallthru
      _
    %p228 = scmp.lt.s32.totalorder %s13, 2
    // Predicated region
    $region29: #{bert_forward.9} parent=5 // pred_check
      %p229 = pneg %p228
    $region30: #{bert_forward.9} parent=5 // pred_check_branch
      %231 = sbr.rel (%p229) target = $region32
    $region31: #{bert_forward.9} parent=5 // pred_region
      // Predicated region
      $region33: #{bert_forward.9} parent=31 // pred_check
        %p232 = pneg %p33
      $region34: #{bert_forward.9} parent=31 // pred_check_branch
        %234 = sbr.rel (%p232) target = $region36
      $region35: #{bert_forward.9} parent=31 // pred_region
        %p235 = scmp.lt.s32.totalorder %s13, 1
        %s236 = scalar_select %p235, %s13, 1
        %s237 = smul.addr %s236, 3
        %s238 = smul.addr %s237, 8
        %s239 = scalar_lea.vmem %s0, %s238
      $region36: #{bert_forward.9} parent=31 // pred_fallthru
        _
      // Predicated region
      $region37: #{bert_forward.9} parent=31 // pred_check
        %p240 = pneg %p59
      $region38: #{bert_forward.9} parent=31 // pred_check_branch
        %242 = sbr.rel (%p240) target = $region40
      $region39: #{bert_forward.9} parent=31 // pred_region
        %p243 = scmp.lt.s32.totalorder %s13, 1
        %s244 = scalar_select %p243, %s13, 1
        %s245 = scalar_lea.vmem %s1, %s244
      $region40: #{bert_forward.9} parent=31 // pred_fallthru
        _
      // Predicated region
      $region41: #{bert_forward.9} parent=31 // pred_check
        %p246 = pneg %p127
      $region42: #{bert_forward.9} parent=31 // pred_check_branch
        %248 = sbr.rel (%p246) target = $region44
      $region43: #{bert_forward.9} parent=31 // pred_region
        %p249 = scmp.lt.s32.totalorder %s13, 1
        %s250 = scalar_select %p249, %s13, 1
        %s251 = smul.addr %s250, 8
        %s252 = scalar_lea.vmem %s4, %s251
      $region44: #{bert_forward.9} parent=31 // pred_fallthru
        _
    $region32: #{bert_forward.9} parent=5 // pred_fallthru
      _
    %p253 = scmp.le.s32.totalorder 1, %s13
    %p254 = scmp.lt.s32.totalorder %s13, 3
    %p255 = pnand %p253, %p254
    %p256 = pneg %p255
    // Predicated region
    $region45: #{bert_forward.9} parent=5 // pred_check
      _
    $region46: #{bert_forward.9} parent=5 // pred_check_branch
      %258 = sbr.rel (%p255) target = $region48
    $region47: #{bert_forward.9} parent=5 // pred_region
      %s259 = ssub.s32 %s13, 1
      %p260 = scmp.lt.s32.totalorder %s18, 1
      %s261 = scalar_select %p260, %s18, 1
      %s262 = smul.addr %s261, 3
      %s263 = smul.addr %s262, 8
      %s264 = scalar_lea.vmem %s0, %s263
      %p265 = pneg %p39
      %p266 = pneg %p36
      %p267 = scmp.lt.s32.totalorder %s18, 1
      %s268 = scalar_select %p267, %s18, 1
      %s269 = scalar_lea.vmem %s1, %s268
      %p270 = pneg %p65
      %p271 = pneg %p62
      %p272 = pneg %p86
      %p273 = pneg %p83
      %p274 = pneg %p107
      %p275 = pneg %p104
      %p276 = scmp.lt.s32.totalorder %s18, 1
      %s277 = scalar_select %p276, %s18, 1
      %s278 = smul.addr %s277, 8
      %s279 = scalar_lea.vmem %s4, %s278
      %p280 = pneg %p133
      %p281 = pneg %p130
      %p282 = pneg %p154
      %p283 = pneg %p151
      %p284 = pneg %p175
      %p285 = pneg %p172
      %p286 = pneg %p201
      %p287 = pneg %p198
      %p288 = scmp.lt.s32.totalorder %s18, 1
      %s289 = scalar_select %p288, %s18, 1
      %s290 = smul.addr %s289, 8
      %s291 = scalar_lea.vmem %s7, %s290
      %p292 = scmp.lt.s32.totalorder %s18, 1
      %s293 = scalar_select %p292, %s18, 1
      %s294 = smul.addr %s293, 3
      %s295 = smul.addr %s294, 8
      %s296 = scalar_lea.vmem %s0, %s295
      %p297 = scmp.lt.s32.totalorder %s18, 1
      %s298 = scalar_select %p297, %s18, 1
      %s299 = scalar_lea.vmem %s1, %s298
      %p300 = scmp.lt.s32.totalorder %s18, 1
      %s301 = scalar_select %p300, %s18, 1
      %s302 = smul.addr %s301, 8
      %s303 = scalar_lea.vmem %s4, %s302
      %p304 = scmp.lt.s32.totalorder %s18, 1
      %s305 = scalar_select %p304, %s18, 1
      %s306 = smul.addr %s305, 8
      %s307 = scalar_lea.vmem %s7, %s306
      %v309 = vld [vmem:[%s296] sm:$0xff]
      %v310 = vld [vmem:[%s296 + $0x8] sm:$0xff]
      %v311 = vld [vmem:[%s296 + $0x10] sm:$0xff]
      %v312 = vld [vmem:[%s299] sm:$0x1]
      %v313 = vld [vmem:[%s3] sm:$0x1]
      %v314 = vld [vmem:[%s303] sm:$0xff]
      %v316 = vlaneseq
      %v317 = vshrl.u32 %v316, 7
      %v318 = vsub.s32 0, %v317
      %v319 = vrot.slane %v313, %v318
      %v321 = vadd.f32 %v319, %v314
      %v322 = vpack.c.bf16 %v309, %v309
      %v323 = vpack.c.bf16 %v310, %v310
      %v324 = vpack.c.bf16 %v311, %v311
      %v326 = vlaneseq
      %v327 = vshrl.u32 %v326, 7
      %v328 = vsub.s32 0, %v327
      %v329 = vrot.slane %v312, %v328
      %vm331 = vcmask 261120
      %v333 = vsel %vm331, %v322, 0
      %v336 = vsel %vm331, %v323, 0
      %338 = vmatprep.subr.bf16.mxu0 0
      %339 = vmatpush1.bf16.xpose.msra.mxu0 %v336
      %340 = vmatprep.subr.bf16.mxu0 0
      %341 = vmatpush1.bf16.xpose.msra.mxu0 0
      %342 = vmatprep.subr.bf16.mxu0 0
      %343 = vmatpush1.bf16.xpose.msra.mxu0 0
      %344 = vmatprep.subr.bf16.mxu0 0
      %345 = vmatpush1.bf16.xpose.msra.mxu0 0
      %346 = vmatprep.subr.bf16.mxu0 0
      %347 = vmatpush1.bf16.xpose.msra.mxu0 0
      %348 = vmatprep.subr.bf16.mxu0 0
      %349 = vmatpush1.bf16.xpose.msra.mxu0 0
      %350 = vmatprep.subr.bf16.mxu0 0
      %351 = vmatpush1.bf16.xpose.msra.mxu0 0
      %352 = vmatprep.subr.bf16.mxu0 0
      %353 = vmatpush1.bf16.xpose.msra.mxu0 0
      %354 = vmatprep.subr.bf16.mxu0 0
      %355 = vmatpush1.bf16.xpose.msra.mxu0 0
      %356 = vmatprep.subr.bf16.mxu0 0
      %357 = vmatpush1.bf16.xpose.msra.mxu0 0
      %358 = vmatprep.subr.bf16.mxu0 0
      %359 = vmatpush1.bf16.xpose.msra.mxu0 0
      %360 = vmatprep.subr.bf16.mxu0 0
      %361 = vmatpush1.bf16.xpose.msra.mxu0 0
      %362 = vmatprep.subr.bf16.mxu0 0
      %363 = vmatpush1.bf16.xpose.msra.mxu0 0
      %364 = vmatprep.subr.bf16.mxu0 0
      %365 = vmatpush1.bf16.xpose.msra.mxu0 0
      %366 = vmatprep.subr.bf16.mxu0 0
      %367 = vmatpush1.bf16.xpose.msra.mxu0 0
      %368 = vmatprep.subr.bf16.mxu0 0
      %369 = vmatpush1.bf16.xpose.msra.mxu0 0
      %370 = vmatprep.mubr.bf16.mxu0 0
      %371 = vmatmul.mubr.bf16.gmra.mrb[0].mxu0 %v333
      %v372 = vpop.f32.mrb[0].mxu0
      %v373 = vadd.f32 %v329, %v372
      %v374 = vpop.f32.mrb[0].mxu0
      %v375 = vpop.f32.mrb[0].mxu0
      %v376 = vpop.f32.mrb[0].mxu0
      %377 = vdwg.mxu0
      %vm378 = vcmask 64512
      %v379 = vsel %vm378, %v373, -inf
      %380 = vmax.xlane.f32.xlu0 %v379
      %v381 = vpop.xlane.xlu0 %380
      %v382 = vsub.f32 %v373, %v381
      %v383 = vmul.f32 %v382, 1.442695
      %v384 = vpow.pop %v383
      %v385 = vsel %vm378, %v384, 0.0
      %386 = vadd.xlane.f32.xlu0 %v385
      %v387 = vpop.xlane.xlu0 %386
      %v388 = vrcp.pop %v387
      %v389 = vmul.f32 %v384, %v388
      %v390 = vpack.c.bf16 %v389, %v389
      %v392 = vsel %vm378, %v390, 0
      %vm394 = vcmask 1043456
      %v396 = vsel %vm394, %v324, 0
      %398 = vmatprep.subr.bf16.mxu0 0
      %399 = vmatpush1.bf16.msra.mxu0 %v396
      %400 = vmatprep.subr.bf16.mxu0 0
      %401 = vmatpush1.bf16.msra.mxu0 0
      %402 = vmatprep.subr.bf16.mxu0 0
      %403 = vmatpush1.bf16.msra.mxu0 0
      %404 = vmatprep.subr.bf16.mxu0 0
      %405 = vmatpush1.bf16.msra.mxu0 0
      %406 = vmatprep.subr.bf16.mxu0 0
      %407 = vmatpush1.bf16.msra.mxu0 0
      %408 = vmatprep.subr.bf16.mxu0 0
      %409 = vmatpush1.bf16.msra.mxu0 0
      %410 = vmatprep.subr.bf16.mxu0 0
      %411 = vmatpush1.bf16.msra.mxu0 0
      %412 = vmatprep.subr.bf16.mxu0 0
      %413 = vmatpush1.bf16.msra.mxu0 0
      %414 = vmatprep.subr.bf16.mxu0 0
      %415 = vmatpush1.bf16.msra.mxu0 0
      %416 = vmatprep.subr.bf16.mxu0 0
      %417 = vmatpush1.bf16.msra.mxu0 0
      %418 = vmatprep.subr.bf16.mxu0 0
      %419 = vmatpush1.bf16.msra.mxu0 0
      %420 = vmatprep.subr.bf16.mxu0 0
      %421 = vmatpush1.bf16.msra.mxu0 0
      %422 = vmatprep.subr.bf16.mxu0 0
      %423 = vmatpush1.bf16.msra.mxu0 0
      %424 = vmatprep.subr.bf16.mxu0 0
      %425 = vmatpush1.bf16.msra.mxu0 0
      %426 = vmatprep.subr.bf16.mxu0 0
      %427 = vmatpush1.bf16.msra.mxu0 0
      %428 = vmatprep.subr.bf16.mxu0 0
      %429 = vmatpush1.bf16.msra.mxu0 0
      %430 = vmatprep.mubr.bf16.mxu0 0
      %431 = vmatmul.mubr.bf16.gmra.mrb[0].mxu0 %v392
      %v432 = vpop.f32.mrb[0].mxu0
      %v433 = vadd.f32 0.0, %v432
      %v434 = vpop.f32.mrb[0].mxu0
      %v435 = vpop.f32.mrb[0].mxu0
      %v436 = vpop.f32.mrb[0].mxu0
      %437 = vdwg.mxu0
      %v438 = vpack.c.bf16 %v433, %v433
      %v439 = vld [vmem:[%s2] sm:$0xf]
      %v440 = vld [vmem:[%s2 + $0x4] sm:$0xf]
      %v441 = vld [vmem:[%s2 + $0x8] sm:$0xf]
      %v442 = vld [vmem:[%s2 + $0xc] sm:$0xf]
      %v447 = vunpack.c.l.b16 %v439
      %v448 = vunpack.c.l.b16 %v440
      %v449 = vunpack.c.l.b16 %v441
      %v450 = vunpack.c.l.b16 %v442
      %v451 = vpack.c.b16 %v448, %v447
      %v452 = vpack.c.b16 %v450, %v449
      %v456 = vsel %vm331, %v438, 0
      %458 = vmatprep.subr.bf16.mxu0 0
      %459 = vmatpush1.bf16.msra.mxu0 %v451
      %460 = vmatprep.subr.bf16.mxu0 0
      %461 = vmatpush1.bf16.msra.mxu0 %v452
      %462 = vmatprep.subr.bf16.mxu0 0
      %463 = vmatpush1.bf16.msra.mxu0 0
      %464 = vmatprep.subr.bf16.mxu0 0
      %465 = vmatpush1.bf16.msra.mxu0 0
      %466 = vmatprep.subr.bf16.mxu0 0
      %467 = vmatpush1.bf16.msra.mxu0 0
      %468 = vmatprep.subr.bf16.mxu0 0
      %469 = vmatpush1.bf16.msra.mxu0 0
      %470 = vmatprep.subr.bf16.mxu0 0
      %471 = vmatpush1.bf16.msra.mxu0 0
      %472 = vmatprep.subr.bf16.mxu0 0
      %473 = vmatpush1.bf16.msra.mxu0 0
      %474 = vmatprep.subr.bf16.mxu0 0
      %475 = vmatpush1.bf16.msra.mxu0 0
      %476 = vmatprep.subr.bf16.mxu0 0
      %477 = vmatpush1.bf16.msra.mxu0 0
      %478 = vmatprep.subr.bf16.mxu0 0
      %479 = vmatpush1.bf16.msra.mxu0 0
      %480 = vmatprep.subr.bf16.mxu0 0
      %481 = vmatpush1.bf16.msra.mxu0 0
      %482 = vmatprep.subr.bf16.mxu0 0
      %483 = vmatpush1.bf16.msra.mxu0 0
      %484 = vmatprep.subr.bf16.mxu0 0
      %485 = vmatpush1.bf16.msra.mxu0 0
      %486 = vmatprep.subr.bf16.mxu0 0
      %487 = vmatpush1.bf16.msra.mxu0 0
      %488 = vmatprep.subr.bf16.mxu0 0
      %489 = vmatpush1.bf16.msra.mxu0 0
      %490 = vmatprep.mubr.bf16.mxu0 0
      %491 = vmatmul.mubr.bf16.gmra.mrb[0].mxu0 %v456
      %v492 = vpop.f32.mrb[0].mxu0
      %v493 = vadd.f32 0.0, %v492
      %v494 = vpop.f32.mrb[0].mxu0
      %v495 = vpop.f32.mrb[0].mxu0
      %v496 = vpop.f32.mrb[0].mxu0
      %497 = vdwg.mxu0
      %v498 = vadd.f32 %v321, %v493
      %500 = vrot.lane.b32.xlu0 %v322, 96
      %v501 = vpop.permute.xlu0 %500
      %503 = vrot.lane.b32.xlu0 %v323, 96
      %v504 = vpop.permute.xlu0 %503
      %v506 = vsel %vm331, %v501, 0
      %v509 = vsel %vm331, %v504, 0
      %511 = vmatprep.subr.bf16.mxu0 0
      %512 = vmatpush1.bf16.xpose.msra.mxu0 %v509
      %513 = vmatprep.subr.bf16.mxu0 0
      %514 = vmatpush1.bf16.xpose.msra.mxu0 0
      %515 = vmatprep.subr.bf16.mxu0 0
      %516 = vmatpush1.bf16.xpose.msra.mxu0 0
      %517 = vmatprep.subr.bf16.mxu0 0
      %518 = vmatpush1.bf16.xpose.msra.mxu0 0
      %519 = vmatprep.subr.bf16.mxu0 0
      %520 = vmatpush1.bf16.xpose.msra.mxu0 0
      %521 = vmatprep.subr.bf16.mxu0 0
      %522 = vmatpush1.bf16.xpose.msra.mxu0 0
      %523 = vmatprep.subr.bf16.mxu0 0
      %524 = vmatpush1.bf16.xpose.msra.mxu0 0
      %525 = vmatprep.subr.bf16.mxu0 0
      %526 = vmatpush1.bf16.xpose.msra.mxu0 0
      %527 = vmatprep.subr.bf16.mxu0 0
      %528 = vmatpush1.bf16.xpose.msra.mxu0 0
      %529 = vmatprep.subr.bf16.mxu0 0
      %530 = vmatpush1.bf16.xpose.msra.mxu0 0
      %531 = vmatprep.subr.bf16.mxu0 0
      %532 = vmatpush1.bf16.xpose.msra.mxu0 0
      %533 = vmatprep.subr.bf16.mxu0 0
      %534 = vmatpush1.bf16.xpose.msra.mxu0 0
      %535 = vmatprep.subr.bf16.mxu0 0
      %536 = vmatpush1.bf16.xpose.msra.mxu0 0
      %537 = vmatprep.subr.bf16.mxu0 0
      %538 = vmatpush1.bf16.xpose.msra.mxu0 0
      %539 = vmatprep.subr.bf16.mxu0 0
      %540 = vmatpush1.bf16.xpose.msra.mxu0 0
      %541 = vmatprep.subr.bf16.mxu0 0
      %542 = vmatpush1.bf16.xpose.msra.mxu0 0
      %543 = vmatprep.mubr.bf16.mxu0 0
      %544 = vmatmul.mubr.bf16.gmra.mrb[0].mxu0 %v506
      %v545 = vpop.f32.mrb[0].mxu0
      %v546 = vadd.f32 %v329, %v545
      %v547 = vpop.f32.mrb[0].mxu0
      %v548 = vpop.f32.mrb[0].mxu0
      %v549 = vpop.f32.mrb[0].mxu0
      %550 = vdwg.mxu0
      %v551 = vsel %vm378, %v546, -inf
      %552 = vmax.xlane.f32.xlu0 %v551
      %v553 = vpop.xlane.xlu0 %552
      %v554 = vsub.f32 %v546, %v553
      %v555 = vmul.f32 %v554, 1.442695
      %v556 = vpow.pop %v555
      %v557 = vsel %vm378, %v556, 0.0
      %558 = vadd.xlane.f32.xlu0 %v557
      %v559 = vpop.xlane.xlu0 %558
      %v560 = vrcp.pop %v559
      %v561 = vmul.f32 %v556, %v560
      %v562 = vpack.c.bf16 %v561, %v561
      %564 = vrot.lane.b32.xlu0 %v324, 96
      %v565 = vpop.permute.xlu0 %564
      %v567 = vsel %vm378, %v562, 0
      %v570 = vsel %vm394, %v565, 0
      %572 = vmatprep.subr.bf16.mxu0 0
      %573 = vmatpush1.bf16.msra.mxu0 %v570
      %574 = vmatprep.subr.bf16.mxu0 0
      %575 = vmatpush1.bf16.msra.mxu0 0
      %576 = vmatprep.subr.bf16.mxu0 0
      %577 = vmatpush1.bf16.msra.mxu0 0
      %578 = vmatprep.subr.bf16.mxu0 0
      %579 = vmatpush1.bf16.msra.mxu0 0
      %580 = vmatprep.subr.bf16.mxu0 0
      %581 = vmatpush1.bf16.msra.mxu0 0
      %582 = vmatprep.subr.bf16.mxu0 0
      %583 = vmatpush1.bf16.msra.mxu0 0
      %584 = vmatprep.subr.bf16.mxu0 0
      %585 = vmatpush1.bf16.msra.mxu0 0
      %586 = vmatprep.subr.bf16.mxu0 0
      %587 = vmatpush1.bf16.msra.mxu0 0
      %588 = vmatprep.subr.bf16.mxu0 0
      %589 = vmatpush1.bf16.msra.mxu0 0
      %590 = vmatprep.subr.bf16.mxu0 0
      %591 = vmatpush1.bf16.msra.mxu0 0
      %592 = vmatprep.subr.bf16.mxu0 0
      %593 = vmatpush1.bf16.msra.mxu0 0
      %594 = vmatprep.subr.bf16.mxu0 0
      %595 = vmatpush1.bf16.msra.mxu0 0
      %596 = vmatprep.subr.bf16.mxu0 0
      %597 = vmatpush1.bf16.msra.mxu0 0
      %598 = vmatprep.subr.bf16.mxu0 0
      %599 = vmatpush1.bf16.msra.mxu0 0
      %600 = vmatprep.subr.bf16.mxu0 0
      %601 = vmatpush1.bf16.msra.mxu0 0
      %602 = vmatprep.subr.bf16.mxu0 0
      %603 = vmatpush1.bf16.msra.mxu0 0
      %604 = vmatprep.mubr.bf16.mxu0 0
      %605 = vmatmul.mubr.bf16.gmra.mrb[0].mxu0 %v567
      %v606 = vpop.f32.mrb[0].mxu0
      %v607 = vadd.f32 0.0, %v606
      %v608 = vpop.f32.mrb[0].mxu0
      %v609 = vpop.f32.mrb[0].mxu0
      %v610 = vpop.f32.mrb[0].mxu0
      %611 = vdwg.mxu0
      %v612 = vpack.c.bf16 %v607, %v607
      %v613 = vld [vmem:[%s2 + $0x10] sm:$0xf]
      %v614 = vld [vmem:[%s2 + $0x14] sm:$0xf]
      %v615 = vld [vmem:[%s2 + $0x18] sm:$0xf]
      %v616 = vld [vmem:[%s2 + $0x1c] sm:$0xf]
      %v621 = vunpack.c.l.b16 %v613
      %v622 = vunpack.c.l.b16 %v614
      %v623 = vunpack.c.l.b16 %v615
      %v624 = vunpack.c.l.b16 %v616
      %v625 = vpack.c.b16 %v622, %v621
      %v626 = vpack.c.b16 %v624, %v623
      %v630 = vsel %vm331, %v612, 0
      %632 = vmatprep.subr.bf16.mxu0 0
      %633 = vmatpush1.bf16.msra.mxu0 %v625
      %634 = vmatprep.subr.bf16.mxu0 0
      %635 = vmatpush1.bf16.msra.mxu0 %v626
      %636 = vmatprep.subr.bf16.mxu0 0
      %637 = vmatpush1.bf16.msra.mxu0 0
      %638 = vmatprep.subr.bf16.mxu0 0
      %639 = vmatpush1.bf16.msra.mxu0 0
      %640 = vmatprep.subr.bf16.mxu0 0
      %641 = vmatpush1.bf16.msra.mxu0 0
      %642 = vmatprep.subr.bf16.mxu0 0
      %643 = vmatpush1.bf16.msra.mxu0 0
      %644 = vmatprep.subr.bf16.mxu0 0
      %645 = vmatpush1.bf16.msra.mxu0 0
      %646 = vmatprep.subr.bf16.mxu0 0
      %647 = vmatpush1.bf16.msra.mxu0 0
      %648 = vmatprep.subr.bf16.mxu0 0
      %649 = vmatpush1.bf16.msra.mxu0 0
      %650 = vmatprep.subr.bf16.mxu0 0
      %651 = vmatpush1.bf16.msra.mxu0 0
      %652 = vmatprep.subr.bf16.mxu0 0
      %653 = vmatpush1.bf16.msra.mxu0 0
      %654 = vmatprep.subr.bf16.mxu0 0
      %655 = vmatpush1.bf16.msra.mxu0 0
      %656 = vmatprep.subr.bf16.mxu0 0
      %657 = vmatpush1.bf16.msra.mxu0 0
      %658 = vmatprep.subr.bf16.mxu0 0
      %659 = vmatpush1.bf16.msra.mxu0 0
      %660 = vmatprep.subr.bf16.mxu0 0
      %661 = vmatpush1.bf16.msra.mxu0 0
      %662 = vmatprep.subr.bf16.mxu0 0
      %663 = vmatpush1.bf16.msra.mxu0 0
      %664 = vmatprep.mubr.bf16.mxu0 0
      %665 = vmatmul.mubr.bf16.gmra.mrb[0].mxu0 %v630
      %v666 = vpop.f32.mrb[0].mxu0
      %v667 = vadd.f32 0.0, %v666
      %v668 = vpop.f32.mrb[0].mxu0
      %v669 = vpop.f32.mrb[0].mxu0
      %v670 = vpop.f32.mrb[0].mxu0
      %671 = vdwg.mxu0
      %v672 = vadd.f32 %v498, %v667
      %673 = vrot.lane.b32.xlu0 %v322, 64
      %v674 = vpop.permute.xlu0 %673
      %675 = vrot.lane.b32.xlu0 %v323, 64
      %v676 = vpop.permute.xlu0 %675
      %v678 = vsel %vm331, %v674, 0
      %v681 = vsel %vm331, %v676, 0
      %683 = vmatprep.subr.bf16.mxu0 0
      %684 = vmatpush1.bf16.xpose.msra.mxu0 %v681
      %685 = vmatprep.subr.bf16.mxu0 0
      %686 = vmatpush1.bf16.xpose.msra.mxu0 0
      %687 = vmatprep.subr.bf16.mxu0 0
      %688 = vmatpush1.bf16.xpose.msra.mxu0 0
      %689 = vmatprep.subr.bf16.mxu0 0
      %690 = vmatpush1.bf16.xpose.msra.mxu0 0
      %691 = vmatprep.subr.bf16.mxu0 0
      %692 = vmatpush1.bf16.xpose.msra.mxu0 0
      %693 = vmatprep.subr.bf16.mxu0 0
      %694 = vmatpush1.bf16.xpose.msra.mxu0 0
      %695 = vmatprep.subr.bf16.mxu0 0
      %696 = vmatpush1.bf16.xpose.msra.mxu0 0
      %697 = vmatprep.subr.bf16.mxu0 0
      %698 = vmatpush1.bf16.xpose.msra.mxu0 0
      %699 = vmatprep.subr.bf16.mxu0 0
      %700 = vmatpush1.bf16.xpose.msra.mxu0 0
      %701 = vmatprep.subr.bf16.mxu0 0
      %702 = vmatpush1.bf16.xpose.msra.mxu0 0
      %703 = vmatprep.subr.bf16.mxu0 0
      %704 = vmatpush1.bf16.xpose.msra.mxu0 0
      %705 = vmatprep.subr.bf16.mxu0 0
      %706 = vmatpush1.bf16.xpose.msra.mxu0 0
      %707 = vmatprep.subr.bf16.mxu0 0
      %708 = vmatpush1.bf16.xpose.msra.mxu0 0
      %709 = vmatprep.subr.bf16.mxu0 0
      %710 = vmatpush1.bf16.xpose.msra.mxu0 0
      %711 = vmatprep.subr.bf16.mxu0 0
      %712 = vmatpush1.bf16.xpose.msra.mxu0 0
      %713 = vmatprep.subr.bf16.mxu0 0
      %714 = vmatpush1.bf16.xpose.msra.mxu0 0
      %715 = vmatprep.mubr.bf16.mxu0 0
      %716 = vmatmul.mubr.bf16.gmra.mrb[0].mxu0 %v678
      %v717 = vpop.f32.mrb[0].mxu0
      %v718 = vadd.f32 %v329, %v717
      %v719 = vpop.f32.mrb[0].mxu0
      %v720 = vpop.f32.mrb[0].mxu0
      %v721 = vpop.f32.mrb[0].mxu0
      %722 = vdwg.mxu0
      %v723 = vsel %vm378, %v718, -inf
      %724 = vmax.xlane.f32.xlu0 %v723
      %v725 = vpop.xlane.xlu0 %724
      %v726 = vsub.f32 %v718, %v725
      %v727 = vmul.f32 %v726, 1.442695
      %v728 = vpow.pop %v727
      %v729 = vsel %vm378, %v728, 0.0
      %730 = vadd.xlane.f32.xlu0 %v729
      %v731 = vpop.xlane.xlu0 %730
      %v732 = vrcp.pop %v731
      %v733 = vmul.f32 %v728, %v732
      %v734 = vpack.c.bf16 %v733, %v733
      %735 = vrot.lane.b32.xlu0 %v324, 64
      %v736 = vpop.permute.xlu0 %735
      %v738 = vsel %vm378, %v734, 0
      %v741 = vsel %vm394, %v736, 0
      %743 = vmatprep.subr.bf16.mxu0 0
      %744 = vmatpush1.bf16.msra.mxu0 %v741
      %745 = vmatprep.subr.bf16.mxu0 0
      %746 = vmatpush1.bf16.msra.mxu0 0
      %747 = vmatprep.subr.bf16.mxu0 0
      %748 = vmatpush1.bf16.msra.mxu0 0
      %749 = vmatprep.subr.bf16.mxu0 0
      %750 = vmatpush1.bf16.msra.mxu0 0
      %751 = vmatprep.subr.bf16.mxu0 0
      %752 = vmatpush1.bf16.msra.mxu0 0
      %753 = vmatprep.subr.bf16.mxu0 0
      %754 = vmatpush1.bf16.msra.mxu0 0
      %755 = vmatprep.subr.bf16.mxu0 0
      %756 = vmatpush1.bf16.msra.mxu0 0
      %757 = vmatprep.subr.bf16.mxu0 0
      %758 = vmatpush1.bf16.msra.mxu0 0
      %759 = vmatprep.subr.bf16.mxu0 0
      %760 = vmatpush1.bf16.msra.mxu0 0
      %761 = vmatprep.subr.bf16.mxu0 0
      %762 = vmatpush1.bf16.msra.mxu0 0
      %763 = vmatprep.subr.bf16.mxu0 0
      %764 = vmatpush1.bf16.msra.mxu0 0
      %765 = vmatprep.subr.bf16.mxu0 0
      %766 = vmatpush1.bf16.msra.mxu0 0
      %767 = vmatprep.subr.bf16.mxu0 0
      %768 = vmatpush1.bf16.msra.mxu0 0
      %769 = vmatprep.subr.bf16.mxu0 0
      %770 = vmatpush1.bf16.msra.mxu0 0
      %771 = vmatprep.subr.bf16.mxu0 0
      %772 = vmatpush1.bf16.msra.mxu0 0
      %773 = vmatprep.subr.bf16.mxu0 0
      %774 = vmatpush1.bf16.msra.mxu0 0
      %775 = vmatprep.mubr.bf16.mxu0 0
      %776 = vmatmul.mubr.bf16.gmra.mrb[0].mxu0 %v738
      %v777 = vpop.f32.mrb[0].mxu0
      %v778 = vadd.f32 0.0, %v777
      %v779 = vpop.f32.mrb[0].mxu0
      %v780 = vpop.f32.mrb[0].mxu0
      %v781 = vpop.f32.mrb[0].mxu0
      %782 = vdwg.mxu0
      %v783 = vpack.c.bf16 %v778, %v778
      %v784 = vld [vmem:[%s2 + $0x20] sm:$0xf]
      %v785 = vld [vmem:[%s2 + $0x24] sm:$0xf]
      %v786 = vld [vmem:[%s2 + $0x28] sm:$0xf]
      %v787 = vld [vmem:[%s2 + $0x2c] sm:$0xf]
      %v792 = vunpack.c.l.b16 %v784
      %v793 = vunpack.c.l.b16 %v785
      %v794 = vunpack.c.l.b16 %v786
      %v795 = vunpack.c.l.b16 %v787
      %v796 = vpack.c.b16 %v793, %v792
      %v797 = vpack.c.b16 %v795, %v794
      %v801 = vsel %vm331, %v783, 0
      %803 = vmatprep.subr.bf16.mxu0 0
      %804 = vmatpush1.bf16.msra.mxu0 %v796
      %805 = vmatprep.subr.bf16.mxu0 0
      %806 = vmatpush1.bf16.msra.mxu0 %v797
      %807 = vmatprep.subr.bf16.mxu0 0
      %808 = vmatpush1.bf16.msra.mxu0 0
      %809 = vmatprep.subr.bf16.mxu0 0
      %810 = vmatpush1.bf16.msra.mxu0 0
      %811 = vmatprep.subr.bf16.mxu0 0
      %812 = vmatpush1.bf16.msra.mxu0 0
      %813 = vmatprep.subr.bf16.mxu0 0
      %814 = vmatpush1.bf16.msra.mxu0 0
      %815 = vmatprep.subr.bf16.mxu0 0
      %816 = vmatpush1.bf16.msra.mxu0 0
      %817 = vmatprep.subr.bf16.mxu0 0
      %818 = vmatpush1.bf16.msra.mxu0 0
      %819 = vmatprep.subr.bf16.mxu0 0
      %820 = vmatpush1.bf16.msra.mxu0 0
      %821 = vmatprep.subr.bf16.mxu0 0
      %822 = vmatpush1.bf16.msra.mxu0 0
      %823 = vmatprep.subr.bf16.mxu0 0
      %824 = vmatpush1.bf16.msra.mxu0 0
      %825 = vmatprep.subr.bf16.mxu0 0
      %826 = vmatpush1.bf16.msra.mxu0 0
      %827 = vmatprep.subr.bf16.mxu0 0
      %828 = vmatpush1.bf16.msra.mxu0 0
      %829 = vmatprep.subr.bf16.mxu0 0
      %830 = vmatpush1.bf16.msra.mxu0 0
      %831 = vmatprep.subr.bf16.mxu0 0
      %832 = vmatpush1.bf16.msra.mxu0 0
      %833 = vmatprep.subr.bf16.mxu0 0
      %834 = vmatpush1.bf16.msra.mxu0 0
      %835 = vmatprep.mubr.bf16.mxu0 0
      %836 = vmatmul.mubr.bf16.gmra.mrb[0].mxu0 %v801
      %v837 = vpop.f32.mrb[0].mxu0
      %v838 = vadd.f32 0.0, %v837
      %v839 = vpop.f32.mrb[0].mxu0
      %v840 = vpop.f32.mrb[0].mxu0
      %v841 = vpop.f32.mrb[0].mxu0
      %842 = vdwg.mxu0
      %v843 = vadd.f32 %v672, %v838
      %844 = vrot.lane.b32.xlu0 %v322, 32
      %v845 = vpop.permute.xlu0 %844
      %846 = vrot.lane.b32.xlu0 %v323, 32
      %v847 = vpop.permute.xlu0 %846
      %v849 = vsel %vm331, %v845, 0
      %v852 = vsel %vm331, %v847, 0
      %854 = vmatprep.subr.bf16.mxu0 0
      %855 = vmatpush1.bf16.xpose.msra.mxu0 %v852
      %856 = vmatprep.subr.bf16.mxu0 0
      %857 = vmatpush1.bf16.xpose.msra.mxu0 0
      %858 = vmatprep.subr.bf16.mxu0 0
      %859 = vmatpush1.bf16.xpose.msra.mxu0 0
      %860 = vmatprep.subr.bf16.mxu0 0
      %861 = vmatpush1.bf16.xpose.msra.mxu0 0
      %862 = vmatprep.subr.bf16.mxu0 0
      %863 = vmatpush1.bf16.xpose.msra.mxu0 0
      %864 = vmatprep.subr.bf16.mxu0 0
      %865 = vmatpush1.bf16.xpose.msra.mxu0 0
      %866 = vmatprep.subr.bf16.mxu0 0
      %867 = vmatpush1.bf16.xpose.msra.mxu0 0
      %868 = vmatprep.subr.bf16.mxu0 0
      %869 = vmatpush1.bf16.xpose.msra.mxu0 0
      %870 = vmatprep.subr.bf16.mxu0 0
      %871 = vmatpush1.bf16.xpose.msra.mxu0 0
      %872 = vmatprep.subr.bf16.mxu0 0
      %873 = vmatpush1.bf16.xpose.msra.mxu0 0
      %874 = vmatprep.subr.bf16.mxu0 0
      %875 = vmatpush1.bf16.xpose.msra.mxu0 0
      %876 = vmatprep.subr.bf16.mxu0 0
      %877 = vmatpush1.bf16.xpose.msra.mxu0 0
      %878 = vmatprep.subr.bf16.mxu0 0
      %879 = vmatpush1.bf16.xpose.msra.mxu0 0
      %880 = vmatprep.subr.bf16.mxu0 0
      %881 = vmatpush1.bf16.xpose.msra.mxu0 0
      %882 = vmatprep.subr.bf16.mxu0 0
      %883 = vmatpush1.bf16.xpose.msra.mxu0 0
      %884 = vmatprep.subr.bf16.mxu0 0
      %885 = vmatpush1.bf16.xpose.msra.mxu0 0
      %886 = vmatprep.mubr.bf16.mxu0 0
      %887 = vmatmul.mubr.bf16.gmra.mrb[0].mxu0 %v849
      %v888 = vpop.f32.mrb[0].mxu0
      %v889 = vadd.f32 %v329, %v888
      %v890 = vpop.f32.mrb[0].mxu0
      %v891 = vpop.f32.mrb[0].mxu0
      %v892 = vpop.f32.mrb[0].mxu0
      %893 = vdwg.mxu0
      %v894 = vsel %vm378, %v889, -inf
      %895 = vmax.xlane.f32.xlu0 %v894
      %v896 = vpop.xlane.xlu0 %895
      %v897 = vsub.f32 %v889, %v896
      %v898 = vmul.f32 %v897, 1.442695
      %v899 = vpow.pop %v898
      %v900 = vsel %vm378, %v899, 0.0
      %901 = vadd.xlane.f32.xlu0 %v900
      %v902 = vpop.xlane.xlu0 %901
      %v903 = vrcp.pop %v902
      %v904 = vmul.f32 %v899, %v903
      %v905 = vpack.c.bf16 %v904, %v904
      %906 = vrot.lane.b32.xlu0 %v324, 32
      %v907 = vpop.permute.xlu0 %906
      %v909 = vsel %vm378, %v905, 0
      %v912 = vsel %vm394, %v907, 0
      %914 = vmatprep.subr.bf16.mxu0 0
      %915 = vmatpush1.bf16.msra.mxu0 %v912
      %916 = vmatprep.subr.bf16.mxu0 0
      %917 = vmatpush1.bf16.msra.mxu0 0
      %918 = vmatprep.subr.bf16.mxu0 0
      %919 = vmatpush1.bf16.msra.mxu0 0
      %920 = vmatprep.subr.bf16.mxu0 0
      %921 = vmatpush1.bf16.msra.mxu0 0
      %922 = vmatprep.subr.bf16.mxu0 0
      %923 = vmatpush1.bf16.msra.mxu0 0
      %924 = vmatprep.subr.bf16.mxu0 0
      %925 = vmatpush1.bf16.msra.mxu0 0
      %926 = vmatprep.subr.bf16.mxu0 0
      %927 = vmatpush1.bf16.msra.mxu0 0
      %928 = vmatprep.subr.bf16.mxu0 0
      %929 = vmatpush1.bf16.msra.mxu0 0
      %930 = vmatprep.subr.bf16.mxu0 0
      %931 = vmatpush1.bf16.msra.mxu0 0
      %932 = vmatprep.subr.bf16.mxu0 0
      %933 = vmatpush1.bf16.msra.mxu0 0
      %934 = vmatprep.subr.bf16.mxu0 0
      %935 = vmatpush1.bf16.msra.mxu0 0
      %936 = vmatprep.subr.bf16.mxu0 0
      %937 = vmatpush1.bf16.msra.mxu0 0
      %938 = vmatprep.subr.bf16.mxu0 0
      %939 = vmatpush1.bf16.msra.mxu0 0
      %940 = vmatprep.subr.bf16.mxu0 0
      %941 = vmatpush1.bf16.msra.mxu0 0
      %942 = vmatprep.subr.bf16.mxu0 0
      %943 = vmatpush1.bf16.msra.mxu0 0
      %944 = vmatprep.subr.bf16.mxu0 0
      %945 = vmatpush1.bf16.msra.mxu0 0
      %946 = vmatprep.mubr.bf16.mxu0 0
      %947 = vmatmul.mubr.bf16.gmra.mrb[0].mxu0 %v909
      %v948 = vpop.f32.mrb[0].mxu0
      %v949 = vadd.f32 0.0, %v948
      %v950 = vpop.f32.mrb[0].mxu0
      %v951 = vpop.f32.mrb[0].mxu0
      %v952 = vpop.f32.mrb[0].mxu0
      %953 = vdwg.mxu0
      %v954 = vpack.c.bf16 %v949, %v949
      %v955 = vld [vmem:[%s2 + $0x30] sm:$0xf]
      %v956 = vld [vmem:[%s2 + $0x34] sm:$0xf]
      %v957 = vld [vmem:[%s2 + $0x38] sm:$0xf]
      %v958 = vld [vmem:[%s2 + $0x3c] sm:$0xf]
      %v963 = vunpack.c.l.b16 %v955
      %v964 = vunpack.c.l.b16 %v956
      %v965 = vunpack.c.l.b16 %v957
      %v966 = vunpack.c.l.b16 %v958
      %v967 = vpack.c.b16 %v964, %v963
      %v968 = vpack.c.b16 %v966, %v965
      %v972 = vsel %vm331, %v954, 0
      %974 = vmatprep.subr.bf16.mxu0 0
      %975 = vmatpush1.bf16.msra.mxu0 %v967
      %976 = vmatprep.subr.bf16.mxu0 0
      %977 = vmatpush1.bf16.msra.mxu0 %v968
      %978 = vmatprep.subr.bf16.mxu0 0
      %979 = vmatpush1.bf16.msra.mxu0 0
      %980 = vmatprep.subr.bf16.mxu0 0
      %981 = vmatpush1.bf16.msra.mxu0 0
      %982 = vmatprep.subr.bf16.mxu0 0
      %983 = vmatpush1.bf16.msra.mxu0 0
      %984 = vmatprep.subr.bf16.mxu0 0
      %985 = vmatpush1.bf16.msra.mxu0 0
      %986 = vmatprep.subr.bf16.mxu0 0
      %987 = vmatpush1.bf16.msra.mxu0 0
      %988 = vmatprep.subr.bf16.mxu0 0
      %989 = vmatpush1.bf16.msra.mxu0 0
      %990 = vmatprep.subr.bf16.mxu0 0
      %991 = vmatpush1.bf16.msra.mxu0 0
      %992 = vmatprep.subr.bf16.mxu0 0
      %993 = vmatpush1.bf16.msra.mxu0 0
      %994 = vmatprep.subr.bf16.mxu0 0
      %995 = vmatpush1.bf16.msra.mxu0 0
      %996 = vmatprep.subr.bf16.mxu0 0
      %997 = vmatpush1.bf16.msra.mxu0 0
      %998 = vmatprep.subr.bf16.mxu0 0
      %999 = vmatpush1.bf16.msra.mxu0 0
      %1000 = vmatprep.subr.bf16.mxu0 0
      %1001 = vmatpush1.bf16.msra.mxu0 0
      %1002 = vmatprep.subr.bf16.mxu0 0
      %1003 = vmatpush1.bf16.msra.mxu0 0
      %1004 = vmatprep.subr.bf16.mxu0 0
      %1005 = vmatpush1.bf16.msra.mxu0 0
      %1006 = vmatprep.mubr.bf16.mxu0 0
      %1007 = vmatmul.mubr.bf16.gmra.mrb[0].mxu0 %v972
      %v1008 = vpop.f32.mrb[0].mxu0
      %v1009 = vadd.f32 0.0, %v1008
      %v1010 = vpop.f32.mrb[0].mxu0
      %v1011 = vpop.f32.mrb[0].mxu0
      %v1012 = vpop.f32.mrb[0].mxu0
      %1013 = vdwg.mxu0
      %v1014 = vadd.f32 %v843, %v1009
      %v1015 = vld [vmem:[%s5] sm:$0x1]
      %v1016 = vld [vmem:[%s6] sm:$0x1]
      %1017 = vadd.xlane.f32.xlu0 %v1014
      %v1018 = vpop.xlane.xlu0 %1017
      %v1019 = vrcp.pop 128.0
      %v1020 = vmul.f32 %v1018, %v1019
      %v1021 = vsub.f32 %v1014, %v1020
      %v1022 = vmul.f32 %v1021, %v1021
      %1023 = vadd.xlane.f32.xlu0 %v1022
      %v1024 = vpop.xlane.xlu0 %1023
      %v1025 = vmul.f32 %v1024, %v1019
      %v1026 = vadd.f32 %v1025, 1e-12
      %v1027 = vrsqrt.pop %v1026
      %v1028 = vmul.f32 %v1021, %v1027
      %v1030 = vlaneseq
      %v1031 = vshrl.u32 %v1030, 7
      %v1032 = vsub.s32 0, %v1031
      %v1033 = vrot.slane %v1015, %v1032
      %v1035 = vmul.f32 %v1028, %v1033
      %v1037 = vlaneseq
      %v1038 = vshrl.u32 %v1037, 7
      %v1039 = vsub.s32 0, %v1038
      %v1040 = vrot.slane %v1016, %v1039
      %v1042 = vadd.f32 %v1035, %v1040
      %1043 = vst [vmem:[%s307] sm:$0xff] %v1042
      %p1044 = scmp.lt.s32.totalorder %s18, 1
      %s1045 = scalar_select %p1044, %s18, 1
      %s1046 = smul.addr %s1045, 8
      %s1047 = scalar_lea.vmem %s7, %s1046
      // Predicated region
      $region49: #{bert_forward.9} parent=47 // pred_check
        %p1048 = pneg %p198
      $region50: #{bert_forward.9} parent=47 // pred_check_branch
        %1050 = sbr.rel (%p1048) target = $region52
      $region51: #{bert_forward.9} parent=47 // pred_region
        _
      $region52: #{bert_forward.9} parent=47 // pred_fallthru
        _
    $region48: #{bert_forward.9} parent=5 // pred_fallthru
      _
    %p1051 = scmp.le.s32.totalorder 2, %s13
    // Predicated region
    $region53: #{bert_forward.9} parent=5 // pred_check
      %p1052 = pneg %p1051
    $region54: #{bert_forward.9} parent=5 // pred_check_branch
      %1054 = sbr.rel (%p1052) target = $region56
    $region55: #{bert_forward.9} parent=5 // pred_region
      %s1055 = ssub.s32 %s13, 2
      // Predicated region
      $region57: #{bert_forward.9} parent=55 // pred_check
        %p1056 = pneg %p204
      $region58: #{bert_forward.9} parent=55 // pred_check_branch
        %1058 = sbr.rel (%p1056) target = $region60
      $region59: #{bert_forward.9} parent=55 // pred_region
        %p1059 = scmp.lt.s32.totalorder %s19, 1
        %s1060 = scalar_select %p1059, %s19, 1
        %s1061 = smul.addr %s1060, 8
        %s1062 = scalar_lea.vmem %s7, %s1061
      $region60: #{bert_forward.9} parent=55 // pred_fallthru
        _
    $region56: #{bert_forward.9} parent=5 // pred_fallthru
      _
  $region6: #{bert_forward.9} parent=0 // loop_footer
    %s17 = sadd.s32 1, %s13
  $region7: #{bert_forward.9} parent=0 // loop_footer_branch
    %12 = sbr.rel target = $region3
  $region8: #{bert_forward.9} parent=0 // loop_exit
    _

// kernel: bert_forward.13
$region0: #{bert_forward.13}
  #allocation0 [shape = 'u32[]', space=smem, size = 0x4, offset = 0x4, fixed_abs, tag = 'smem constant byte address 0x4 - core index']
  #allocation1 [shape = 'u32[144,128]{1,0:T(1,128)}', space=vmem, size = 0x12000, scoped, tag = 'internal scratch']
  %s0 = inlined_call_operand.vmem [shape: f32[16,128], index: 0, kind: input, shape index: {}]
  %s1 = inlined_call_operand.vmem [shape: bf16[128,256], index: 1, kind: input, shape index: {}]
  %s2 = inlined_call_operand.vmem [shape: f32[1,256], index: 2, kind: input, shape index: {}]
  %s3 = inlined_call_operand.vmem [shape: bf16[256,128], index: 3, kind: input, shape index: {}]
  %s4 = inlined_call_operand.vmem [shape: f32[1,128], index: 4, kind: input, shape index: {}]
  %s5 = inlined_call_operand.vmem [shape: f32[1,128], index: 5, kind: input, shape index: {}]
  %s6 = inlined_call_operand.vmem [shape: f32[1,128], index: 6, kind: input, shape index: {}]
  %s7 = inlined_call_operand.hbm [shape: f32[16,128], index: 7, kind: output, shape index: {}]
  %s8 = sld [smem:[#allocation0]]
  $region61: #{bert_forward.13} parent=0
    _
  %s10 = ssub.s32 1, %s8
  %s11 = scalar_select 0, %s10, %s8
  $region1: #{bert_forward.13} parent=0
    #allocation2 [shape = 'u8[8192]{0}', space=vmem, size = 0x2000, scoped, tag = 'output window, operand 0']
    #allocation3 [shape = 's32[2]{0}', space=sflag, size = 0x8, scoped, tag = 'scoped memory for bert_forward.13']
    %12 = vsyncpa [#allocation3], 0
    %s13 = scalar_lea.sflag [#allocation3], 1
    %14 = vsyncpa %s13, 0
    loop: start=0, step=1, limit=4
    $region2: #{bert_forward.13} parent=1 // loop_pre_header
      _
    $region3: #{bert_forward.13} parent=1 // loop_header
      %s16 = sphi 0, %s20
      %p17 = scmp.ge.s32.totalorder %s16, 4
      %s26 = sphi 0, %s28
      %s29 = sphi 0, %s26
      %s30 = sphi 0, %s29
      %s46 = sphi 0, %s30
      %s50 = sphi 0, %s50
      %s52 = sphi 0, %s50
      %s53 = sphi 0, %s52
      %s67 = sphi 0, %s53
      %s71 = sphi 0, %s71
      %s73 = sphi 0, %s71
      %s74 = sphi 0, %s73
      %s88 = sphi 0, %s74
      %s92 = sphi 0, %s92
      %s94 = sphi 0, %s92
      %s95 = sphi 0, %s94
      %s109 = sphi 0, %s95
      %s113 = sphi 0, %s113
      %s115 = sphi 0, %s113
      %s116 = sphi 0, %s115
      %s130 = sphi 0, %s116
      %s134 = sphi 0, %s134
      %s136 = sphi 0, %s134
      %s137 = sphi 0, %s136
      %s151 = sphi 0, %s137
      %s155 = sphi 0, %s155
      %s157 = sphi 0, %s155
      %s158 = sphi 0, %s157
      %s172 = sphi 0, %s158
      %s178 = sphi 0, %s180
      %s181 = sphi 0, %s178
      %s182 = sphi 0, %s181
      %s198 = sphi 0, %s182
    $region4: #{bert_forward.13} parent=1 // loop_header_branch
      %19 = sbr.rel (%p17) target = $region8
    $region5: #{bert_forward.13} parent=1 // loop_body
      %s21 = ssub.s32 %s16, 1
      %s22 = ssub.s32 %s16, 2
      %s23 = sadd.s32 %s16, 1
      %s24 = ssub.s32 %s16, %s23
      %p25 = scmp.eq.s32.totalorder %s24, 0
      %s27 = sadd.s32 %s26, 1
      %s28 = scalar_select %p25, %s26, %s27
      %p31 = pneg %p25
      %p32 = scmp.eq.s32.totalorder %s16, 1
      %p33 = por %p31, %p32
      %p34 = scmp.ne.s32.totalorder %s26, %s29
      %p35 = scmp.eq.s32.totalorder %s16, 0
      %p36 = por %p34, %p35
      %p37 = scmp.ne.s32.totalorder %s26, %s29
      %p38 = scmp.eq.s32.totalorder %s21, 1
      %p39 = por %p37, %p38
      %p40 = scmp.ne.s32.totalorder %s29, %s30
      %p41 = scmp.eq.s32.totalorder %s21, 0
      %p42 = por %p40, %p41
      %p43 = scmp.ne.s32.totalorder %s29, %s30
      %p44 = scmp.eq.s32.totalorder %s22, 1
      %p45 = por %p43, %p44
      %p47 = scmp.ne.s32.totalorder %s30, %s46
      %p48 = scmp.eq.s32.totalorder %s22, 0
      %p49 = por %p47, %p48
      %s51 = sadd.s32 %s50, 1
      %p54 = scmp.eq.s32.totalorder %s16, 1
      %p55 = scmp.ne.s32.totalorder %s50, %s52
      %p56 = scmp.eq.s32.totalorder %s16, 0
      %p57 = por %p55, %p56
      %p58 = scmp.ne.s32.totalorder %s50, %s52
      %p59 = scmp.eq.s32.totalorder %s21, 1
      %p60 = por %p58, %p59
      %p61 = scmp.ne.s32.totalorder %s52, %s53
      %p62 = scmp.eq.s32.totalorder %s21, 0
      %p63 = por %p61, %p62
      %p64 = scmp.ne.s32.totalorder %s52, %s53
      %p65 = scmp.eq.s32.totalorder %s22, 1
      %p66 = por %p64, %p65
      %p68 = scmp.ne.s32.totalorder %s53, %s67
      %p69 = scmp.eq.s32.totalorder %s22, 0
      %p70 = por %p68, %p69
      %s72 = sadd.s32 %s71, 1
      %p75 = scmp.eq.s32.totalorder %s16, 1
      %p76 = scmp.ne.s32.totalorder %s71, %s73
      %p77 = scmp.eq.s32.totalorder %s16, 0
      %p78 = por %p76, %p77
      %p79 = scmp.ne.s32.totalorder %s71, %s73
      %p80 = scmp.eq.s32.totalorder %s21, 1
      %p81 = por %p79, %p80
      %p82 = scmp.ne.s32.totalorder %s73, %s74
      %p83 = scmp.eq.s32.totalorder %s21, 0
      %p84 = por %p82, %p83
      %p85 = scmp.ne.s32.totalorder %s73, %s74
      %p86 = scmp.eq.s32.totalorder %s22, 1
      %p87 = por %p85, %p86
      %p89 = scmp.ne.s32.totalorder %s74, %s88
      %p90 = scmp.eq.s32.totalorder %s22, 0
      %p91 = por %p89, %p90
      %s93 = sadd.s32 %s92, 1
      %p96 = scmp.eq.s32.totalorder %s16, 1
      %p97 = scmp.ne.s32.totalorder %s92, %s94
      %p98 = scmp.eq.s32.totalorder %s16, 0
      %p99 = por %p97, %p98
      %p100 = scmp.ne.s32.totalorder %s92, %s94
      %p101 = scmp.eq.s32.totalorder %s21, 1
      %p102 = por %p100, %p101
      %p103 = scmp.ne.s32.totalorder %s94, %s95
      %p104 = scmp.eq.s32.totalorder %s21, 0
      %p105 = por %p103, %p104
      %p106 = scmp.ne.s32.totalorder %s94, %s95
      %p107 = scmp.eq.s32.totalorder %s22, 1
      %p108 = por %p106, %p107
      %p110 = scmp.ne.s32.totalorder %s95, %s109
      %p111 = scmp.eq.s32.totalorder %s22, 0
      %p112 = por %p110, %p111
      %s114 = sadd.s32 %s113, 1
      %p117 = scmp.eq.s32.totalorder %s16, 1
      %p118 = scmp.ne.s32.totalorder %s113, %s115
      %p119 = scmp.eq.s32.totalorder %s16, 0
      %p120 = por %p118, %p119
      %p121 = scmp.ne.s32.totalorder %s113, %s115
      %p122 = scmp.eq.s32.totalorder %s21, 1
      %p123 = por %p121, %p122
      %p124 = scmp.ne.s32.totalorder %s115, %s116
      %p125 = scmp.eq.s32.totalorder %s21, 0
      %p126 = por %p124, %p125
      %p127 = scmp.ne.s32.totalorder %s115, %s116
      %p128 = scmp.eq.s32.totalorder %s22, 1
      %p129 = por %p127, %p128
      %p131 = scmp.ne.s32.totalorder %s116, %s130
      %p132 = scmp.eq.s32.totalorder %s22, 0
      %p133 = por %p131, %p132
      %s135 = sadd.s32 %s134, 1
      %p138 = scmp.eq.s32.totalorder %s16, 1
      %p139 = scmp.ne.s32.totalorder %s134, %s136
      %p140 = scmp.eq.s32.totalorder %s16, 0
      %p141 = por %p139, %p140
      %p142 = scmp.ne.s32.totalorder %s134, %s136
      %p143 = scmp.eq.s32.totalorder %s21, 1
      %p144 = por %p142, %p143
      %p145 = scmp.ne.s32.totalorder %s136, %s137
      %p146 = scmp.eq.s32.totalorder %s21, 0
      %p147 = por %p145, %p146
      %p148 = scmp.ne.s32.totalorder %s136, %s137
      %p149 = scmp.eq.s32.totalorder %s22, 1
      %p150 = por %p148, %p149
      %p152 = scmp.ne.s32.totalorder %s137, %s151
      %p153 = scmp.eq.s32.totalorder %s22, 0
      %p154 = por %p152, %p153
      %s156 = sadd.s32 %s155, 1
      %p159 = scmp.eq.s32.totalorder %s16, 1
      %p160 = scmp.ne.s32.totalorder %s155, %s157
      %p161 = scmp.eq.s32.totalorder %s16, 0
      %p162 = por %p160, %p161
      %p163 = scmp.ne.s32.totalorder %s155, %s157
      %p164 = scmp.eq.s32.totalorder %s21, 1
      %p165 = por %p163, %p164
      %p166 = scmp.ne.s32.totalorder %s157, %s158
      %p167 = scmp.eq.s32.totalorder %s21, 0
      %p168 = por %p166, %p167
      %p169 = scmp.ne.s32.totalorder %s157, %s158
      %p170 = scmp.eq.s32.totalorder %s22, 1
      %p171 = por %p169, %p170
      %p173 = scmp.ne.s32.totalorder %s158, %s172
      %p174 = scmp.eq.s32.totalorder %s22, 0
      %p175 = por %p173, %p174
      %s176 = ssub.s32 %s16, %s23
      %p177 = scmp.eq.s32.totalorder %s176, 0
      %s179 = sadd.s32 %s178, 1
      %s180 = scalar_select %p177, %s178, %s179
      %p183 = pneg %p177
      %p184 = scmp.eq.s32.totalorder %s16, 1
      %p185 = por %p183, %p184
      %p186 = scmp.ne.s32.totalorder %s178, %s181
      %p187 = scmp.eq.s32.totalorder %s16, 0
      %p188 = por %p186, %p187
      %p189 = scmp.ne.s32.totalorder %s178, %s181
      %p190 = scmp.eq.s32.totalorder %s21, 1
      %p191 = por %p189, %p190
      %p192 = scmp.ne.s32.totalorder %s181, %s182
      %p193 = scmp.eq.s32.totalorder %s21, 0
      %p194 = por %p192, %p193
      %p195 = scmp.ne.s32.totalorder %s181, %s182
      %p196 = scmp.eq.s32.totalorder %s22, 1
      %p197 = por %p195, %p196
      %p199 = scmp.ne.s32.totalorder %s182, %s198
      %p200 = scmp.eq.s32.totalorder %s22, 0
      %p201 = por %p199, %p200
      %p202 = scmp.le.s32.totalorder 1, %s16
      %p203 = scmp.lt.s32.totalorder %s16, 3
      %p204 = pnand %p202, %p203
      %p205 = pneg %p204
      // Predicated region
      $region9: #{bert_forward.13} parent=5 // pred_check
        _
      $region10: #{bert_forward.13} parent=5 // pred_check_branch
        %207 = sbr.rel (%p204) target = $region12
      $region11: #{bert_forward.13} parent=5 // pred_region
        %s208 = ssub.s32 %s16, 1
        // Predicated region
        $region13: #{bert_forward.13} parent=11 // pred_check
          %p209 = pneg %p63
        $region14: #{bert_forward.13} parent=11 // pred_check_branch
          %211 = sbr.rel (%p209) target = $region16
        $region15: #{bert_forward.13} parent=11 // pred_region
          _
        $region16: #{bert_forward.13} parent=11 // pred_fallthru
          _
        // Predicated region
        $region17: #{bert_forward.13} parent=11 // pred_check
          %p212 = pneg %p84
        $region18: #{bert_forward.13} parent=11 // pred_check_branch
          %214 = sbr.rel (%p212) target = $region20
        $region19: #{bert_forward.13} parent=11 // pred_region
          _
        $region20: #{bert_forward.13} parent=11 // pred_fallthru
          _
        // Predicated region
        $region21: #{bert_forward.13} parent=11 // pred_check
          %p215 = pneg %p105
        $region22: #{bert_forward.13} parent=11 // pred_check_branch
          %217 = sbr.rel (%p215) target = $region24
        $region23: #{bert_forward.13} parent=11 // pred_region
          _
        $region24: #{bert_forward.13} parent=11 // pred_fallthru
          _
        // Predicated region
        $region25: #{bert_forward.13} parent=11 // pred_check
          %p218 = pneg %p126
        $region26: #{bert_forward.13} parent=11 // pred_check_branch
          %220 = sbr.rel (%p218) target = $region28
        $region27: #{bert_forward.13} parent=11 // pred_region
          _
        $region28: #{bert_forward.13} parent=11 // pred_fallthru
          _
        // Predicated region
        $region29: #{bert_forward.13} parent=11 // pred_check
          %p221 = pneg %p147
        $region30: #{bert_forward.13} parent=11 // pred_check_branch
          %223 = sbr.rel (%p221) target = $region32
        $region31: #{bert_forward.13} parent=11 // pred_region
          _
        $region32: #{bert_forward.13} parent=11 // pred_fallthru
          _
        // Predicated region
        $region33: #{bert_forward.13} parent=11 // pred_check
          %p224 = pneg %p168
        $region34: #{bert_forward.13} parent=11 // pred_check_branch
          %226 = sbr.rel (%p224) target = $region36
        $region35: #{bert_forward.13} parent=11 // pred_region
          _
        $region36: #{bert_forward.13} parent=11 // pred_fallthru
          _
      $region12: #{bert_forward.13} parent=5 // pred_fallthru
        _
      %p227 = scmp.lt.s32.totalorder %s16, 2
      // Predicated region
      $region37: #{bert_forward.13} parent=5 // pred_check
        %p228 = pneg %p227
      $region38: #{bert_forward.13} parent=5 // pred_check_branch
        %230 = sbr.rel (%p228) target = $region40
      $region39: #{bert_forward.13} parent=5 // pred_region
        // Predicated region
        $region41: #{bert_forward.13} parent=39 // pred_check
          %p231 = pneg %p36
        $region42: #{bert_forward.13} parent=39 // pred_check_branch
          %233 = sbr.rel (%p231) target = $region44
        $region43: #{bert_forward.13} parent=39 // pred_region
          %p234 = scmp.lt.s32.totalorder %s16, 1
          %s235 = scalar_select %p234, %s16, 1
          %s236 = smul.addr %s235, 8
          %s237 = scalar_lea.vmem %s0, %s236
        $region44: #{bert_forward.13} parent=39 // pred_fallthru
          _
      $region40: #{bert_forward.13} parent=5 // pred_fallthru
        _
      %p238 = scmp.le.s32.totalorder 1, %s16
      %p239 = scmp.lt.s32.totalorder %s16, 3
      %p240 = pnand %p238, %p239
      %p241 = pneg %p240
      // Predicated region
      $region45: #{bert_forward.13} parent=5 // pred_check
        _
      $region46: #{bert_forward.13} parent=5 // pred_check_branch
        %243 = sbr.rel (%p240) target = $region48
      $region47: #{bert_forward.13} parent=5 // pred_region
        %s244 = ssub.s32 %s16, 1
        %p245 = scmp.lt.s32.totalorder %s21, 1
        %s246 = scalar_select %p245, %s21, 1
        %s247 = smul.addr %s246, 8
        %s248 = scalar_lea.vmem %s0, %s247
        %p249 = pneg %p42
        %p250 = pneg %p39
        %p251 = pneg %p63
        %p252 = pneg %p60
        %p253 = pneg %p84
        %p254 = pneg %p81
        %p255 = pneg %p105
        %p256 = pneg %p102
        %p257 = pneg %p126
        %p258 = pneg %p123
        %p259 = pneg %p147
        %p260 = pneg %p144
        %p261 = pneg %p168
        %p262 = pneg %p165
        %p263 = pneg %p194
        %p264 = pneg %p191
        %s265 = sand.u32 %s181, 1
        %s266 = scalar_lea.sflag [#allocation3], %s265
        %s267 = sand.u32 %s181, 1
        %s268 = smul.addr %s267, 8
        %s269 = scalar_lea.vmem [#allocation2], %s268
        %p270 = scmp.lt.s32.totalorder %s21, 1
        %s271 = scalar_select %p270, %s21, 1
        %s272 = smul.addr %s271, 8
        %s273 = scalar_lea.vmem %s0, %s272
        %v275 = vld [vmem:[%s273] sm:$0xff]
        %v276 = vpack.c.bf16 %v275, %v275
        %v277 = vld [vmem:[%s1] sm:$0xff]
        %v278 = vld [vmem:[%s1 + $0x8] sm:$0xff]
        %v279 = vld [vmem:[%s1 + $0x10] sm:$0xff]
        %v280 = vld [vmem:[%s1 + $0x18] sm:$0xff]
        %v281 = vld [vmem:[%s1 + $0x20] sm:$0xff]
        %v282 = vld [vmem:[%s1 + $0x28] sm:$0xff]
        %v283 = vld [vmem:[%s1 + $0x30] sm:$0xff]
        %v284 = vld [vmem:[%s1 + $0x38] sm:$0xff]
        %v285 = vld [vmem:[%s1 + $0x40] sm:$0xff]
        %v286 = vld [vmem:[%s1 + $0x48] sm:$0xff]
        %v287 = vld [vmem:[%s1 + $0x50] sm:$0xff]
        %v288 = vld [vmem:[%s1 + $0x58] sm:$0xff]
        %v289 = vld [vmem:[%s1 + $0x60] sm:$0xff]
        %v290 = vld [vmem:[%s1 + $0x68] sm:$0xff]
        %v291 = vld [vmem:[%s1 + $0x70] sm:$0xff]
        %v292 = vld [vmem:[%s1 + $0x78] sm:$0xff]
        %v293 = vld [vmem:[%s2] sm:$0x3]
        %v295 = vlaneseq
        %v296 = vshrl.u32 %v295, 7
        %v297 = vsub.s32 0, %v296
        %v298 = vrot.slane %v293, %v297
        %v299 = vlaneseq
        %v300 = vshrl.u32 %v299, 7
        %v301 = vsub.s32 1, %v300
        %v302 = vrot.slane %v293, %v301
        %v321 = vunpack.c.l.b16 %v277
        %v322 = vunpack.c.h.b16 %v277
        %v323 = vunpack.c.l.b16 %v278
        %v324 = vunpack.c.h.b16 %v278
        %v325 = vunpack.c.l.b16 %v279
        %v326 = vunpack.c.h.b16 %v279
        %v327 = vunpack.c.l.b16 %v280
        %v328 = vunpack.c.h.b16 %v280
        %v329 = vunpack.c.l.b16 %v281
        %v330 = vunpack.c.h.b16 %v281
        %v331 = vunpack.c.l.b16 %v282
        %v332 = vunpack.c.h.b16 %v282
        %v333 = vunpack.c.l.b16 %v283
        %v334 = vunpack.c.h.b16 %v283
        %v335 = vunpack.c.l.b16 %v284
        %v336 = vunpack.c.h.b16 %v284
        %v337 = vunpack.c.l.b16 %v285
        %v338 = vunpack.c.h.b16 %v285
        %v339 = vunpack.c.l.b16 %v286
        %v340 = vunpack.c.h.b16 %v286
        %v341 = vunpack.c.l.b16 %v287
        %v342 = vunpack.c.h.b16 %v287
        %v343 = vunpack.c.l.b16 %v288
        %v344 = vunpack.c.h.b16 %v288
        %v345 = vunpack.c.l.b16 %v289
        %v346 = vunpack.c.h.b16 %v289
        %v347 = vunpack.c.l.b16 %v290
        %v348 = vunpack.c.h.b16 %v290
        %v349 = vunpack.c.l.b16 %v291
        %v350 = vunpack.c.h.b16 %v291
        %v351 = vunpack.c.l.b16 %v292
        %v352 = vunpack.c.h.b16 %v292
        %v353 = vpack.c.b16 %v323, %v321
        %v354 = vpack.c.b16 %v324, %v322
        %v355 = vpack.c.b16 %v327, %v325
        %v356 = vpack.c.b16 %v328, %v326
        %v357 = vpack.c.b16 %v331, %v329
        %v358 = vpack.c.b16 %v332, %v330
        %v359 = vpack.c.b16 %v335, %v333
        %v360 = vpack.c.b16 %v336, %v334
        %v361 = vpack.c.b16 %v339, %v337
        %v362 = vpack.c.b16 %v340, %v338
        %v363 = vpack.c.b16 %v343, %v341
        %v364 = vpack.c.b16 %v344, %v342
        %v365 = vpack.c.b16 %v347, %v345
        %v366 = vpack.c.b16 %v348, %v346
        %v367 = vpack.c.b16 %v351, %v349
        %v368 = vpack.c.b16 %v352, %v350
        %385 = vmatprep.subr.bf16.mxu0 %v354
        %386 = vmatpush1.bf16.msra.mxu0 %v353
        %387 = vmatprep.subr.bf16.mxu0 %v356
        %388 = vmatpush1.bf16.msra.mxu0 %v355
        %389 = vmatprep.subr.bf16.mxu0 %v358
        %390 = vmatpush1.bf16.msra.mxu0 %v357
        %391 = vmatprep.subr.bf16.mxu0 %v360
        %392 = vmatpush1.bf16.msra.mxu0 %v359
        %393 = vmatprep.subr.bf16.mxu0 %v362
        %394 = vmatpush1.bf16.msra.mxu0 %v361
        %395 = vmatprep.subr.bf16.mxu0 %v364
        %396 = vmatpush1.bf16.msra.mxu0 %v363
        %397 = vmatprep.subr.bf16.mxu0 %v366
        %398 = vmatpush1.bf16.msra.mxu0 %v365
        %399 = vmatprep.subr.bf16.mxu0 %v368
        %400 = vmatpush1.bf16.msra.mxu0 %v367
        %401 = vmatprep.subr.bf16.mxu0 0
        %402 = vmatpush1.bf16.msra.mxu0 0
        %403 = vmatprep.subr.bf16.mxu0 0
        %404 = vmatpush1.bf16.msra.mxu0 0
        %405 = vmatprep.subr.bf16.mxu0 0
        %406 = vmatpush1.bf16.msra.mxu0 0
        %407 = vmatprep.subr.bf16.mxu0 0
        %408 = vmatpush1.bf16.msra.mxu0 0
        %409 = vmatprep.subr.bf16.mxu0 0
        %410 = vmatpush1.bf16.msra.mxu0 0
        %411 = vmatprep.subr.bf16.mxu0 0
        %412 = vmatpush1.bf16.msra.mxu0 0
        %413 = vmatprep.subr.bf16.mxu0 0
        %414 = vmatpush1.bf16.msra.mxu0 0
        %415 = vmatprep.subr.bf16.mxu0 0
        %416 = vmatpush1.bf16.msra.mxu0 0
        %417 = vmatprep.mubr.bf16.mxu0 0
        %418 = vmatmul.mubr.bf16.gmra.mrb[0].mxu0 %v276
        %v419 = vpop.f32.mrb[0].mxu0
        %v420 = vadd.f32 %v298, %v419
        %v421 = vpop.f32.mrb[0].mxu0
        %v422 = vadd.f32 %v302, %v421
        %v423 = vpop.f32.mrb[0].mxu0
        %v424 = vpop.f32.mrb[0].mxu0
        %425 = vdwg.mxu0
        %v426 = vmul.f32 %v420, 0.5
        %v427 = vmul.f32 %v422, 0.5
        %v428 = vmul.f32 %v420, 0.70710677
        %v429 = vmul.f32 %v422, 0.70710677
        %v430 = verf.f32.pop %v428
        %v431 = verf.f32.pop %v429
        %v432 = vadd.f32 %v430, 1.0
        %v433 = vadd.f32 %v431, 1.0
        %v434 = vmul.f32 %v426, %v432
        %v435 = vmul.f32 %v427, %v433
        %v436 = vpack.c.bf16 %v434, %v434
        %v437 = vpack.c.bf16 %v435, %v435
        %v438 = vld [vmem:[%s3] sm:$0xf]
        %v439 = vld [vmem:[%s3 + $0x4] sm:$0xf]
        %v440 = vld [vmem:[%s3 + $0x8] sm:$0xf]
        %v441 = vld [vmem:[%s3 + $0xc] sm:$0xf]
        %v442 = vld [vmem:[%s3 + $0x10] sm:$0xf]
        %v443 = vld [vmem:[%s3 + $0x14] sm:$0xf]
        %v444 = vld [vmem:[%s3 + $0x18] sm:$0xf]
        %v445 = vld [vmem:[%s3 + $0x1c] sm:$0xf]
        %v446 = vld [vmem:[%s3 + $0x20] sm:$0xf]
        %v447 = vld [vmem:[%s3 + $0x24] sm:$0xf]
        %v448 = vld [vmem:[%s3 + $0x28] sm:$0xf]
        %v449 = vld [vmem:[%s3 + $0x2c] sm:$0xf]
        %v450 = vld [vmem:[%s3 + $0x30] sm:$0xf]
        %v451 = vld [vmem:[%s3 + $0x34] sm:$0xf]
        %v452 = vld [vmem:[%s3 + $0x38] sm:$0xf]
        %v453 = vld [vmem:[%s3 + $0x3c] sm:$0xf]
        %v454 = vld [vmem:[%s3 + $0x40] sm:$0xf]
        %v455 = vld [vmem:[%s3 + $0x44] sm:$0xf]
        %v456 = vld [vmem:[%s3 + $0x48] sm:$0xf]
        %v457 = vld [vmem:[%s3 + $0x4c] sm:$0xf]
        %v458 = vld [vmem:[%s3 + $0x50] sm:$0xf]
        %v459 = vld [vmem:[%s3 + $0x54] sm:$0xf]
        %v460 = vld [vmem:[%s3 + $0x58] sm:$0xf]
        %v461 = vld [vmem:[%s3 + $0x5c] sm:$0xf]
        %v462 = vld [vmem:[%s3 + $0x60] sm:$0xf]
        %v463 = vld [vmem:[%s3 + $0x64] sm:$0xf]
        %v464 = vld [vmem:[%s3 + $0x68] sm:$0xf]
        %v465 = vld [vmem:[%s3 + $0x6c] sm:$0xf]
        %v466 = vld [vmem:[%s3 + $0x70] sm:$0xf]
        %v467 = vld [vmem:[%s3 + $0x74] sm:$0xf]
        %v468 = vld [vmem:[%s3 + $0x78] sm:$0xf]
        %v469 = vld [vmem:[%s3 + $0x7c] sm:$0xf]
        %v470 = vld [vmem:[%s4] sm:$0x1]
        %v472 = vlaneseq
        %v473 = vshrl.u32 %v472, 7
        %v474 = vsub.s32 0, %v473
        %v475 = vrot.slane %v470, %v474
        %v509 = vunpack.c.l.b16 %v438
        %v510 = vunpack.c.l.b16 %v439
        %v511 = vunpack.c.l.b16 %v440
        %v512 = vunpack.c.l.b16 %v441
        %v513 = vunpack.c.l.b16 %v442
        %v514 = vunpack.c.l.b16 %v443
        %v515 = vunpack.c.l.b16 %v444
        %v516 = vunpack.c.l.b16 %v445
        %v517 = vunpack.c.l.b16 %v446
        %v518 = vunpack.c.l.b16 %v447
        %v519 = vunpack.c.l.b16 %v448
        %v520 = vunpack.c.l.b16 %v449
        %v521 = vunpack.c.l.b16 %v450
        %v522 = vunpack.c.l.b16 %v451
        %v523 = vunpack.c.l.b16 %v452
        %v524 = vunpack.c.l.b16 %v453
        %v525 = vunpack.c.l.b16 %v454
        %v526 = vunpack.c.l.b16 %v455
        %v527 = vunpack.c.l.b16 %v456
        %v528 = vunpack.c.l.b16 %v457
        %v529 = vunpack.c.l.b16 %v458
        %v530 = vunpack.c.l.b16 %v459
        %v531 = vunpack.c.l.b16 %v460
        %v532 = vunpack.c.l.b16 %v461
        %v533 = vunpack.c.l.b16 %v462
        %v534 = vunpack.c.l.b16 %v463
        %v535 = vunpack.c.l.b16 %v464
        %v536 = vunpack.c.l.b16 %v465
        %v537 = vunpack.c.l.b16 %v466
        %v538 = vunpack.c.l.b16 %v467
        %v539 = vunpack.c.l.b16 %v468
        %v540 = vunpack.c.l.b16 %v469
        %v541 = vpack.c.b16 %v510, %v509
        %v542 = vpack.c.b16 %v512, %v511
        %v543 = vpack.c.b16 %v514, %v513
        %v544 = vpack.c.b16 %v516, %v515
        %v545 = vpack.c.b16 %v518, %v517
        %v546 = vpack.c.b16 %v520, %v519
        %v547 = vpack.c.b16 %v522, %v521
        %v548 = vpack.c.b16 %v524, %v523
        %v549 = vpack.c.b16 %v526, %v525
        %v550 = vpack.c.b16 %v528, %v527
        %v551 = vpack.c.b16 %v530, %v529
        %v552 = vpack.c.b16 %v532, %v531
        %v553 = vpack.c.b16 %v534, %v533
        %v554 = vpack.c.b16 %v536, %v535
        %v555 = vpack.c.b16 %v538, %v537
        %v556 = vpack.c.b16 %v540, %v539
        %573 = vmatprep.subr.bf16.mxu0 0
        %574 = vmatpush1.bf16.msra.mxu0 %v541
        %575 = vmatprep.subr.bf16.mxu0 0
        %576 = vmatpush1.bf16.msra.mxu0 %v542
        %577 = vmatprep.subr.bf16.mxu0 0
        %578 = vmatpush1.bf16.msra.mxu0 %v543
        %579 = vmatprep.subr.bf16.mxu0 0
        %580 = vmatpush1.bf16.msra.mxu0 %v544
        %581 = vmatprep.subr.bf16.mxu0 0
        %582 = vmatpush1.bf16.msra.mxu0 %v545
        %583 = vmatprep.subr.bf16.mxu0 0
        %584 = vmatpush1.bf16.msra.mxu0 %v546
        %585 = vmatprep.subr.bf16.mxu0 0
        %586 = vmatpush1.bf16.msra.mxu0 %v547
        %587 = vmatprep.subr.bf16.mxu0 0
        %588 = vmatpush1.bf16.msra.mxu0 %v548
        %589 = vmatprep.subr.bf16.mxu0 0
        %590 = vmatpush1.bf16.msra.mxu0 %v549
        %591 = vmatprep.subr.bf16.mxu0 0
        %592 = vmatpush1.bf16.msra.mxu0 %v550
        %593 = vmatprep.subr.bf16.mxu0 0
        %594 = vmatpush1.bf16.msra.mxu0 %v551
        %595 = vmatprep.subr.bf16.mxu0 0
        %596 = vmatpush1.bf16.msra.mxu0 %v552
        %597 = vmatprep.subr.bf16.mxu0 0
        %598 = vmatpush1.bf16.msra.mxu0 %v553
        %599 = vmatprep.subr.bf16.mxu0 0
        %600 = vmatpush1.bf16.msra.mxu0 %v554
        %601 = vmatprep.subr.bf16.mxu0 0
        %602 = vmatpush1.bf16.msra.mxu0 %v555
        %603 = vmatprep.subr.bf16.mxu0 0
        %604 = vmatpush1.bf16.msra.mxu0 %v556
        %605 = vmatprep.mubr.bf16.mxu0 %v437
        %606 = vmatmul.mubr.bf16.gmra.mrb[0].mxu0 %v436
        %v607 = vpop.f32.mrb[0].mxu0
        %v608 = vadd.f32 %v475, %v607
        %v609 = vpop.f32.mrb[0].mxu0
        %v610 = vpop.f32.mrb[0].mxu0
        %v611 = vpop.f32.mrb[0].mxu0
        %612 = vdwg.mxu0
        %v613 = vadd.f32 %v608, %v275
        %v614 = vld [vmem:[%s5] sm:$0x1]
        %v615 = vld [vmem:[%s6] sm:$0x1]
        %616 = vadd.xlane.f32.xlu0 %v613
        %v617 = vpop.xlane.xlu0 %616
        %v618 = vrcp.pop 128.0
        %v619 = vmul.f32 %v617, %v618
        %v620 = vsub.f32 %v613, %v619
        %v621 = vmul.f32 %v620, %v620
        %622 = vadd.xlane.f32.xlu0 %v621
        %v623 = vpop.xlane.xlu0 %622
        %v624 = vmul.f32 %v623, %v618
        %v625 = vadd.f32 %v624, 1e-12
        %v626 = vrsqrt.pop %v625
        %v627 = vmul.f32 %v620, %v626
        %v629 = vlaneseq
        %v630 = vshrl.u32 %v629, 7
        %v631 = vsub.s32 0, %v630
        %v632 = vrot.slane %v614, %v631
        %v634 = vmul.f32 %v627, %v632
        %v636 = vlaneseq
        %v637 = vshrl.u32 %v636, 7
        %v638 = vsub.s32 0, %v637
        %v639 = vrot.slane %v615, %v638
        %v641 = vadd.f32 %v634, %v639
        %642 = vst [vmem:[%s269] sm:$0xff] %v641
        %s643 = sand.u32 %s181, 1
        %s644 = scalar_lea.sflag [#allocation3], %s643
        %s645 = sand.u32 %s181, 1
        %s646 = smul.addr %s645, 8
        %s647 = scalar_lea.vmem [#allocation2], %s646
        // Predicated region
        $region49: #{bert_forward.13} parent=47 // pred_check
          %p648 = pneg %p191
        $region50: #{bert_forward.13} parent=47 // pred_check_branch
          %650 = sbr.rel (%p648) target = $region52
        $region51: #{bert_forward.13} parent=47 // pred_region
          %s652 = ssub.s32 128, 128
          %653 = vsyncadd %s644, %s652
          %s654 = smul.addr %s21, 128
          %s655 = scalar_lea.hbm %s7, %s654
          %s657 = sshll.u32 %s647, 4
          %s658 = int_to_ptr.vmem [resolvable:$true] %s657
          %660 = dma.vmem_to_hbm [thread:$0]  %s658, 128, %s655, %s644
        $region52: #{bert_forward.13} parent=47 // pred_fallthru
          _
      $region48: #{bert_forward.13} parent=5 // pred_fallthru
        _
      %p661 = scmp.le.s32.totalorder 2, %s16
      // Predicated region
      $region53: #{bert_forward.13} parent=5 // pred_check
        %p662 = pneg %p661
      $region54: #{bert_forward.13} parent=5 // pred_check_branch
        %664 = sbr.rel (%p662) target = $region56
      $region55: #{bert_forward.13} parent=5 // pred_region
        %s665 = ssub.s32 %s16, 2
        // Predicated region
        $region57: #{bert_forward.13} parent=55 // pred_check
          %p666 = pneg %p197
        $region58: #{bert_forward.13} parent=55 // pred_check_branch
          %668 = sbr.rel (%p666) target = $region60
        $region59: #{bert_forward.13} parent=55 // pred_region
          %s669 = sand.u32 %s182, 1
          %s670 = scalar_lea.sflag [#allocation3], %s669
          %s671 = sand.u32 %s182, 1
          %s672 = smul.addr %s671, 8
          %s673 = scalar_lea.vmem [#allocation2], %s672
          %674 = dma.done %s670, 128
        $region60: #{bert_forward.13} parent=55 // pred_fallthru
          _
      $region56: #{bert_forward.13} parent=5 // pred_fallthru
        _
    $region6: #{bert_forward.13} parent=1 // loop_footer
      %s20 = sadd.s32 1, %s16
    $region7: #{bert_forward.13} parent=1 // loop_footer_branch
      %15 = sbr.rel target = $region3
    $region8: #{bert_forward.13} parent=1 // loop_exit
      _
    %675 = vsyncpa [#allocation3], 1
    %s676 = scalar_lea.sflag [#allocation3], 1
    %677 = vsyncpa %s676, 1

</llo_original>
